<compile_context>
chip_gen: v5e
topology: v5e:2x2
jax: 0.10.0
libtpu: 0.0.40
codegen_flags: <defaults>
</compile_context>

<pallas_src>
import functools
import math

import jax
import jax.numpy as jnp
from jax.experimental import pallas as pl
from jax.experimental.pallas import tpu as pltpu

EXPANSION = 4  # SEBottleneck.expansion


# ----------------------------------------------------------------------------
# Helpers
# ----------------------------------------------------------------------------
def _round_up(x, m):
    return ((x + m - 1) // m) * m


def _pad_axis(x, mult, axis):
    pad = (-x.shape[axis]) % mult
    if pad == 0:
        return x
    cfg = [(0, 0)] * x.ndim
    cfg[axis] = (0, pad)
    return jnp.pad(x, cfg)


def _largest_div(n, mult, cap):
    """Largest d <= cap with d % mult == 0 and n % d == 0 (or None)."""
    best = None
    for d in range(mult, cap + 1, mult):
        if n % d == 0:
            best = d
    return best


def _pick_tiles(M, K, N):
    # K tile: single full-K block when it fits, else a 256-multiple divisor.
    if K <= 1024:
        tk = _round_up(K, 8)
    else:
        tk = next((t for t in (1024, 768, 512, 384, 256) if K % t == 0), 256)
    # N tile: largest multiple of 128 dividing N (all Ns here are 128-multiples).
    tn = _largest_div(N, 128, min(N, 512)) or min(_round_up(N, 128), 512)
    # M tile: exact divisor of M (multiple of 8) so the post-kernel crop is a no-op.
    if K <= 64:
        cap_m = 4096          # tiny-K stem conv1: amortize per-step overhead
    elif M >= 4096:
        cap_m = 2048
    else:
        cap_m = 512
    tm = _largest_div(M, 8, min(M, cap_m)) or min(_round_up(M, 8), cap_m)
    nk = pl.cdiv(K, tk)

    def _npar():
        return pl.cdiv(M, tm) * pl.cdiv(N, tn)

    # >=2 parallel blocks (v7x dual TC); single-K ops also want a few steps to pipeline.
    while _npar() < 2 and tn > 128:
        tn //= 2
    if nk == 1 and _npar() < 4 and tn > 128:
        tn //= 2
    return tm, tk, tn


# ----------------------------------------------------------------------------
# Fused matmul: o = act((a @ w) * scale + bias), bf16 MXU, f32 accumulate
# ----------------------------------------------------------------------------
def _matmul_kernel(a_ref, w_ref, s_ref, b_ref, o_ref, acc_ref, *, act):
    k = pl.program_id(2)

    @pl.when(k == 0)
    def _():
        acc_ref[...] = jnp.zeros_like(acc_ref)

    acc_ref[...] += jnp.dot(a_ref[...], w_ref[...],
                            preferred_element_type=jnp.float32)

    @pl.when(k == pl.num_programs(2) - 1)
    def _():
        r = acc_ref[...] * s_ref[...] + b_ref[...]
        if act == "relu":
            r = jnp.maximum(r, 0.0)
        o_ref[...] = r.astype(o_ref.dtype)


def _matmul_k1_kernel(a_ref, w_ref, s_ref, b_ref, o_ref, *, act, chunk):
    # Single-K-block specialization: no accumulator scratch, chunked epilogue so the
    # f32 dot result stays near vreg-sized.
    s = s_ref[...]
    b = b_ref[...]
    tm = o_ref.shape[0]
    for c0 in range(0, tm, chunk):
        r = jnp.dot(a_ref[pl.ds(c0, chunk), :], w_ref[...],
                    preferred_element_type=jnp.float32)
        r = r * s + b
        if act == "relu":
            r = jnp.maximum(r, 0.0)
        o_ref[pl.ds(c0, chunk), :] = r.astype(o_ref.dtype)


def matmul_scale_bias_act(a, w, scale, bias, act="none", out_dtype=jnp.bfloat16):
    M, K = a.shape
    _, N = w.shape
    tm, tk, tn = _pick_tiles(M, K, N)
    a = _pad_axis(_pad_axis(a.astype(jnp.bfloat16), tm, 0), tk, 1)
    w = _pad_axis(_pad_axis(w.astype(jnp.bfloat16), tk, 0), tn, 1)
    s = _pad_axis(scale.reshape(1, -1).astype(jnp.float32), tn, 1)
    b = _pad_axis(bias.reshape(1, -1).astype(jnp.float32), tn, 1)
    Mp, Kp = a.shape
    Np = w.shape[1]
    nm, nn, nk = Mp // tm, Np // tn, Kp // tk

    if nk == 1:
        chunk = tm if tm <= 1024 else (_largest_div(tm, 8, 512) or tm)
        out = pl.pallas_call(
            functools.partial(_matmul_k1_kernel, act=act, chunk=chunk),
            out_shape=jax.ShapeDtypeStruct((Mp, Np), out_dtype),
            grid_spec=pltpu.PrefetchScalarGridSpec(
                num_scalar_prefetch=0,
                grid=(nm, nn),
                in_specs=[
                    pl.BlockSpec((tm, tk), lambda i, j: (i, 0)),
                    pl.BlockSpec((tk, tn), lambda i, j: (0, j)),
                    pl.BlockSpec((1, tn), lambda i, j: (0, j)),
                    pl.BlockSpec((1, tn), lambda i, j: (0, j)),
                ],
                out_specs=pl.BlockSpec((tm, tn), lambda i, j: (i, j)),
            ),
            compiler_params=pltpu.CompilerParams(
                dimension_semantics=("parallel", "parallel")),
        )(a, w, s, b)
    else:
        # Weight-streaming matmuls (small M, huge K): deeper weight buffering.
        stream_w = (M <= 512 and K >= 2048)
        if stream_w:
            w_spec = pl.BlockSpec((tk, tn), lambda i, j, k: (k, j),
                                  pipeline_mode=pl.Buffered(3))
        else:
            w_spec = pl.BlockSpec((tk, tn), lambda i, j, k: (k, j))
        out = pl.pallas_call(
            functools.partial(_matmul_kernel, act=act),
            out_shape=jax.ShapeDtypeStruct((Mp, Np), out_dtype),
            grid_spec=pltpu.PrefetchScalarGridSpec(
                num_scalar_prefetch=0,
                grid=(nm, nn, nk),
                in_specs=[
                    pl.BlockSpec((tm, tk), lambda i, j, k: (i, k)),
                    w_spec,
                    pl.BlockSpec((1, tn), lambda i, j, k: (0, j)),
                    pl.BlockSpec((1, tn), lambda i, j, k: (0, j)),
                ],
                out_specs=pl.BlockSpec((tm, tn), lambda i, j, k: (i, j)),
                scratch_shapes=[pltpu.VMEM((tm, tn), jnp.float32)],
            ),
            compiler_params=pltpu.CompilerParams(
                dimension_semantics=("parallel", "parallel", "arbitrary")),
        )(a, w, s, b)
    if Mp != M or Np != N:
        out = out[:M, :N]
    return out


# ----------------------------------------------------------------------------
# Direct 3x3 / stride-1 conv (+ folded BN + act), M-tiled, sublane-aligned windows.
# Input is a zero-padded map flattened to (N, (H+3)*Wp, Cin), Wp = round_up(W+2, 8).
# Output is the "virtual" layout (N, H, Wp, Cout) with columns >= W zeroed in-kernel.
# ----------------------------------------------------------------------------
def _pick_conv_tiles(Mv, Wp):
    tc = None
    if Wp <= 256:
        cand = Wp * max(1, 256 // Wp)           # chunk = whole image rows -> static mask
        if Mv % cand == 0:
            tc = cand
    if tc is None:
        tc = _largest_div(Mv, 8, 256) or 8
    tmb = _largest_div(Mv, tc, 2048) or tc
    return tc, tmb


def _conv3x3_s1_kernel(x_ref, w_ref, s_ref, b_ref, o_ref, *, Wp, W, TC, act):
    m = pl.program_id(2)
    TMB = o_ref.shape[1]
    tn = o_ref.shape[2]
    block_base = m * TMB
    scale = s_ref[...]
    bias = b_ref[...]
    iota = jax.lax.broadcasted_iota(jnp.int32, (TC, 1), 0)
    static_mask = ((iota % Wp) < W) if (TC % Wp == 0) else None

    for c in range(TMB // TC):
        cbase = block_base + c * TC
        acc = jnp.zeros((TC, tn), jnp.float32)
        for dy in range(3):
            start = pl.multiple_of(cbase + dy * Wp, 8)        # 8-aligned window start
            win = x_ref[0, pl.ds(start, TC + 8), :]           # one aligned load per dy
            for dx in range(3):
                a = win[dx:dx + TC, :]                        # 0/1/2-row shifted view
                acc = acc + jnp.dot(a, w_ref[dy * 3 + dx],
                                    preferred_element_type=jnp.float32)
        r = acc * scale + bias
        if act == "relu":
            r = jnp.maximum(r, 0.0)
        if static_mask is not None:
            mask = static_mask
        else:
            mask = ((cbase + iota) % Wp) < W
        r = jnp.where(mask, r, 0.0)                           # zero garbage columns
        o_ref[0, pl.ds(c * TC, TC), :] = r.astype(o_ref.dtype)


def conv3x3_s1(xf, H, W, Wp, p, act="relu"):
    """xf: (N, (H+3)*Wp, Cin) bf16 zero-padded map.  Returns (N, H, Wp, Cout)."""
    N, Min, Cin = xf.shape
    Cout = p["scale"].shape[0]
    assert Cin % 8 == 0
    Mv = H * Wp
    TC, TMB = _pick_conv_tiles(Mv, Wp)
    tn = 128 if Cout % 128 == 0 else Cout
    assert Cout % tn == 0
    w9 = p["w"].reshape(9, Cin, Cout)
    out = pl.pallas_call(
        functools.partial(_conv3x3_s1_kernel, Wp=Wp, W=W, TC=TC, act=act),
        out_shape=jax.ShapeDtypeStruct((N, Mv, Cout), jnp.bfloat16),
        grid_spec=pltpu.PrefetchScalarGridSpec(
            num_scalar_prefetch=0,
            grid=(N, Cout // tn, Mv // TMB),
            in_specs=[
                pl.BlockSpec((1, Min, Cin), lambda n, j, m: (n, 0, 0)),
                pl.BlockSpec((9, Cin, tn), lambda n, j, m: (0, 0, j)),
                pl.BlockSpec((1, tn), lambda n, j, m: (0, j)),
                pl.BlockSpec((1, tn), lambda n, j, m: (0, j)),
            ],
            out_specs=pl.BlockSpec((1, TMB, tn), lambda n, j, m: (n, m, j)),
        ),
        compiler_params=pltpu.CompilerParams(
            dimension_semantics=("parallel", "parallel", "parallel")),
    )(xf, w9, p["scale"].reshape(1, -1).astype(jnp.float32),
      p["bias"].reshape(1, -1).astype(jnp.float32))
    return out.reshape(N, H, Wp, Cout)


def pad_for_conv3x3(x, Wp):
    """Dense (N,H,W,C) -> zero-padded flattened (N,(H+3)*Wp,C)."""
    N, H, W, C = x.shape
    xp = jnp.pad(x, ((0, 0), (1, 2), (1, Wp - W - 1), (0, 0)))
    return xp.reshape(N, (H + 3) * Wp, C)


def virtual_to_padded(v, W):
    """Virtual conv output (garbage cols zeroed) -> next conv's padded input (one copy)."""
    N, H, Wp, C = v.shape
    xp = jnp.pad(v[:, :, :W + 1, :], ((0, 0), (1, 2), (1, Wp - W - 2), (0, 0)))
    return xp.reshape(N, (H + 3) * Wp, C)


def max_pool_ceil_from_virtual(v, H, W, k=3, s=2):
    # TODO(synk): MaxPool2d(3, stride=2, ceil_mode=True) kept as lax.reduce_window glue.
    # Works directly on the virtual layout: garbage cols are zero and inputs are
    # post-ReLU (>=0), so they never win a max; row ceil-padding uses -inf.
    Ho = -(-(H - k) // s) + 1
    Wo = -(-(W - k) // s) + 1
    ph = max((Ho - 1) * s + k - H, 0)
    pooled = jax.lax.reduce_window(
        v, jnp.array(-jnp.inf, dtype=v.dtype), jax.lax.max,
        (1, k, k, 1), (1, s, s, 1),
        padding=((0, 0), (0, ph), (0, 0), (0, 0)))
    return pooled[:, :Ho, :Wo, :]


# ----------------------------------------------------------------------------
# Fused SE module: GAP (MXU) -> FC1 -> ReLU -> FC2 -> sigmoid -> scale + residual -> ReLU
# ----------------------------------------------------------------------------
def _se_kernel(x_ref, r_ref, w1_ref, b1_ref, w2_ref, b2_ref, o_ref, *, inv_hw):
    x = x_ref[0]                                             # (HW, C) bf16
    ones = jnp.ones((1, x.shape[0]), jnp.bfloat16)
    s = jnp.dot(ones, x, preferred_element_type=jnp.float32) * inv_hw   # GAP on MXU
    h = jnp.dot(s.astype(jnp.bfloat16), w1_ref[...],
                preferred_element_type=jnp.float32) + b1_ref[...]
    h = jnp.maximum(h, 0.0)
    g = jnp.dot(h.astype(jnp.bfloat16), w2_ref[...],
                preferred_element_type=jnp.float32) + b2_ref[...]
    g = jax.nn.sigmoid(g)                                    # (1, C) f32
    o = x * g.astype(x.dtype) + r_ref[0]
    o_ref[0] = jnp.maximum(o, 0.0).astype(o_ref.dtype)


def se_block(x_f, res_f, p):
    N, HW, C = x_f.shape
    Cr = p["fc1_w"].shape[1]
    return pl.pallas_call(
        functools.partial(_se_kernel, inv_hw=1.0 / HW),
        out_shape=jax.ShapeDtypeStruct((N, HW, C), jnp.bfloat16),
        grid_spec=pltpu.PrefetchScalarGridSpec(
            num_scalar_prefetch=0,
            grid=(N,),
            in_specs=[
                pl.BlockSpec((1, HW, C), lambda n: (n, 0, 0)),
                pl.BlockSpec((1, HW, C), lambda n: (n, 0, 0)),
                pl.BlockSpec((C, Cr), lambda n: (0, 0)),
                pl.BlockSpec((1, Cr), lambda n: (0, 0)),
                pl.BlockSpec((Cr, C), lambda n: (0, 0)),
                pl.BlockSpec((1, C), lambda n: (0, 0)),
            ],
            out_specs=pl.BlockSpec((1, HW, C), lambda n: (n, 0, 0)),
        ),
        compiler_params=pltpu.CompilerParams(
            dimension_semantics=("parallel",),
            vmem_limit_bytes=32 * 1024 * 1024),
    )(x_f, res_f, p["fc1_w"], p["fc1_b"].reshape(1, -1),
      p["fc2_w"], p["fc2_b"].reshape(1, -1))


# ----------------------------------------------------------------------------
# Head: AvgPool2d(7) (== global mean on the 7x7 map) + Linear; classifier columns
# split across grid blocks so both TensorCores can participate (v7x).
# Dropout(0.2) is identity at inference.
# ----------------------------------------------------------------------------
def _head_kernel(x_ref, w_ref, b_ref, o_ref, *, inv_hw):
    feat = jnp.sum(x_ref[...].astype(jnp.float32), axis=1) * inv_hw   # (N, C)
    r = jnp.dot(feat.astype(jnp.bfloat16), w_ref[...],
                preferred_element_type=jnp.float32) + b_ref[...]
    o_ref[...] = r.astype(o_ref.dtype)


def head_forward(x_f, fc_w, fc_b, num_classes):
    N, HW, C = x_f.shape
    Np = fc_w.shape[1]
    tn = 512 if Np % 512 == 0 else Np
    out = pl.pallas_call(
        functools.partial(_head_kernel, inv_hw=1.0 / HW),
        out_shape=jax.ShapeDtypeStruct((N, Np), jnp.float32),
        grid_spec=pltpu.PrefetchScalarGridSpec(
            num_scalar_prefetch=0,
            grid=(Np // tn,),
            in_specs=[
                pl.BlockSpec((N, HW, C), lambda j: (0, 0, 0)),
                pl.BlockSpec((C, tn), lambda j: (0, j)),
                pl.BlockSpec((1, tn), lambda j: (0, j)),
            ],
            out_specs=pl.BlockSpec((N, tn), lambda j: (0, j)),
        ),
        compiler_params=pltpu.CompilerParams(
            dimension_semantics=("parallel",)),
    )(x_f, fc_w, fc_b.reshape(1, -1).astype(jnp.float32))
    return out[:, :num_classes]


# ----------------------------------------------------------------------------
# JAX glue: im2col (stride-2 3x3 convs + Cin=3 stem conv only)
# ----------------------------------------------------------------------------
def _im2col(x, k, stride, pad):
    # TODO(synk): stride-2 3x3 convs still materialize small im2col patch tensors in HBM.
    if pad:
        x = jnp.pad(x, ((0, 0), (pad, pad), (pad, pad), (0, 0)))
    N, Hp, Wp, C = x.shape
    Ho = (Hp - k) // stride + 1
    Wo = (Wp - k) // stride + 1
    cols = []
    for dy in range(k):
        for dx in range(k):
            cols.append(x[:, dy:dy + stride * (Ho - 1) + 1:stride,
                          dx:dx + stride * (Wo - 1) + 1:stride, :])
    patches = jnp.stack(cols, axis=3)                 # (N, Ho, Wo, k*k, C)
    return patches.reshape(N * Ho * Wo, k * k * C), Ho, Wo


def conv_bn_act(x, p, stride=1, pad=0, act="none"):
    """Conv2d(bias=False) + folded inference BatchNorm + optional ReLU (matmul path)."""
    N, H, W, Cin = x.shape
    k = p["k"]
    if k == 1:
        assert stride == 1 and pad == 0
        a = x.reshape(N * H * W, Cin)
        out = matmul_scale_bias_act(a, p["w"], p["scale"], p["bias"], act)
        return out.reshape(N, H, W, -1)
    a, Ho, Wo = _im2col(x, k, stride, pad)
    out = matmul_scale_bias_act(a, p["w"], p["scale"], p["bias"], act)
    return out.reshape(N, Ho, Wo, -1)


# ----------------------------------------------------------------------------
# Deterministic parameter construction (synthetic, He-ish scaling).
# Stem channels are zero-padded 64 -> 128 for lane-dense stores (exactly equivalent:
# padded output channels are 0 and padded input weights are 0).
# ----------------------------------------------------------------------------
class _KeyGen:
    def __init__(self, seed):
        self._key = jax.random.PRNGKey(seed)

    def __call__(self):
        self._key, sub = jax.random.split(self._key)
        return sub


KG = _KeyGen(0)


def _conv_weight(cin, cout, k, cin_pad=None, cout_pad=None):
    cin_pad = cin_pad or cin
    cout_pad = cout_pad or cout
    fan_in = cin * k * k
    w = jax.random.normal(KG(), (k, k, cin, cout), jnp.float32) / math.sqrt(fan_in)
    if cin_pad != cin or cout_pad != cout:
        w = jnp.pad(w, ((0, 0), (0, 0), (0, cin_pad - cin), (0, cout_pad - cout)))
    return w.reshape(k * k * cin_pad, cout_pad).astype(jnp.bfloat16)


def _bn_fold(c, c_pad=None, eps=1e-5):
    c_pad = c_pad or c
    gamma = 1.0 + 0.1 * jax.random.normal(KG(), (c,), jnp.float32)
    beta = 0.1 * jax.random.normal(KG(), (c,), jnp.float32)
    mean = 0.1 * jax.random.normal(KG(), (c,), jnp.float32)
    var = 1.0 + 0.1 * jnp.abs(jax.random.normal(KG(), (c,), jnp.float32))
    scale = gamma / jnp.sqrt(var + eps)
    bias = beta - mean * scale
    if c_pad != c:
        scale = jnp.pad(scale, (0, c_pad - c))
        bias = jnp.pad(bias, (0, c_pad - c))
    return scale, bias


def _conv_bn(cin, cout, k, cin_pad=None, cout_pad=None):
    scale, bias = _bn_fold(cout, cout_pad)
    return {"k": k, "w": _conv_weight(cin, cout, k, cin_pad, cout_pad),
            "scale": scale, "bias": bias}


def _linearish(cin, cout):
    w = (jax.random.normal(KG(), (cin, cout), jnp.float32) / math.sqrt(cin))
    b = 0.01 * jax.random.normal(KG(), (cout,), jnp.float32)
    return w.astype(jnp.bfloat16), b


def make_se_bottleneck(inplanes, planes, groups, reduction, stride=1, downsample=None):
    # TODO(synk): grouped conv (groups > 1) not implemented; this model uses groups=1.
    assert groups == 1
    c2, c4 = planes * 2, planes * EXPANSION
    fc1_w, fc1_b = _linearish(c4, c4 // reduction)
    fc2_w, fc2_b = _linearish(c4 // reduction, c4)
    p = {
        "conv1": _conv_bn(inplanes, c2, 1),
        "conv2": _conv_bn(c2, c4, 3),
        "conv3": _conv_bn(c4, c4, 1),
        "stride": stride,
        "fc1_w": fc1_w, "fc1_b": fc1_b,
        "fc2_w": fc2_w, "fc2_b": fc2_b,
        "downsample": None, "ds_pad": 0,
    }
    if downsample is not None:
        ds_k, ds_pad = downsample
        p["downsample"] = _conv_bn(inplanes, c4, ds_k)
        p["ds_pad"] = ds_pad
    return p


def make_senet(layers, groups, reduction, num_classes=1000):
    params = {"layer0": [
        _conv_bn(3, 64, 3, cout_pad=128),               # stem conv1, Cout padded to 128
        _conv_bn(64, 64, 3, cin_pad=128, cout_pad=128),  # stem conv2
        _conv_bn(64, 128, 3, cin_pad=128),               # stem conv3
    ]}
    inplanes = 128

    def make_layer(inplanes, planes, blocks, stride, ds_k, ds_pad):
        downsample = None
        if stride != 1 or inplanes != planes * EXPANSION:
            downsample = (ds_k, ds_pad)
        blks = [make_se_bottleneck(inplanes, planes, groups, reduction, stride, downsample)]
        inplanes = planes * EXPANSION
        for _ in range(1, blocks):
            blks.append(make_se_bottleneck(inplanes, planes, groups, reduction))
        return blks, inplanes

    params["layer1"], inplanes = make_layer(inplanes, 64, layers[0], 1, 1, 0)
    params["layer2"], inplanes = make_layer(inplanes, 128, layers[1], 2, 3, 1)
    params["layer3"], inplanes = make_layer(inplanes, 256, layers[2], 2, 3, 1)
    params["layer4"], inplanes = make_layer(inplanes, 512, layers[3], 2, 3, 1)
    fc_w, fc_b = _linearish(512 * EXPANSION, num_classes)
    params["fc_w"] = _pad_axis(fc_w, 128, 1)                              # 1000 -> 1024
    params["fc_b"] = _pad_axis(fc_b.reshape(1, -1), 128, 1).reshape(-1)
    params["num_classes"] = num_classes
    return params


# ----------------------------------------------------------------------------
# Forward pass (mirrors SENet.forward with SEBottleneck blocks, inference mode)
# ----------------------------------------------------------------------------
def block_forward(x, p):
    N, H, W, C = x.shape
    residual = x
    out = conv_bn_act(x, p["conv1"], stride=1, pad=0, act="relu")
    if p["stride"] == 1:
        Wp = _round_up(W + 2, 8)
        xf = pad_for_conv3x3(out, Wp)
        v = conv3x3_s1(xf, H, W, Wp, p["conv2"], act="relu")
        out = v[:, :, :W, :]
    else:
        out = conv_bn_act(out, p["conv2"], stride=p["stride"], pad=1, act="relu")
    out = conv_bn_act(out, p["conv3"], stride=1, pad=0, act="none")
    if p["downsample"] is not None:
        residual = conv_bn_act(x, p["downsample"], stride=p["stride"],
                               pad=p["ds_pad"], act="none")
    Nn, Hh, Ww, Cc = out.shape
    out = se_block(out.reshape(Nn, Hh * Ww, Cc), residual.reshape(Nn, Hh * Ww, Cc), p)
    return out.reshape(Nn, Hh, Ww, Cc)


def senet_forward(x_nchw, params):
    x = jnp.transpose(x_nchw, (0, 2, 3, 1)).astype(jnp.bfloat16)   # NCHW -> NHWC bf16
    c1, c2, c3 = params["layer0"]
    x = conv_bn_act(x, c1, stride=2, pad=1, act="relu")            # (N,112,112,128)
    N, H, W, _ = x.shape
    Wp = _round_up(W + 2, 8)
    xf = pad_for_conv3x3(x, Wp)
    v = conv3x3_s1(xf, H, W, Wp, c2, act="relu")                   # stem conv2
    xf = virtual_to_padded(v, W)                                   # fused slice+pad
    v = conv3x3_s1(xf, H, W, Wp, c3, act="relu")                   # stem conv3
    x = max_pool_ceil_from_virtual(v, H, W, k=3, s=2)              # (N,56,56,128)
    for name in ("layer1", "layer2", "layer3", "layer4"):
        for blk in params[name]:
            x = block_forward(x, blk)
    # AvgPool2d(7) on the 7x7 map == global mean; Dropout(0.2) is identity at inference.
    Nb, Hh, Ww, C = x.shape
    return head_forward(x.reshape(Nb, Hh * Ww, C), params["fc_w"], params["fc_b"],
                        params["num_classes"])


if __name__ == "__main__":
    # The fixed stem strides and AvgPool2d(7) imply a 224x224 input (-> 7x7 final map).
    # layers=[1,1,1,1] keeps the block count minimal.
    params = make_senet(layers=[1, 1, 1, 1], groups=1, reduction=16, num_classes=1000)
    x = jax.random.normal(jax.random.PRNGKey(0), (2, 3, 224, 224), jnp.float32)
    out = senet_forward(x, params)
    out = jax.block_until_ready(out)
    assert out.shape == (2, 1000), out.shape
    assert bool(jnp.all(jnp.isfinite(out)))
    print("KERNEL_OK")
</pallas_src>

<mosaic_0001>
module attributes {stable_mosaic.version = 11 : i64} {
  func.func @_matmul_k1_kernel(%arg0: i32, %arg1: i32, %arg2: memref<3584x32xbf16, #tpu.memory_space<vmem>>, %arg3: memref<32x128xbf16, #tpu.memory_space<vmem>>, %arg4: memref<1x128xf32, #tpu.memory_space<vmem>>, %arg5: memref<1x128xf32, #tpu.memory_space<vmem>>, %arg6: memref<3584x128xbf16, #tpu.memory_space<vmem>>) attributes {dimension_semantics = [#tpu.dimension_semantics<parallel>, #tpu.dimension_semantics<parallel>], iteration_bounds = array<i64: 7, 1>, scalar_prefetch = 0 : i64, scratch_operands = 0 : i64, tpu.core_type = #tpu.core_type<tc>, window_params = [{transform_indices = @transform_0, window_bounds = array<i64: 3584, 32>}, {transform_indices = @transform_1, window_bounds = array<i64: 32, 128>}, {transform_indices = @transform_2, window_bounds = array<i64: 1, 128>}, {transform_indices = @transform_3, window_bounds = array<i64: 1, 128>}, {transform_indices = @transform_4, window_bounds = array<i64: 3584, 128>}]} {
    %c0 = arith.constant 0 : index
    %c0_0 = arith.constant 0 : index
    %0 = vector.load %arg4[%c0, %c0_0] : memref<1x128xf32, #tpu.memory_space<vmem>>, vector<1x128xf32>
    %c0_1 = arith.constant 0 : index
    %c0_2 = arith.constant 0 : index
    %1 = vector.load %arg5[%c0_1, %c0_2] : memref<1x128xf32, #tpu.memory_space<vmem>>, vector<1x128xf32>
    %c0_3 = arith.constant 0 : index
    %c0_4 = arith.constant 0 : index
    %2 = vector.load %arg2[%c0_3, %c0_4] : memref<3584x32xbf16, #tpu.memory_space<vmem>>, vector<512x32xbf16>
    %c0_5 = arith.constant 0 : index
    %c0_6 = arith.constant 0 : index
    %3 = vector.load %arg3[%c0_5, %c0_6] : memref<32x128xbf16, #tpu.memory_space<vmem>>, vector<32x128xbf16>
    %cst = arith.constant dense<0.000000e+00> : vector<512x128xf32>
    %4 = tpu.matmul %2, %3, %cst {dimension_numbers = #tpu.dot_dimension_numbers<[1], [0], [0], [1], [0, 0, 1, 1], [], []>} : vector<512x32xbf16>, vector<32x128xbf16>, vector<512x128xf32> -> vector<512x128xf32>
    %5 = vector.broadcast %0 : vector<1x128xf32> to vector<512x128xf32>
    %6 = arith.mulf %4, %5 : vector<512x128xf32>
    %7 = vector.broadcast %1 : vector<1x128xf32> to vector<512x128xf32>
    %8 = arith.addf %6, %7 : vector<512x128xf32>
    %cst_7 = arith.constant 0.000000e+00 : f32
    %9 = vector.broadcast %cst_7 : f32 to vector<512x128xf32>
    %10 = arith.maximumf %8, %9 : vector<512x128xf32>
    %11 = arith.truncf %10 : vector<512x128xf32> to vector<512x128xbf16>
    %c0_8 = arith.constant 0 : index
    %c0_9 = arith.constant 0 : index
    %12 = vector.load %arg6[%c0_8, %c0_9] : memref<3584x128xbf16, #tpu.memory_space<vmem>>, vector<512x128xbf16>
    tpu.vector_store %arg6[%c0_8, %c0_9], %11 {strides = array<i32>} : memref<3584x128xbf16, #tpu.memory_space<vmem>>, vector<512x128xbf16>,
    %c512 = arith.constant 512 : index
    %c0_10 = arith.constant 0 : index
    %13 = vector.load %arg2[%c512, %c0_10] : memref<3584x32xbf16, #tpu.memory_space<vmem>>, vector<512x32xbf16>
    %c0_11 = arith.constant 0 : index
    %c0_12 = arith.constant 0 : index
    %14 = vector.load %arg3[%c0_11, %c0_12] : memref<32x128xbf16, #tpu.memory_space<vmem>>, vector<32x128xbf16>
    %cst_13 = arith.constant dense<0.000000e+00> : vector<512x128xf32>
    %15 = tpu.matmul %13, %14, %cst_13 {dimension_numbers = #tpu.dot_dimension_numbers<[1], [0], [0], [1], [0, 0, 1, 1], [], []>} : vector<512x32xbf16>, vector<32x128xbf16>, vector<512x128xf32> -> vector<512x128xf32>
    %16 = vector.broadcast %0 : vector<1x128xf32> to vector<512x128xf32>
    %17 = arith.mulf %15, %16 : vector<512x128xf32>
    %18 = vector.broadcast %1 : vector<1x128xf32> to vector<512x128xf32>
    %19 = arith.addf %17, %18 : vector<512x128xf32>
    %cst_14 = arith.constant 0.000000e+00 : f32
    %20 = vector.broadcast %cst_14 : f32 to vector<512x128xf32>
    %21 = arith.maximumf %19, %20 : vector<512x128xf32>
    %22 = arith.truncf %21 : vector<512x128xf32> to vector<512x128xbf16>
    %c512_15 = arith.constant 512 : index
    %c0_16 = arith.constant 0 : index
    %23 = vector.load %arg6[%c512_15, %c0_16] : memref<3584x128xbf16, #tpu.memory_space<vmem>>, vector<512x128xbf16>
    tpu.vector_store %arg6[%c512_15, %c0_16], %22 {strides = array<i32>} : memref<3584x128xbf16, #tpu.memory_space<vmem>>, vector<512x128xbf16>,
    %c1024 = arith.constant 1024 : index
    %c0_17 = arith.constant 0 : index
    %24 = vector.load %arg2[%c1024, %c0_17] : memref<3584x32xbf16, #tpu.memory_space<vmem>>, vector<512x32xbf16>
    %c0_18 = arith.constant 0 : index
    %c0_19 = arith.constant 0 : index
    %25 = vector.load %arg3[%c0_18, %c0_19] : memref<32x128xbf16, #tpu.memory_space<vmem>>, vector<32x128xbf16>
    %cst_20 = arith.constant dense<0.000000e+00> : vector<512x128xf32>
    %26 = tpu.matmul %24, %25, %cst_20 {dimension_numbers = #tpu.dot_dimension_numbers<[1], [0], [0], [1], [0, 0, 1, 1], [], []>} : vector<512x32xbf16>, vector<32x128xbf16>, vector<512x128xf32> -> vector<512x128xf32>
    %27 = vector.broadcast %0 : vector<1x128xf32> to vector<512x128xf32>
    %28 = arith.mulf %26, %27 : vector<512x128xf32>
    %29 = vector.broadcast %1 : vector<1x128xf32> to vector<512x128xf32>
    %30 = arith.addf %28, %29 : vector<512x128xf32>
    %cst_21 = arith.constant 0.000000e+00 : f32
    %31 = vector.broadcast %cst_21 : f32 to vector<512x128xf32>
    %32 = arith.maximumf %30, %31 : vector<512x128xf32>
    %33 = arith.truncf %32 : vector<512x128xf32> to vector<512x128xbf16>
    %c1024_22 = arith.constant 1024 : index
    %c0_23 = arith.constant 0 : index
    %34 = vector.load %arg6[%c1024_22, %c0_23] : memref<3584x128xbf16, #tpu.memory_space<vmem>>, vector<512x128xbf16>
    tpu.vector_store %arg6[%c1024_22, %c0_23], %33 {strides = array<i32>} : memref<3584x128xbf16, #tpu.memory_space<vmem>>, vector<512x128xbf16>,
    %c1536 = arith.constant 1536 : index
    %c0_24 = arith.constant 0 : index
    %35 = vector.load %arg2[%c1536, %c0_24] : memref<3584x32xbf16, #tpu.memory_space<vmem>>, vector<512x32xbf16>
    %c0_25 = arith.constant 0 : index
    %c0_26 = arith.constant 0 : index
    %36 = vector.load %arg3[%c0_25, %c0_26] : memref<32x128xbf16, #tpu.memory_space<vmem>>, vector<32x128xbf16>
    %cst_27 = arith.constant dense<0.000000e+00> : vector<512x128xf32>
    %37 = tpu.matmul %35, %36, %cst_27 {dimension_numbers = #tpu.dot_dimension_numbers<[1], [0], [0], [1], [0, 0, 1, 1], [], []>} : vector<512x32xbf16>, vector<32x128xbf16>, vector<512x128xf32> -> vector<512x128xf32>
    %38 = vector.broadcast %0 : vector<1x128xf32> to vector<512x128xf32>
    %39 = arith.mulf %37, %38 : vector<512x128xf32>
    %40 = vector.broadcast %1 : vector<1x128xf32> to vector<512x128xf32>
    %41 = arith.addf %39, %40 : vector<512x128xf32>
    %cst_28 = arith.constant 0.000000e+00 : f32
    %42 = vector.broadcast %cst_28 : f32 to vector<512x128xf32>
    %43 = arith.maximumf %41, %42 : vector<512x128xf32>
    %44 = arith.truncf %43 : vector<512x128xf32> to vector<512x128xbf16>
    %c1536_29 = arith.constant 1536 : index
    %c0_30 = arith.constant 0 : index
    %45 = vector.load %arg6[%c1536_29, %c0_30] : memref<3584x128xbf16, #tpu.memory_space<vmem>>, vector<512x128xbf16>
    tpu.vector_store %arg6[%c1536_29, %c0_30], %44 {strides = array<i32>} : memref<3584x128xbf16, #tpu.memory_space<vmem>>, vector<512x128xbf16>,
    %c2048 = arith.constant 2048 : index
    %c0_31 = arith.constant 0 : index
    %46 = vector.load %arg2[%c2048, %c0_31] : memref<3584x32xbf16, #tpu.memory_space<vmem>>, vector<512x32xbf16>
    %c0_32 = arith.constant 0 : index
    %c0_33 = arith.constant 0 : index
    %47 = vector.load %arg3[%c0_32, %c0_33] : memref<32x128xbf16, #tpu.memory_space<vmem>>, vector<32x128xbf16>
    %cst_34 = arith.constant dense<0.000000e+00> : vector<512x128xf32>
    %48 = tpu.matmul %46, %47, %cst_34 {dimension_numbers = #tpu.dot_dimension_numbers<[1], [0], [0], [1], [0, 0, 1, 1], [], []>} : vector<512x32xbf16>, vector<32x128xbf16>, vector<512x128xf32> -> vector<512x128xf32>
    %49 = vector.broadcast %0 : vector<1x128xf32> to vector<512x128xf32>
    %50 = arith.mulf %48, %49 : vector<512x128xf32>
    %51 = vector.broadcast %1 : vector<1x128xf32> to vector<512x128xf32>
    %52 = arith.addf %50, %51 : vector<512x128xf32>
    %cst_35 = arith.constant 0.000000e+00 : f32
    %53 = vector.broadcast %cst_35 : f32 to vector<512x128xf32>
    %54 = arith.maximumf %52, %53 : vector<512x128xf32>
    %55 = arith.truncf %54 : vector<512x128xf32> to vector<512x128xbf16>
    %c2048_36 = arith.constant 2048 : index
    %c0_37 = arith.constant 0 : index
    %56 = vector.load %arg6[%c2048_36, %c0_37] : memref<3584x128xbf16, #tpu.memory_space<vmem>>, vector<512x128xbf16>
    tpu.vector_store %arg6[%c2048_36, %c0_37], %55 {strides = array<i32>} : memref<3584x128xbf16, #tpu.memory_space<vmem>>, vector<512x128xbf16>,
    %c2560 = arith.constant 2560 : index
    %c0_38 = arith.constant 0 : index
    %57 = vector.load %arg2[%c2560, %c0_38] : memref<3584x32xbf16, #tpu.memory_space<vmem>>, vector<512x32xbf16>
    %c0_39 = arith.constant 0 : index
    %c0_40 = arith.constant 0 : index
    %58 = vector.load %arg3[%c0_39, %c0_40] : memref<32x128xbf16, #tpu.memory_space<vmem>>, vector<32x128xbf16>
    %cst_41 = arith.constant dense<0.000000e+00> : vector<512x128xf32>
    %59 = tpu.matmul %57, %58, %cst_41 {dimension_numbers = #tpu.dot_dimension_numbers<[1], [0], [0], [1], [0, 0, 1, 1], [], []>} : vector<512x32xbf16>, vector<32x128xbf16>, vector<512x128xf32> -> vector<512x128xf32>
    %60 = vector.broadcast %0 : vector<1x128xf32> to vector<512x128xf32>
    %61 = arith.mulf %59, %60 : vector<512x128xf32>
    %62 = vector.broadcast %1 : vector<1x128xf32> to vector<512x128xf32>
    %63 = arith.addf %61, %62 : vector<512x128xf32>
    %cst_42 = arith.constant 0.000000e+00 : f32
    %64 = vector.broadcast %cst_42 : f32 to vector<512x128xf32>
    %65 = arith.maximumf %63, %64 : vector<512x128xf32>
    %66 = arith.truncf %65 : vector<512x128xf32> to vector<512x128xbf16>
    %c2560_43 = arith.constant 2560 : index
    %c0_44 = arith.constant 0 : index
    %67 = vector.load %arg6[%c2560_43, %c0_44] : memref<3584x128xbf16, #tpu.memory_space<vmem>>, vector<512x128xbf16>
    tpu.vector_store %arg6[%c2560_43, %c0_44], %66 {strides = array<i32>} : memref<3584x128xbf16, #tpu.memory_space<vmem>>, vector<512x128xbf16>,
    %c3072 = arith.constant 3072 : index
    %c0_45 = arith.constant 0 : index
    %68 = vector.load %arg2[%c3072, %c0_45] : memref<3584x32xbf16, #tpu.memory_space<vmem>>, vector<512x32xbf16>
    %c0_46 = arith.constant 0 : index
    %c0_47 = arith.constant 0 : index
    %69 = vector.load %arg3[%c0_46, %c0_47] : memref<32x128xbf16, #tpu.memory_space<vmem>>, vector<32x128xbf16>
    %cst_48 = arith.constant dense<0.000000e+00> : vector<512x128xf32>
    %70 = tpu.matmul %68, %69, %cst_48 {dimension_numbers = #tpu.dot_dimension_numbers<[1], [0], [0], [1], [0, 0, 1, 1], [], []>} : vector<512x32xbf16>, vector<32x128xbf16>, vector<512x128xf32> -> vector<512x128xf32>
    %71 = vector.broadcast %0 : vector<1x128xf32> to vector<512x128xf32>
    %72 = arith.mulf %70, %71 : vector<512x128xf32>
    %73 = vector.broadcast %1 : vector<1x128xf32> to vector<512x128xf32>
    %74 = arith.addf %72, %73 : vector<512x128xf32>
    %cst_49 = arith.constant 0.000000e+00 : f32
    %75 = vector.broadcast %cst_49 : f32 to vector<512x128xf32>
    %76 = arith.maximumf %74, %75 : vector<512x128xf32>
    %77 = arith.truncf %76 : vector<512x128xf32> to vector<512x128xbf16>
    %c3072_50 = arith.constant 3072 : index
    %c0_51 = arith.constant 0 : index
    %78 = vector.load %arg6[%c3072_50, %c0_51] : memref<3584x128xbf16, #tpu.memory_space<vmem>>, vector<512x128xbf16>
    tpu.vector_store %arg6[%c3072_50, %c0_51], %77 {strides = array<i32>} : memref<3584x128xbf16, #tpu.memory_space<vmem>>, vector<512x128xbf16>,
    return
  }
  func.func @transform_0(%arg0: i32, %arg1: i32) -> (i32, i32) {
    %c0_i32 = arith.constant 0 : i32
    %c0_i32_0 = arith.constant 0 : i32
    return %arg0, %c0_i32 : i32, i32
  }
  func.func @transform_1(%arg0: i32, %arg1: i32) -> (i32, i32) {
    %c0_i32 = arith.constant 0 : i32
    %c0_i32_0 = arith.constant 0 : i32
    return %c0_i32, %arg1 : i32, i32
  }
  func.func @transform_2(%arg0: i32, %arg1: i32) -> (i32, i32) {
    %c0_i32 = arith.constant 0 : i32
    %c0_i32_0 = arith.constant 0 : i32
    return %c0_i32, %arg1 : i32, i32
  }
  func.func @transform_3(%arg0: i32, %arg1: i32) -> (i32, i32) {
    %c0_i32 = arith.constant 0 : i32
    %c0_i32_0 = arith.constant 0 : i32
    return %c0_i32, %arg1 : i32, i32
  }
  func.func @transform_4(%arg0: i32, %arg1: i32) -> (i32, i32) {
    %c0_i32 = arith.constant 0 : i32
    return %arg0, %arg1 : i32, i32
  }
}

</mosaic_0001>

<llo_original>
// kernel: tpu_custom_call.1
$region0: #{tpu_custom_call.1}
  #allocation0 [shape = 'u32[]', space=smem, size = 0x4, offset = 0x4, fixed_abs, tag = 'smem constant byte address 0x4 - core index']
  #allocation1 [shape = 'u32[72,128]{1,0:T(1,128)}', space=vmem, size = 0x9000, scoped, tag = 'internal scratch']
  %s0 = inlined_call_operand.vmem [shape: bf16[25088,32], index: 0, kind: input, shape index: {}]
  %s1 = inlined_call_operand.vmem [shape: bf16[32,128], index: 1, kind: input, shape index: {}]
  %s2 = inlined_call_operand.vmem [shape: f32[1,128], index: 2, kind: input, shape index: {}]
  %s3 = inlined_call_operand.vmem [shape: f32[1,128], index: 3, kind: input, shape index: {}]
  %s4 = inlined_call_operand.hbm [shape: bf16[25088,128], index: 4, kind: output, shape index: {}]
  %s5 = sld [smem:[#allocation0]]
  $region49: #{tpu_custom_call.1} parent=0
    _
  %s7 = ssub.s32 1, %s5
  %s8 = scalar_select 0, %s7, %s5
  $region1: #{tpu_custom_call.1} parent=0
    #allocation2 [shape = 'u8[1835008]{0}', space=vmem, size = 0x1c0000, scoped, tag = 'output window, operand 0']
    #allocation3 [shape = 's32[2]{0}', space=sflag, size = 0x8, scoped, tag = 'scoped memory for tpu_custom_call.1']
    %9 = vsyncpa [#allocation3], 0
    %s10 = scalar_lea.sflag [#allocation3], 1
    %11 = vsyncpa %s10, 0
    loop: start=0, step=1, limit=9
    $region2: #{tpu_custom_call.1} parent=1 // loop_pre_header
      _
    $region3: #{tpu_custom_call.1} parent=1 // loop_header
      %s13 = sphi 0, %s17
      %p14 = scmp.ge.s32.totalorder %s13, 9
      %s20 = sphi 0, %s32
      %s21 = sphi 0, %s28
      %s22 = sphi 0, %s20
      %s23 = sphi 0, %s21
      %s24 = sphi 0, %s22
      %s25 = sphi 0, %s23
      %s35 = sphi 0, %s37
      %s38 = sphi 0, %s35
      %s39 = sphi 0, %s38
      %s55 = sphi 0, %s39
      %s61 = sphi 0, %s63
      %s64 = sphi 0, %s61
      %s65 = sphi 0, %s64
      %s81 = sphi 0, %s65
      %s87 = sphi 0, %s89
      %s90 = sphi 0, %s87
      %s91 = sphi 0, %s90
      %s107 = sphi 0, %s91
      %s113 = sphi 0, %s115
      %s116 = sphi 0, %s113
      %s117 = sphi 0, %s116
      %s133 = sphi 0, %s117
      %s141 = sphi 0, %s143
      %s144 = sphi 0, %s141
      %s145 = sphi 0, %s144
      %s161 = sphi 0, %s145
    $region4: #{tpu_custom_call.1} parent=1 // loop_header_branch
      %16 = sbr.rel (%p14) target = $region8
    $region5: #{tpu_custom_call.1} parent=1 // loop_body
      %s18 = ssub.s32 %s13, 1
      %s19 = ssub.s32 %s13, 2
      %s26 = sadd.s32 1, %s21
      %p27 = scmp.ge.s32.totalorder %s26, 1
      %s28 = scalar_select %p27, 0, %s26
      %s29 = sadd.s32 1, %s20
      %s30 = scalar_select %p27, %s29, %s20
      %p31 = scmp.ge.s32.totalorder %s30, 7
      %s32 = scalar_select %p31, 0, %s30
      %s33 = ssub.s32 %s20, %s32
      %p34 = scmp.eq.s32.totalorder %s33, 0
      %s36 = sadd.s32 %s35, 1
      %s37 = scalar_select %p34, %s35, %s36
      %p40 = pneg %p34
      %p41 = scmp.eq.s32.totalorder %s13, 6
      %p42 = por %p40, %p41
      %p43 = scmp.ne.s32.totalorder %s35, %s38
      %p44 = scmp.eq.s32.totalorder %s13, 0
      %p45 = por %p43, %p44
      %p46 = scmp.ne.s32.totalorder %s35, %s38
      %p47 = scmp.eq.s32.totalorder %s18, 6
      %p48 = por %p46, %p47
      %p49 = scmp.ne.s32.totalorder %s38, %s39
      %p50 = scmp.eq.s32.totalorder %s18, 0
      %p51 = por %p49, %p50
      %p52 = scmp.ne.s32.totalorder %s38, %s39
      %p53 = scmp.eq.s32.totalorder %s19, 6
      %p54 = por %p52, %p53
      %p56 = scmp.ne.s32.totalorder %s39, %s55
      %p57 = scmp.eq.s32.totalorder %s19, 0
      %p58 = por %p56, %p57
      %s59 = ssub.s32 %s21, %s28
      %p60 = scmp.eq.s32.totalorder %s59, 0
      %s62 = sadd.s32 %s61, 1
      %s63 = scalar_select %p60, %s61, %s62
      %p66 = pneg %p60
      %p67 = scmp.eq.s32.totalorder %s13, 6
      %p68 = por %p66, %p67
      %p69 = scmp.ne.s32.totalorder %s61, %s64
      %p70 = scmp.eq.s32.totalorder %s13, 0
      %p71 = por %p69, %p70
      %p72 = scmp.ne.s32.totalorder %s61, %s64
      %p73 = scmp.eq.s32.totalorder %s18, 6
      %p74 = por %p72, %p73
      %p75 = scmp.ne.s32.totalorder %s64, %s65
      %p76 = scmp.eq.s32.totalorder %s18, 0
      %p77 = por %p75, %p76
      %p78 = scmp.ne.s32.totalorder %s64, %s65
      %p79 = scmp.eq.s32.totalorder %s19, 6
      %p80 = por %p78, %p79
      %p82 = scmp.ne.s32.totalorder %s65, %s81
      %p83 = scmp.eq.s32.totalorder %s19, 0
      %p84 = por %p82, %p83
      %s85 = ssub.s32 %s21, %s28
      %p86 = scmp.eq.s32.totalorder %s85, 0
      %s88 = sadd.s32 %s87, 1
      %s89 = scalar_select %p86, %s87, %s88
      %p92 = pneg %p86
      %p93 = scmp.eq.s32.totalorder %s13, 6
      %p94 = por %p92, %p93
      %p95 = scmp.ne.s32.totalorder %s87, %s90
      %p96 = scmp.eq.s32.totalorder %s13, 0
      %p97 = por %p95, %p96
      %p98 = scmp.ne.s32.totalorder %s87, %s90
      %p99 = scmp.eq.s32.totalorder %s18, 6
      %p100 = por %p98, %p99
      %p101 = scmp.ne.s32.totalorder %s90, %s91
      %p102 = scmp.eq.s32.totalorder %s18, 0
      %p103 = por %p101, %p102
      %p104 = scmp.ne.s32.totalorder %s90, %s91
      %p105 = scmp.eq.s32.totalorder %s19, 6
      %p106 = por %p104, %p105
      %p108 = scmp.ne.s32.totalorder %s91, %s107
      %p109 = scmp.eq.s32.totalorder %s19, 0
      %p110 = por %p108, %p109
      %s111 = ssub.s32 %s21, %s28
      %p112 = scmp.eq.s32.totalorder %s111, 0
      %s114 = sadd.s32 %s113, 1
      %s115 = scalar_select %p112, %s113, %s114
      %p118 = pneg %p112
      %p119 = scmp.eq.s32.totalorder %s13, 6
      %p120 = por %p118, %p119
      %p121 = scmp.ne.s32.totalorder %s113, %s116
      %p122 = scmp.eq.s32.totalorder %s13, 0
      %p123 = por %p121, %p122
      %p124 = scmp.ne.s32.totalorder %s113, %s116
      %p125 = scmp.eq.s32.totalorder %s18, 6
      %p126 = por %p124, %p125
      %p127 = scmp.ne.s32.totalorder %s116, %s117
      %p128 = scmp.eq.s32.totalorder %s18, 0
      %p129 = por %p127, %p128
      %p130 = scmp.ne.s32.totalorder %s116, %s117
      %p131 = scmp.eq.s32.totalorder %s19, 6
      %p132 = por %p130, %p131
      %p134 = scmp.ne.s32.totalorder %s117, %s133
      %p135 = scmp.eq.s32.totalorder %s19, 0
      %p136 = por %p134, %p135
      %s137 = ssub.s32 %s20, %s32
      %s138 = ssub.s32 %s21, %s28
      %s139 = sor.u32 %s137, %s138
      %p140 = scmp.eq.s32.totalorder %s139, 0
      %s142 = sadd.s32 %s141, 1
      %s143 = scalar_select %p140, %s141, %s142
      %p146 = pneg %p140
      %p147 = scmp.eq.s32.totalorder %s13, 6
      %p148 = por %p146, %p147
      %p149 = scmp.ne.s32.totalorder %s141, %s144
      %p150 = scmp.eq.s32.totalorder %s13, 0
      %p151 = por %p149, %p150
      %p152 = scmp.ne.s32.totalorder %s141, %s144
      %p153 = scmp.eq.s32.totalorder %s18, 6
      %p154 = por %p152, %p153
      %p155 = scmp.ne.s32.totalorder %s144, %s145
      %p156 = scmp.eq.s32.totalorder %s18, 0
      %p157 = por %p155, %p156
      %p158 = scmp.ne.s32.totalorder %s144, %s145
      %p159 = scmp.eq.s32.totalorder %s19, 6
      %p160 = por %p158, %p159
      %p162 = scmp.ne.s32.totalorder %s145, %s161
      %p163 = scmp.eq.s32.totalorder %s19, 0
      %p164 = por %p162, %p163
      %p165 = scmp.le.s32.totalorder 1, %s13
      %p166 = scmp.lt.s32.totalorder %s13, 8
      %p167 = pnand %p165, %p166
      %p168 = pneg %p167
      // Predicated region
      $region9: #{tpu_custom_call.1} parent=5 // pred_check
        _
      $region10: #{tpu_custom_call.1} parent=5 // pred_check_branch
        %170 = sbr.rel (%p167) target = $region12
      $region11: #{tpu_custom_call.1} parent=5 // pred_region
        %s171 = ssub.s32 %s13, 1
        // Predicated region
        $region13: #{tpu_custom_call.1} parent=11 // pred_check
          %p172 = pneg %p77
        $region14: #{tpu_custom_call.1} parent=11 // pred_check_branch
          %174 = sbr.rel (%p172) target = $region16
        $region15: #{tpu_custom_call.1} parent=11 // pred_region
          %p175 = scmp.lt.s32.totalorder %s23, 0
          %s176 = scalar_select %p175, %s23, 0
          %s177 = smul.addr %s176, 4
          %s178 = scalar_lea.vmem %s1, %s177
        $region16: #{tpu_custom_call.1} parent=11 // pred_fallthru
          _
        // Predicated region
        $region17: #{tpu_custom_call.1} parent=11 // pred_check
          %p179 = pneg %p103
        $region18: #{tpu_custom_call.1} parent=11 // pred_check_branch
          %181 = sbr.rel (%p179) target = $region20
        $region19: #{tpu_custom_call.1} parent=11 // pred_region
          %p182 = scmp.lt.s32.totalorder %s23, 0
          %s183 = scalar_select %p182, %s23, 0
          %s184 = scalar_lea.vmem %s2, %s183
        $region20: #{tpu_custom_call.1} parent=11 // pred_fallthru
          _
        // Predicated region
        $region21: #{tpu_custom_call.1} parent=11 // pred_check
          %p185 = pneg %p129
        $region22: #{tpu_custom_call.1} parent=11 // pred_check_branch
          %187 = sbr.rel (%p185) target = $region24
        $region23: #{tpu_custom_call.1} parent=11 // pred_region
          %p188 = scmp.lt.s32.totalorder %s23, 0
          %s189 = scalar_select %p188, %s23, 0
          %s190 = scalar_lea.vmem %s3, %s189
        $region24: #{tpu_custom_call.1} parent=11 // pred_fallthru
          _
      $region12: #{tpu_custom_call.1} parent=5 // pred_fallthru
        _
      %p191 = scmp.lt.s32.totalorder %s13, 7
      // Predicated region
      $region25: #{tpu_custom_call.1} parent=5 // pred_check
        %p192 = pneg %p191
      $region26: #{tpu_custom_call.1} parent=5 // pred_check_branch
        %194 = sbr.rel (%p192) target = $region28
      $region27: #{tpu_custom_call.1} parent=5 // pred_region
        // Predicated region
        $region29: #{tpu_custom_call.1} parent=27 // pred_check
          %p195 = pneg %p45
        $region30: #{tpu_custom_call.1} parent=27 // pred_check_branch
          %197 = sbr.rel (%p195) target = $region32
        $region31: #{tpu_custom_call.1} parent=27 // pred_region
          %s198 = smul.u32 448, %s20
          %p199 = scmp.lt.s32.totalorder %s198, 3135
          %s200 = scalar_select %p199, %s198, 3135
          %s201 = smul.addr %s200, 4
          %s202 = scalar_lea.vmem %s0, %s201
          %s203 = smul.u32 448, %s20
        $region32: #{tpu_custom_call.1} parent=27 // pred_fallthru
          _
      $region28: #{tpu_custom_call.1} parent=5 // pred_fallthru
        _
      %p204 = scmp.le.s32.totalorder 1, %s13
      %p205 = scmp.lt.s32.totalorder %s13, 8
      %p206 = pnand %p204, %p205
      %p207 = pneg %p206
      // Predicated region
      $region33: #{tpu_custom_call.1} parent=5 // pred_check
        _
      $region34: #{tpu_custom_call.1} parent=5 // pred_check_branch
        %209 = sbr.rel (%p206) target = $region36
      $region35: #{tpu_custom_call.1} parent=5 // pred_region
        %s210 = ssub.s32 %s13, 1
        %s211 = smul.u32 448, %s22
        %p212 = scmp.lt.s32.totalorder %s211, 3135
        %s213 = scalar_select %p212, %s211, 3135
        %s214 = smul.addr %s213, 4
        %s215 = scalar_lea.vmem %s0, %s214
        %p216 = pneg %p51
        %p217 = pneg %p48
        %p218 = scmp.lt.s32.totalorder %s23, 0
        %s219 = scalar_select %p218, %s23, 0
        %s220 = smul.addr %s219, 4
        %s221 = scalar_lea.vmem %s1, %s220
        %p222 = pneg %p77
        %p223 = pneg %p74
        %p224 = scmp.lt.s32.totalorder %s23, 0
        %s225 = scalar_select %p224, %s23, 0
        %s226 = scalar_lea.vmem %s2, %s225
        %p227 = pneg %p103
        %p228 = pneg %p100
        %p229 = scmp.lt.s32.totalorder %s23, 0
        %s230 = scalar_select %p229, %s23, 0
        %s231 = scalar_lea.vmem %s3, %s230
        %p232 = pneg %p129
        %p233 = pneg %p126
        %p234 = pneg %p157
        %p235 = pneg %p154
        %s236 = sand.u32 %s144, 1
        %s237 = scalar_lea.sflag [#allocation3], %s236
        %s238 = sand.u32 %s144, 1
        %s239 = smul.addr %s238, 1792
        %s240 = scalar_lea.vmem [#allocation2], %s239
        %s241 = smul.u32 448, %s22
        %p242 = scmp.lt.s32.totalorder %s241, 3135
        %s243 = scalar_select %p242, %s241, 3135
        %s244 = smul.addr %s243, 4
        %s245 = scalar_lea.vmem %s0, %s244
        %s246 = smul.u32 448, %s22
        %p247 = scmp.lt.s32.totalorder %s23, 0
        %s248 = scalar_select %p247, %s23, 0
        %s249 = smul.addr %s248, 4
        %s250 = scalar_lea.vmem %s1, %s249
        %p251 = scmp.lt.s32.totalorder %s23, 0
        %s252 = scalar_select %p251, %s23, 0
        %s253 = scalar_lea.vmem %s2, %s252
        %p254 = scmp.lt.s32.totalorder %s23, 0
        %s255 = scalar_select %p254, %s23, 0
        %s256 = scalar_lea.vmem %s3, %s255
        %s257 = smul.u32 448, %s22
        %v259 = vld [vmem:[%s253] sm:$0x1]
        %v260 = vld [vmem:[%s256] sm:$0x1]
        %v261 = vld [vmem:[%s245] sm:$0xf]
        %v262 = vld [vmem:[%s245 + $0x4] sm:$0xf]
        %v263 = vld [vmem:[%s245 + $0x8] sm:$0xf]
        %v264 = vld [vmem:[%s245 + $0xc] sm:$0xf]
        %v265 = vld [vmem:[%s245 + $0x10] sm:$0xf]
        %v266 = vld [vmem:[%s245 + $0x14] sm:$0xf]
        %v267 = vld [vmem:[%s245 + $0x18] sm:$0xf]
        %v268 = vld [vmem:[%s245 + $0x1c] sm:$0xf]
        %v269 = vld [vmem:[%s245 + $0x20] sm:$0xf]
        %v270 = vld [vmem:[%s245 + $0x24] sm:$0xf]
        %v271 = vld [vmem:[%s245 + $0x28] sm:$0xf]
        %v272 = vld [vmem:[%s245 + $0x2c] sm:$0xf]
        %v273 = vld [vmem:[%s245 + $0x30] sm:$0xf]
        %v274 = vld [vmem:[%s245 + $0x34] sm:$0xf]
        %v275 = vld [vmem:[%s245 + $0x38] sm:$0xf]
        %v276 = vld [vmem:[%s245 + $0x3c] sm:$0xf]
        %v277 = vld [vmem:[%s245 + $0x40] sm:$0xf]
        %v278 = vld [vmem:[%s245 + $0x44] sm:$0xf]
        %v279 = vld [vmem:[%s245 + $0x48] sm:$0xf]
        %v280 = vld [vmem:[%s245 + $0x4c] sm:$0xf]
        %v281 = vld [vmem:[%s245 + $0x50] sm:$0xf]
        %v282 = vld [vmem:[%s245 + $0x54] sm:$0xf]
        %v283 = vld [vmem:[%s245 + $0x58] sm:$0xf]
        %v284 = vld [vmem:[%s245 + $0x5c] sm:$0xf]
        %v285 = vld [vmem:[%s245 + $0x60] sm:$0xf]
        %v286 = vld [vmem:[%s245 + $0x64] sm:$0xf]
        %v287 = vld [vmem:[%s245 + $0x68] sm:$0xf]
        %v288 = vld [vmem:[%s245 + $0x6c] sm:$0xf]
        %v289 = vld [vmem:[%s245 + $0x70] sm:$0xf]
        %v290 = vld [vmem:[%s245 + $0x74] sm:$0xf]
        %v291 = vld [vmem:[%s245 + $0x78] sm:$0xf]
        %v292 = vld [vmem:[%s245 + $0x7c] sm:$0xf]
        %v293 = vld [vmem:[%s245 + $0x80] sm:$0xf]
        %v294 = vld [vmem:[%s245 + $0x84] sm:$0xf]
        %v295 = vld [vmem:[%s245 + $0x88] sm:$0xf]
        %v296 = vld [vmem:[%s245 + $0x8c] sm:$0xf]
        %v297 = vld [vmem:[%s245 + $0x90] sm:$0xf]
        %v298 = vld [vmem:[%s245 + $0x94] sm:$0xf]
        %v299 = vld [vmem:[%s245 + $0x98] sm:$0xf]
        %v300 = vld [vmem:[%s245 + $0x9c] sm:$0xf]
        %v301 = vld [vmem:[%s245 + $0xa0] sm:$0xf]
        %v302 = vld [vmem:[%s245 + $0xa4] sm:$0xf]
        %v303 = vld [vmem:[%s245 + $0xa8] sm:$0xf]
        %v304 = vld [vmem:[%s245 + $0xac] sm:$0xf]
        %v305 = vld [vmem:[%s245 + $0xb0] sm:$0xf]
        %v306 = vld [vmem:[%s245 + $0xb4] sm:$0xf]
        %v307 = vld [vmem:[%s245 + $0xb8] sm:$0xf]
        %v308 = vld [vmem:[%s245 + $0xbc] sm:$0xf]
        %v309 = vld [vmem:[%s245 + $0xc0] sm:$0xf]
        %v310 = vld [vmem:[%s245 + $0xc4] sm:$0xf]
        %v311 = vld [vmem:[%s245 + $0xc8] sm:$0xf]
        %v312 = vld [vmem:[%s245 + $0xcc] sm:$0xf]
        %v313 = vld [vmem:[%s245 + $0xd0] sm:$0xf]
        %v314 = vld [vmem:[%s245 + $0xd4] sm:$0xf]
        %v315 = vld [vmem:[%s245 + $0xd8] sm:$0xf]
        %v316 = vld [vmem:[%s245 + $0xdc] sm:$0xf]
        %v317 = vld [vmem:[%s245 + $0xe0] sm:$0xf]
        %v318 = vld [vmem:[%s245 + $0xe4] sm:$0xf]
        %v319 = vld [vmem:[%s245 + $0xe8] sm:$0xf]
        %v320 = vld [vmem:[%s245 + $0xec] sm:$0xf]
        %v321 = vld [vmem:[%s245 + $0xf0] sm:$0xf]
        %v322 = vld [vmem:[%s245 + $0xf4] sm:$0xf]
        %v323 = vld [vmem:[%s245 + $0xf8] sm:$0xf]
        %v324 = vld [vmem:[%s245 + $0xfc] sm:$0xf]
        %v325 = vld [vmem:[%s250] sm:$0xf]
        %v326 = vld [vmem:[%s250 + $0x4] sm:$0xf]
        %v327 = vld [vmem:[%s250 + $0x8] sm:$0xf]
        %v328 = vld [vmem:[%s250 + $0xc] sm:$0xf]
        %v393 = vunpack.c.l.b16 %v261
        %v394 = vunpack.c.l.b16 %v262
        %v395 = vunpack.c.l.b16 %v263
        %v396 = vunpack.c.l.b16 %v264
        %v397 = vunpack.c.l.b16 %v265
        %v398 = vunpack.c.l.b16 %v266
        %v399 = vunpack.c.l.b16 %v267
        %v400 = vunpack.c.l.b16 %v268
        %v401 = vunpack.c.l.b16 %v269
        %v402 = vunpack.c.l.b16 %v270
        %v403 = vunpack.c.l.b16 %v271
        %v404 = vunpack.c.l.b16 %v272
        %v405 = vunpack.c.l.b16 %v273
        %v406 = vunpack.c.l.b16 %v274
        %v407 = vunpack.c.l.b16 %v275
        %v408 = vunpack.c.l.b16 %v276
        %v409 = vunpack.c.l.b16 %v277
        %v410 = vunpack.c.l.b16 %v278
        %v411 = vunpack.c.l.b16 %v279
        %v412 = vunpack.c.l.b16 %v280
        %v413 = vunpack.c.l.b16 %v281
        %v414 = vunpack.c.l.b16 %v282
        %v415 = vunpack.c.l.b16 %v283
        %v416 = vunpack.c.l.b16 %v284
        %v417 = vunpack.c.l.b16 %v285
        %v418 = vunpack.c.l.b16 %v286
        %v419 = vunpack.c.l.b16 %v287
        %v420 = vunpack.c.l.b16 %v288
        %v421 = vunpack.c.l.b16 %v289
        %v422 = vunpack.c.l.b16 %v290
        %v423 = vunpack.c.l.b16 %v291
        %v424 = vunpack.c.l.b16 %v292
        %v425 = vunpack.c.l.b16 %v293
        %v426 = vunpack.c.l.b16 %v294
        %v427 = vunpack.c.l.b16 %v295
        %v428 = vunpack.c.l.b16 %v296
        %v429 = vunpack.c.l.b16 %v297
        %v430 = vunpack.c.l.b16 %v298
        %v431 = vunpack.c.l.b16 %v299
        %v432 = vunpack.c.l.b16 %v300
        %v433 = vunpack.c.l.b16 %v301
        %v434 = vunpack.c.l.b16 %v302
        %v435 = vunpack.c.l.b16 %v303
        %v436 = vunpack.c.l.b16 %v304
        %v437 = vunpack.c.l.b16 %v305
        %v438 = vunpack.c.l.b16 %v306
        %v439 = vunpack.c.l.b16 %v307
        %v440 = vunpack.c.l.b16 %v308
        %v441 = vunpack.c.l.b16 %v309
        %v442 = vunpack.c.l.b16 %v310
        %v443 = vunpack.c.l.b16 %v311
        %v444 = vunpack.c.l.b16 %v312
        %v445 = vunpack.c.l.b16 %v313
        %v446 = vunpack.c.l.b16 %v314
        %v447 = vunpack.c.l.b16 %v315
        %v448 = vunpack.c.l.b16 %v316
        %v449 = vunpack.c.l.b16 %v317
        %v450 = vunpack.c.l.b16 %v318
        %v451 = vunpack.c.l.b16 %v319
        %v452 = vunpack.c.l.b16 %v320
        %v453 = vunpack.c.l.b16 %v321
        %v454 = vunpack.c.l.b16 %v322
        %v455 = vunpack.c.l.b16 %v323
        %v456 = vunpack.c.l.b16 %v324
        %v457 = vpack.c.b16 %v394, %v393
        %v458 = vpack.c.b16 %v396, %v395
        %v459 = vpack.c.b16 %v398, %v397
        %v460 = vpack.c.b16 %v400, %v399
        %v461 = vpack.c.b16 %v402, %v401
        %v462 = vpack.c.b16 %v404, %v403
        %v463 = vpack.c.b16 %v406, %v405
        %v464 = vpack.c.b16 %v408, %v407
        %v465 = vpack.c.b16 %v410, %v409
        %v466 = vpack.c.b16 %v412, %v411
        %v467 = vpack.c.b16 %v414, %v413
        %v468 = vpack.c.b16 %v416, %v415
        %v469 = vpack.c.b16 %v418, %v417
        %v470 = vpack.c.b16 %v420, %v419
        %v471 = vpack.c.b16 %v422, %v421
        %v472 = vpack.c.b16 %v424, %v423
        %v473 = vpack.c.b16 %v426, %v425
        %v474 = vpack.c.b16 %v428, %v427
        %v475 = vpack.c.b16 %v430, %v429
        %v476 = vpack.c.b16 %v432, %v431
        %v477 = vpack.c.b16 %v434, %v433
        %v478 = vpack.c.b16 %v436, %v435
        %v479 = vpack.c.b16 %v438, %v437
        %v480 = vpack.c.b16 %v440, %v439
        %v481 = vpack.c.b16 %v442, %v441
        %v482 = vpack.c.b16 %v444, %v443
        %v483 = vpack.c.b16 %v446, %v445
        %v484 = vpack.c.b16 %v448, %v447
        %v485 = vpack.c.b16 %v450, %v449
        %v486 = vpack.c.b16 %v452, %v451
        %v487 = vpack.c.b16 %v454, %v453
        %v488 = vpack.c.b16 %v456, %v455
        %v493 = vunpack.c.l.b16 %v325
        %v494 = vunpack.c.l.b16 %v326
        %v495 = vunpack.c.l.b16 %v327
        %v496 = vunpack.c.l.b16 %v328
        %v497 = vpack.c.b16 %v494, %v493
        %v498 = vpack.c.b16 %v496, %v495
        %vm501 = vcmask 261120
        %v503 = vsel %vm501, %v457, 0
        %v506 = vsel %vm501, %v458, 0
        %v509 = vsel %vm501, %v459, 0
        %v512 = vsel %vm501, %v460, 0
        %v515 = vsel %vm501, %v461, 0
        %v518 = vsel %vm501, %v462, 0
        %v521 = vsel %vm501, %v463, 0
        %v524 = vsel %vm501, %v464, 0
        %v527 = vsel %vm501, %v465, 0
        %v530 = vsel %vm501, %v466, 0
        %v533 = vsel %vm501, %v467, 0
        %v536 = vsel %vm501, %v468, 0
        %v539 = vsel %vm501, %v469, 0
        %v542 = vsel %vm501, %v470, 0
        %v545 = vsel %vm501, %v471, 0
        %v548 = vsel %vm501, %v472, 0
        %v551 = vsel %vm501, %v473, 0
        %v554 = vsel %vm501, %v474, 0
        %v557 = vsel %vm501, %v475, 0
        %v560 = vsel %vm501, %v476, 0
        %v563 = vsel %vm501, %v477, 0
        %v566 = vsel %vm501, %v478, 0
        %v569 = vsel %vm501, %v479, 0
        %v572 = vsel %vm501, %v480, 0
        %v575 = vsel %vm501, %v481, 0
        %v578 = vsel %vm501, %v482, 0
        %v581 = vsel %vm501, %v483, 0
        %v584 = vsel %vm501, %v484, 0
        %v587 = vsel %vm501, %v485, 0
        %v590 = vsel %vm501, %v486, 0
        %v593 = vsel %vm501, %v487, 0
        %v596 = vsel %vm501, %v488, 0
        %598 = vmatpush.bf16.msra.mxu0 0
        %599 = vmatpush.bf16.msra.mxu0 0
        %600 = vmatpush.bf16.msra.mxu0 0
        %601 = vmatpush.bf16.msra.mxu0 0
        %602 = vmatpush.bf16.msra.mxu0 0
        %603 = vmatpush.bf16.msra.mxu0 0
        %604 = vmatpush.bf16.msra.mxu0 %v498
        %605 = vmatpush.bf16.msra.mxu0 %v497
        %606 = vmatmul.bf16.gmra.mxu0 %v503
        %v607 = vpop.f32.mrf.mxu0
        %v608 = vadd.f32 0.0, %v607
        %v609 = vpop.f32.mrf.mxu0
        %v610 = vadd.f32 0.0, %v609
        %611 = vmatmul.bf16.gmra.mxu0 %v506
        %v612 = vpop.f32.mrf.mxu0
        %v613 = vadd.f32 0.0, %v612
        %v614 = vpop.f32.mrf.mxu0
        %v615 = vadd.f32 0.0, %v614
        %616 = vmatmul.bf16.gmra.mxu0 %v509
        %v617 = vpop.f32.mrf.mxu0
        %v618 = vadd.f32 0.0, %v617
        %v619 = vpop.f32.mrf.mxu0
        %v620 = vadd.f32 0.0, %v619
        %621 = vmatmul.bf16.gmra.mxu0 %v512
        %v622 = vpop.f32.mrf.mxu0
        %v623 = vadd.f32 0.0, %v622
        %v624 = vpop.f32.mrf.mxu0
        %v625 = vadd.f32 0.0, %v624
        %626 = vmatmul.bf16.gmra.mxu0 %v515
        %v627 = vpop.f32.mrf.mxu0
        %v628 = vadd.f32 0.0, %v627
        %v629 = vpop.f32.mrf.mxu0
        %v630 = vadd.f32 0.0, %v629
        %631 = vmatmul.bf16.gmra.mxu0 %v518
        %v632 = vpop.f32.mrf.mxu0
        %v633 = vadd.f32 0.0, %v632
        %v634 = vpop.f32.mrf.mxu0
        %v635 = vadd.f32 0.0, %v634
        %636 = vmatmul.bf16.gmra.mxu0 %v521
        %v637 = vpop.f32.mrf.mxu0
        %v638 = vadd.f32 0.0, %v637
        %v639 = vpop.f32.mrf.mxu0
        %v640 = vadd.f32 0.0, %v639
        %641 = vmatmul.bf16.gmra.mxu0 %v524
        %v642 = vpop.f32.mrf.mxu0
        %v643 = vadd.f32 0.0, %v642
        %v644 = vpop.f32.mrf.mxu0
        %v645 = vadd.f32 0.0, %v644
        %646 = vmatmul.bf16.gmra.mxu0 %v527
        %v647 = vpop.f32.mrf.mxu0
        %v648 = vadd.f32 0.0, %v647
        %v649 = vpop.f32.mrf.mxu0
        %v650 = vadd.f32 0.0, %v649
        %651 = vmatmul.bf16.gmra.mxu0 %v530
        %v652 = vpop.f32.mrf.mxu0
        %v653 = vadd.f32 0.0, %v652
        %v654 = vpop.f32.mrf.mxu0
        %v655 = vadd.f32 0.0, %v654
        %656 = vmatmul.bf16.gmra.mxu0 %v533
        %v657 = vpop.f32.mrf.mxu0
        %v658 = vadd.f32 0.0, %v657
        %v659 = vpop.f32.mrf.mxu0
        %v660 = vadd.f32 0.0, %v659
        %661 = vmatmul.bf16.gmra.mxu0 %v536
        %v662 = vpop.f32.mrf.mxu0
        %v663 = vadd.f32 0.0, %v662
        %v664 = vpop.f32.mrf.mxu0
        %v665 = vadd.f32 0.0, %v664
        %666 = vmatmul.bf16.gmra.mxu0 %v539
        %v667 = vpop.f32.mrf.mxu0
        %v668 = vadd.f32 0.0, %v667
        %v669 = vpop.f32.mrf.mxu0
        %v670 = vadd.f32 0.0, %v669
        %671 = vmatmul.bf16.gmra.mxu0 %v542
        %v672 = vpop.f32.mrf.mxu0
        %v673 = vadd.f32 0.0, %v672
        %v674 = vpop.f32.mrf.mxu0
        %v675 = vadd.f32 0.0, %v674
        %676 = vmatmul.bf16.gmra.mxu0 %v545
        %v677 = vpop.f32.mrf.mxu0
        %v678 = vadd.f32 0.0, %v677
        %v679 = vpop.f32.mrf.mxu0
        %v680 = vadd.f32 0.0, %v679
        %681 = vmatmul.bf16.gmra.mxu0 %v548
        %v682 = vpop.f32.mrf.mxu0
        %v683 = vadd.f32 0.0, %v682
        %v684 = vpop.f32.mrf.mxu0
        %v685 = vadd.f32 0.0, %v684
        %686 = vmatmul.bf16.gmra.mxu0 %v551
        %v687 = vpop.f32.mrf.mxu0
        %v688 = vadd.f32 0.0, %v687
        %v689 = vpop.f32.mrf.mxu0
        %v690 = vadd.f32 0.0, %v689
        %691 = vmatmul.bf16.gmra.mxu0 %v554
        %v692 = vpop.f32.mrf.mxu0
        %v693 = vadd.f32 0.0, %v692
        %v694 = vpop.f32.mrf.mxu0
        %v695 = vadd.f32 0.0, %v694
        %696 = vmatmul.bf16.gmra.mxu0 %v557
        %v697 = vpop.f32.mrf.mxu0
        %v698 = vadd.f32 0.0, %v697
        %v699 = vpop.f32.mrf.mxu0
        %v700 = vadd.f32 0.0, %v699
        %701 = vmatmul.bf16.gmra.mxu0 %v560
        %v702 = vpop.f32.mrf.mxu0
        %v703 = vadd.f32 0.0, %v702
        %v704 = vpop.f32.mrf.mxu0
        %v705 = vadd.f32 0.0, %v704
        %706 = vmatmul.bf16.gmra.mxu0 %v563
        %v707 = vpop.f32.mrf.mxu0
        %v708 = vadd.f32 0.0, %v707
        %v709 = vpop.f32.mrf.mxu0
        %v710 = vadd.f32 0.0, %v709
        %711 = vmatmul.bf16.gmra.mxu0 %v566
        %v712 = vpop.f32.mrf.mxu0
        %v713 = vadd.f32 0.0, %v712
        %v714 = vpop.f32.mrf.mxu0
        %v715 = vadd.f32 0.0, %v714
        %716 = vmatmul.bf16.gmra.mxu0 %v569
        %v717 = vpop.f32.mrf.mxu0
        %v718 = vadd.f32 0.0, %v717
        %v719 = vpop.f32.mrf.mxu0
        %v720 = vadd.f32 0.0, %v719
        %721 = vmatmul.bf16.gmra.mxu0 %v572
        %v722 = vpop.f32.mrf.mxu0
        %v723 = vadd.f32 0.0, %v722
        %v724 = vpop.f32.mrf.mxu0
        %v725 = vadd.f32 0.0, %v724
        %726 = vmatmul.bf16.gmra.mxu0 %v575
        %v727 = vpop.f32.mrf.mxu0
        %v728 = vadd.f32 0.0, %v727
        %v729 = vpop.f32.mrf.mxu0
        %v730 = vadd.f32 0.0, %v729
        %731 = vmatmul.bf16.gmra.mxu0 %v578
        %v732 = vpop.f32.mrf.mxu0
        %v733 = vadd.f32 0.0, %v732
        %v734 = vpop.f32.mrf.mxu0
        %v735 = vadd.f32 0.0, %v734
        %736 = vmatmul.bf16.gmra.mxu0 %v581
        %v737 = vpop.f32.mrf.mxu0
        %v738 = vadd.f32 0.0, %v737
        %v739 = vpop.f32.mrf.mxu0
        %v740 = vadd.f32 0.0, %v739
        %741 = vmatmul.bf16.gmra.mxu0 %v584
        %v742 = vpop.f32.mrf.mxu0
        %v743 = vadd.f32 0.0, %v742
        %v744 = vpop.f32.mrf.mxu0
        %v745 = vadd.f32 0.0, %v744
        %746 = vmatmul.bf16.gmra.mxu0 %v587
        %v747 = vpop.f32.mrf.mxu0
        %v748 = vadd.f32 0.0, %v747
        %v749 = vpop.f32.mrf.mxu0
        %v750 = vadd.f32 0.0, %v749
        %751 = vmatmul.bf16.gmra.mxu0 %v590
        %v752 = vpop.f32.mrf.mxu0
        %v753 = vadd.f32 0.0, %v752
        %v754 = vpop.f32.mrf.mxu0
        %v755 = vadd.f32 0.0, %v754
        %756 = vmatmul.bf16.gmra.mxu0 %v593
        %v757 = vpop.f32.mrf.mxu0
        %v758 = vadd.f32 0.0, %v757
        %v759 = vpop.f32.mrf.mxu0
        %v760 = vadd.f32 0.0, %v759
        %761 = vmatmul.bf16.gmra.mxu0 %v596
        %v762 = vpop.f32.mrf.mxu0
        %v763 = vadd.f32 0.0, %v762
        %v764 = vpop.f32.mrf.mxu0
        %v765 = vadd.f32 0.0, %v764
        %766 = vdwg.mxu0
        %v768 = vperm.slane %v259, 0
        %v770 = vmul.f32 %v608, %v768
        %v771 = vmul.f32 %v610, %v768
        %v772 = vmul.f32 %v613, %v768
        %v773 = vmul.f32 %v615, %v768
        %v774 = vmul.f32 %v618, %v768
        %v775 = vmul.f32 %v620, %v768
        %v776 = vmul.f32 %v623, %v768
        %v777 = vmul.f32 %v625, %v768
        %v778 = vmul.f32 %v628, %v768
        %v779 = vmul.f32 %v630, %v768
        %v780 = vmul.f32 %v633, %v768
        %v781 = vmul.f32 %v635, %v768
        %v782 = vmul.f32 %v638, %v768
        %v783 = vmul.f32 %v640, %v768
        %v784 = vmul.f32 %v643, %v768
        %v785 = vmul.f32 %v645, %v768
        %v786 = vmul.f32 %v648, %v768
        %v787 = vmul.f32 %v650, %v768
        %v788 = vmul.f32 %v653, %v768
        %v789 = vmul.f32 %v655, %v768
        %v790 = vmul.f32 %v658, %v768
        %v791 = vmul.f32 %v660, %v768
        %v792 = vmul.f32 %v663, %v768
        %v793 = vmul.f32 %v665, %v768
        %v794 = vmul.f32 %v668, %v768
        %v795 = vmul.f32 %v670, %v768
        %v796 = vmul.f32 %v673, %v768
        %v797 = vmul.f32 %v675, %v768
        %v798 = vmul.f32 %v678, %v768
        %v799 = vmul.f32 %v680, %v768
        %v800 = vmul.f32 %v683, %v768
        %v801 = vmul.f32 %v685, %v768
        %v802 = vmul.f32 %v688, %v768
        %v803 = vmul.f32 %v690, %v768
        %v804 = vmul.f32 %v693, %v768
        %v805 = vmul.f32 %v695, %v768
        %v806 = vmul.f32 %v698, %v768
        %v807 = vmul.f32 %v700, %v768
        %v808 = vmul.f32 %v703, %v768
        %v809 = vmul.f32 %v705, %v768
        %v810 = vmul.f32 %v708, %v768
        %v811 = vmul.f32 %v710, %v768
        %v812 = vmul.f32 %v713, %v768
        %v813 = vmul.f32 %v715, %v768
        %v814 = vmul.f32 %v718, %v768
        %v815 = vmul.f32 %v720, %v768
        %v816 = vmul.f32 %v723, %v768
        %v817 = vmul.f32 %v725, %v768
        %v818 = vmul.f32 %v728, %v768
        %v819 = vmul.f32 %v730, %v768
        %v820 = vmul.f32 %v733, %v768
        %v821 = vmul.f32 %v735, %v768
        %v822 = vmul.f32 %v738, %v768
        %v823 = vmul.f32 %v740, %v768
        %v824 = vmul.f32 %v743, %v768
        %v825 = vmul.f32 %v745, %v768
        %v826 = vmul.f32 %v748, %v768
        %v827 = vmul.f32 %v750, %v768
        %v828 = vmul.f32 %v753, %v768
        %v829 = vmul.f32 %v755, %v768
        %v830 = vmul.f32 %v758, %v768
        %v831 = vmul.f32 %v760, %v768
        %v832 = vmul.f32 %v763, %v768
        %v833 = vmul.f32 %v765, %v768
        %v835 = vperm.slane %v260, 0
        %v837 = vadd.f32 %v770, %v835
        %v838 = vadd.f32 %v771, %v835
        %v839 = vadd.f32 %v772, %v835
        %v840 = vadd.f32 %v773, %v835
        %v841 = vadd.f32 %v774, %v835
        %v842 = vadd.f32 %v775, %v835
        %v843 = vadd.f32 %v776, %v835
        %v844 = vadd.f32 %v777, %v835
        %v845 = vadd.f32 %v778, %v835
        %v846 = vadd.f32 %v779, %v835
        %v847 = vadd.f32 %v780, %v835
        %v848 = vadd.f32 %v781, %v835
        %v849 = vadd.f32 %v782, %v835
        %v850 = vadd.f32 %v783, %v835
        %v851 = vadd.f32 %v784, %v835
        %v852 = vadd.f32 %v785, %v835
        %v853 = vadd.f32 %v786, %v835
        %v854 = vadd.f32 %v787, %v835
        %v855 = vadd.f32 %v788, %v835
        %v856 = vadd.f32 %v789, %v835
        %v857 = vadd.f32 %v790, %v835
        %v858 = vadd.f32 %v791, %v835
        %v859 = vadd.f32 %v792, %v835
        %v860 = vadd.f32 %v793, %v835
        %v861 = vadd.f32 %v794, %v835
        %v862 = vadd.f32 %v795, %v835
        %v863 = vadd.f32 %v796, %v835
        %v864 = vadd.f32 %v797, %v835
        %v865 = vadd.f32 %v798, %v835
        %v866 = vadd.f32 %v799, %v835
        %v867 = vadd.f32 %v800, %v835
        %v868 = vadd.f32 %v801, %v835
        %v869 = vadd.f32 %v802, %v835
        %v870 = vadd.f32 %v803, %v835
        %v871 = vadd.f32 %v804, %v835
        %v872 = vadd.f32 %v805, %v835
        %v873 = vadd.f32 %v806, %v835
        %v874 = vadd.f32 %v807, %v835
        %v875 = vadd.f32 %v808, %v835
        %v876 = vadd.f32 %v809, %v835
        %v877 = vadd.f32 %v810, %v835
        %v878 = vadd.f32 %v811, %v835
        %v879 = vadd.f32 %v812, %v835
        %v880 = vadd.f32 %v813, %v835
        %v881 = vadd.f32 %v814, %v835
        %v882 = vadd.f32 %v815, %v835
        %v883 = vadd.f32 %v816, %v835
        %v884 = vadd.f32 %v817, %v835
        %v885 = vadd.f32 %v818, %v835
        %v886 = vadd.f32 %v819, %v835
        %v887 = vadd.f32 %v820, %v835
        %v888 = vadd.f32 %v821, %v835
        %v889 = vadd.f32 %v822, %v835
        %v890 = vadd.f32 %v823, %v835
        %v891 = vadd.f32 %v824, %v835
        %v892 = vadd.f32 %v825, %v835
        %v893 = vadd.f32 %v826, %v835
        %v894 = vadd.f32 %v827, %v835
        %v895 = vadd.f32 %v828, %v835
        %v896 = vadd.f32 %v829, %v835
        %v897 = vadd.f32 %v830, %v835
        %v898 = vadd.f32 %v831, %v835
        %v899 = vadd.f32 %v832, %v835
        %v900 = vadd.f32 %v833, %v835
        %v901 = vmax.f32 %v837, 0.0
        %v902 = vmax.f32 %v838, 0.0
        %v903 = vmax.f32 %v839, 0.0
        %v904 = vmax.f32 %v840, 0.0
        %v905 = vmax.f32 %v841, 0.0
        %v906 = vmax.f32 %v842, 0.0
        %v907 = vmax.f32 %v843, 0.0
        %v908 = vmax.f32 %v844, 0.0
        %v909 = vmax.f32 %v845, 0.0
        %v910 = vmax.f32 %v846, 0.0
        %v911 = vmax.f32 %v847, 0.0
        %v912 = vmax.f32 %v848, 0.0
        %v913 = vmax.f32 %v849, 0.0
        %v914 = vmax.f32 %v850, 0.0
        %v915 = vmax.f32 %v851, 0.0
        %v916 = vmax.f32 %v852, 0.0
        %v917 = vmax.f32 %v853, 0.0
        %v918 = vmax.f32 %v854, 0.0
        %v919 = vmax.f32 %v855, 0.0
        %v920 = vmax.f32 %v856, 0.0
        %v921 = vmax.f32 %v857, 0.0
        %v922 = vmax.f32 %v858, 0.0
        %v923 = vmax.f32 %v859, 0.0
        %v924 = vmax.f32 %v860, 0.0
        %v925 = vmax.f32 %v861, 0.0
        %v926 = vmax.f32 %v862, 0.0
        %v927 = vmax.f32 %v863, 0.0
        %v928 = vmax.f32 %v864, 0.0
        %v929 = vmax.f32 %v865, 0.0
        %v930 = vmax.f32 %v866, 0.0
        %v931 = vmax.f32 %v867, 0.0
        %v932 = vmax.f32 %v868, 0.0
        %v933 = vmax.f32 %v869, 0.0
        %v934 = vmax.f32 %v870, 0.0
        %v935 = vmax.f32 %v871, 0.0
        %v936 = vmax.f32 %v872, 0.0
        %v937 = vmax.f32 %v873, 0.0
        %v938 = vmax.f32 %v874, 0.0
        %v939 = vmax.f32 %v875, 0.0
        %v940 = vmax.f32 %v876, 0.0
        %v941 = vmax.f32 %v877, 0.0
        %v942 = vmax.f32 %v878, 0.0
        %v943 = vmax.f32 %v879, 0.0
        %v944 = vmax.f32 %v880, 0.0
        %v945 = vmax.f32 %v881, 0.0
        %v946 = vmax.f32 %v882, 0.0
        %v947 = vmax.f32 %v883, 0.0
        %v948 = vmax.f32 %v884, 0.0
        %v949 = vmax.f32 %v885, 0.0
        %v950 = vmax.f32 %v886, 0.0
        %v951 = vmax.f32 %v887, 0.0
        %v952 = vmax.f32 %v888, 0.0
        %v953 = vmax.f32 %v889, 0.0
        %v954 = vmax.f32 %v890, 0.0
        %v955 = vmax.f32 %v891, 0.0
        %v956 = vmax.f32 %v892, 0.0
        %v957 = vmax.f32 %v893, 0.0
        %v958 = vmax.f32 %v894, 0.0
        %v959 = vmax.f32 %v895, 0.0
        %v960 = vmax.f32 %v896, 0.0
        %v961 = vmax.f32 %v897, 0.0
        %v962 = vmax.f32 %v898, 0.0
        %v963 = vmax.f32 %v899, 0.0
        %v964 = vmax.f32 %v900, 0.0
        %v965 = vpack.c.bf16 %v901, %v901
        %v966 = vpack.c.bf16 %v902, %v902
        %v967 = vpack.c.bf16 %v903, %v903
        %v968 = vpack.c.bf16 %v904, %v904
        %v969 = vpack.c.bf16 %v905, %v905
        %v970 = vpack.c.bf16 %v906, %v906
        %v971 = vpack.c.bf16 %v907, %v907
        %v972 = vpack.c.bf16 %v908, %v908
        %v973 = vpack.c.bf16 %v909, %v909
        %v974 = vpack.c.bf16 %v910, %v910
        %v975 = vpack.c.bf16 %v911, %v911
        %v976 = vpack.c.bf16 %v912, %v912
        %v977 = vpack.c.bf16 %v913, %v913
        %v978 = vpack.c.bf16 %v914, %v914
        %v979 = vpack.c.bf16 %v915, %v915
        %v980 = vpack.c.bf16 %v916, %v916
        %v981 = vpack.c.bf16 %v917, %v917
        %v982 = vpack.c.bf16 %v918, %v918
        %v983 = vpack.c.bf16 %v919, %v919
        %v984 = vpack.c.bf16 %v920, %v920
        %v985 = vpack.c.bf16 %v921, %v921
        %v986 = vpack.c.bf16 %v922, %v922
        %v987 = vpack.c.bf16 %v923, %v923
        %v988 = vpack.c.bf16 %v924, %v924
        %v989 = vpack.c.bf16 %v925, %v925
        %v990 = vpack.c.bf16 %v926, %v926
        %v991 = vpack.c.bf16 %v927, %v927
        %v992 = vpack.c.bf16 %v928, %v928
        %v993 = vpack.c.bf16 %v929, %v929
        %v994 = vpack.c.bf16 %v930, %v930
        %v995 = vpack.c.bf16 %v931, %v931
        %v996 = vpack.c.bf16 %v932, %v932
        %v997 = vpack.c.bf16 %v933, %v933
        %v998 = vpack.c.bf16 %v934, %v934
        %v999 = vpack.c.bf16 %v935, %v935
        %v1000 = vpack.c.bf16 %v936, %v936
        %v1001 = vpack.c.bf16 %v937, %v937
        %v1002 = vpack.c.bf16 %v938, %v938
        %v1003 = vpack.c.bf16 %v939, %v939
        %v1004 = vpack.c.bf16 %v940, %v940
        %v1005 = vpack.c.bf16 %v941, %v941
        %v1006 = vpack.c.bf16 %v942, %v942
        %v1007 = vpack.c.bf16 %v943, %v943
        %v1008 = vpack.c.bf16 %v944, %v944
        %v1009 = vpack.c.bf16 %v945, %v945
        %v1010 = vpack.c.bf16 %v946, %v946
        %v1011 = vpack.c.bf16 %v947, %v947
        %v1012 = vpack.c.bf16 %v948, %v948
        %v1013 = vpack.c.bf16 %v949, %v949
        %v1014 = vpack.c.bf16 %v950, %v950
        %v1015 = vpack.c.bf16 %v951, %v951
        %v1016 = vpack.c.bf16 %v952, %v952
        %v1017 = vpack.c.bf16 %v953, %v953
        %v1018 = vpack.c.bf16 %v954, %v954
        %v1019 = vpack.c.bf16 %v955, %v955
        %v1020 = vpack.c.bf16 %v956, %v956
        %v1021 = vpack.c.bf16 %v957, %v957
        %v1022 = vpack.c.bf16 %v958, %v958
        %v1023 = vpack.c.bf16 %v959, %v959
        %v1024 = vpack.c.bf16 %v960, %v960
        %v1025 = vpack.c.bf16 %v961, %v961
        %v1026 = vpack.c.bf16 %v962, %v962
        %v1027 = vpack.c.bf16 %v963, %v963
        %v1028 = vpack.c.bf16 %v964, %v964
        %1029 = vst [vmem:[%s240] sm:$0xf] %v965
        %1030 = vst [vmem:[%s240 + $0x4] sm:$0xf] %v966
        %1031 = vst [vmem:[%s240 + $0x8] sm:$0xf] %v967
        %1032 = vst [vmem:[%s240 + $0xc] sm:$0xf] %v968
        %1033 = vst [vmem:[%s240 + $0x10] sm:$0xf] %v969
        %1034 = vst [vmem:[%s240 + $0x14] sm:$0xf] %v970
        %1035 = vst [vmem:[%s240 + $0x18] sm:$0xf] %v971
        %1036 = vst [vmem:[%s240 + $0x1c] sm:$0xf] %v972
        %1037 = vst [vmem:[%s240 + $0x20] sm:$0xf] %v973
        %1038 = vst [vmem:[%s240 + $0x24] sm:$0xf] %v974
        %1039 = vst [vmem:[%s240 + $0x28] sm:$0xf] %v975
        %1040 = vst [vmem:[%s240 + $0x2c] sm:$0xf] %v976
        %1041 = vst [vmem:[%s240 + $0x30] sm:$0xf] %v977
        %1042 = vst [vmem:[%s240 + $0x34] sm:$0xf] %v978
        %1043 = vst [vmem:[%s240 + $0x38] sm:$0xf] %v979
        %1044 = vst [vmem:[%s240 + $0x3c] sm:$0xf] %v980
        %1045 = vst [vmem:[%s240 + $0x40] sm:$0xf] %v981
        %1046 = vst [vmem:[%s240 + $0x44] sm:$0xf] %v982
        %1047 = vst [vmem:[%s240 + $0x48] sm:$0xf] %v983
        %1048 = vst [vmem:[%s240 + $0x4c] sm:$0xf] %v984
        %1049 = vst [vmem:[%s240 + $0x50] sm:$0xf] %v985
        %1050 = vst [vmem:[%s240 + $0x54] sm:$0xf] %v986
        %1051 = vst [vmem:[%s240 + $0x58] sm:$0xf] %v987
        %1052 = vst [vmem:[%s240 + $0x5c] sm:$0xf] %v988
        %1053 = vst [vmem:[%s240 + $0x60] sm:$0xf] %v989
        %1054 = vst [vmem:[%s240 + $0x64] sm:$0xf] %v990
        %1055 = vst [vmem:[%s240 + $0x68] sm:$0xf] %v991
        %1056 = vst [vmem:[%s240 + $0x6c] sm:$0xf] %v992
        %1057 = vst [vmem:[%s240 + $0x70] sm:$0xf] %v993
        %1058 = vst [vmem:[%s240 + $0x74] sm:$0xf] %v994
        %1059 = vst [vmem:[%s240 + $0x78] sm:$0xf] %v995
        %1060 = vst [vmem:[%s240 + $0x7c] sm:$0xf] %v996
        %1061 = vst [vmem:[%s240 + $0x80] sm:$0xf] %v997
        %1062 = vst [vmem:[%s240 + $0x84] sm:$0xf] %v998
        %1063 = vst [vmem:[%s240 + $0x88] sm:$0xf] %v999
        %1064 = vst [vmem:[%s240 + $0x8c] sm:$0xf] %v1000
        %1065 = vst [vmem:[%s240 + $0x90] sm:$0xf] %v1001
        %1066 = vst [vmem:[%s240 + $0x94] sm:$0xf] %v1002
        %1067 = vst [vmem:[%s240 + $0x98] sm:$0xf] %v1003
        %1068 = vst [vmem:[%s240 + $0x9c] sm:$0xf] %v1004
        %1069 = vst [vmem:[%s240 + $0xa0] sm:$0xf] %v1005
        %1070 = vst [vmem:[%s240 + $0xa4] sm:$0xf] %v1006
        %1071 = vst [vmem:[%s240 + $0xa8] sm:$0xf] %v1007
        %1072 = vst [vmem:[%s240 + $0xac] sm:$0xf] %v1008
        %1073 = vst [vmem:[%s240 + $0xb0] sm:$0xf] %v1009
        %1074 = vst [vmem:[%s240 + $0xb4] sm:$0xf] %v1010
        %1075 = vst [vmem:[%s240 + $0xb8] sm:$0xf] %v1011
        %1076 = vst [vmem:[%s240 + $0xbc] sm:$0xf] %v1012
        %1077 = vst [vmem:[%s240 + $0xc0] sm:$0xf] %v1013
        %1078 = vst [vmem:[%s240 + $0xc4] sm:$0xf] %v1014
        %1079 = vst [vmem:[%s240 + $0xc8] sm:$0xf] %v1015
        %1080 = vst [vmem:[%s240 + $0xcc] sm:$0xf] %v1016
        %1081 = vst [vmem:[%s240 + $0xd0] sm:$0xf] %v1017
        %1082 = vst [vmem:[%s240 + $0xd4] sm:$0xf] %v1018
        %1083 = vst [vmem:[%s240 + $0xd8] sm:$0xf] %v1019
        %1084 = vst [vmem:[%s240 + $0xdc] sm:$0xf] %v1020
        %1085 = vst [vmem:[%s240 + $0xe0] sm:$0xf] %v1021
        %1086 = vst [vmem:[%s240 + $0xe4] sm:$0xf] %v1022
        %1087 = vst [vmem:[%s240 + $0xe8] sm:$0xf] %v1023
        %1088 = vst [vmem:[%s240 + $0xec] sm:$0xf] %v1024
        %1089 = vst [vmem:[%s240 + $0xf0] sm:$0xf] %v1025
        %1090 = vst [vmem:[%s240 + $0xf4] sm:$0xf] %v1026
        %1091 = vst [vmem:[%s240 + $0xf8] sm:$0xf] %v1027
        %1092 = vst [vmem:[%s240 + $0xfc] sm:$0xf] %v1028
        %v1093 = vld [vmem:[%s245 + $0x100] sm:$0xf]
        %v1094 = vld [vmem:[%s245 + $0x104] sm:$0xf]
        %v1095 = vld [vmem:[%s245 + $0x108] sm:$0xf]
        %v1096 = vld [vmem:[%s245 + $0x10c] sm:$0xf]
        %v1097 = vld [vmem:[%s245 + $0x110] sm:$0xf]
        %v1098 = vld [vmem:[%s245 + $0x114] sm:$0xf]
        %v1099 = vld [vmem:[%s245 + $0x118] sm:$0xf]
        %v1100 = vld [vmem:[%s245 + $0x11c] sm:$0xf]
        %v1101 = vld [vmem:[%s245 + $0x120] sm:$0xf]
        %v1102 = vld [vmem:[%s245 + $0x124] sm:$0xf]
        %v1103 = vld [vmem:[%s245 + $0x128] sm:$0xf]
        %v1104 = vld [vmem:[%s245 + $0x12c] sm:$0xf]
        %v1105 = vld [vmem:[%s245 + $0x130] sm:$0xf]
        %v1106 = vld [vmem:[%s245 + $0x134] sm:$0xf]
        %v1107 = vld [vmem:[%s245 + $0x138] sm:$0xf]
        %v1108 = vld [vmem:[%s245 + $0x13c] sm:$0xf]
        %v1109 = vld [vmem:[%s245 + $0x140] sm:$0xf]
        %v1110 = vld [vmem:[%s245 + $0x144] sm:$0xf]
        %v1111 = vld [vmem:[%s245 + $0x148] sm:$0xf]
        %v1112 = vld [vmem:[%s245 + $0x14c] sm:$0xf]
        %v1113 = vld [vmem:[%s245 + $0x150] sm:$0xf]
        %v1114 = vld [vmem:[%s245 + $0x154] sm:$0xf]
        %v1115 = vld [vmem:[%s245 + $0x158] sm:$0xf]
        %v1116 = vld [vmem:[%s245 + $0x15c] sm:$0xf]
        %v1117 = vld [vmem:[%s245 + $0x160] sm:$0xf]
        %v1118 = vld [vmem:[%s245 + $0x164] sm:$0xf]
        %v1119 = vld [vmem:[%s245 + $0x168] sm:$0xf]
        %v1120 = vld [vmem:[%s245 + $0x16c] sm:$0xf]
        %v1121 = vld [vmem:[%s245 + $0x170] sm:$0xf]
        %v1122 = vld [vmem:[%s245 + $0x174] sm:$0xf]
        %v1123 = vld [vmem:[%s245 + $0x178] sm:$0xf]
        %v1124 = vld [vmem:[%s245 + $0x17c] sm:$0xf]
        %v1125 = vld [vmem:[%s245 + $0x180] sm:$0xf]
        %v1126 = vld [vmem:[%s245 + $0x184] sm:$0xf]
        %v1127 = vld [vmem:[%s245 + $0x188] sm:$0xf]
        %v1128 = vld [vmem:[%s245 + $0x18c] sm:$0xf]
        %v1129 = vld [vmem:[%s245 + $0x190] sm:$0xf]
        %v1130 = vld [vmem:[%s245 + $0x194] sm:$0xf]
        %v1131 = vld [vmem:[%s245 + $0x198] sm:$0xf]
        %v1132 = vld [vmem:[%s245 + $0x19c] sm:$0xf]
        %v1133 = vld [vmem:[%s245 + $0x1a0] sm:$0xf]
        %v1134 = vld [vmem:[%s245 + $0x1a4] sm:$0xf]
        %v1135 = vld [vmem:[%s245 + $0x1a8] sm:$0xf]
        %v1136 = vld [vmem:[%s245 + $0x1ac] sm:$0xf]
        %v1137 = vld [vmem:[%s245 + $0x1b0] sm:$0xf]
        %v1138 = vld [vmem:[%s245 + $0x1b4] sm:$0xf]
        %v1139 = vld [vmem:[%s245 + $0x1b8] sm:$0xf]
        %v1140 = vld [vmem:[%s245 + $0x1bc] sm:$0xf]
        %v1141 = vld [vmem:[%s245 + $0x1c0] sm:$0xf]
        %v1142 = vld [vmem:[%s245 + $0x1c4] sm:$0xf]
        %v1143 = vld [vmem:[%s245 + $0x1c8] sm:$0xf]
        %v1144 = vld [vmem:[%s245 + $0x1cc] sm:$0xf]
        %v1145 = vld [vmem:[%s245 + $0x1d0] sm:$0xf]
        %v1146 = vld [vmem:[%s245 + $0x1d4] sm:$0xf]
        %v1147 = vld [vmem:[%s245 + $0x1d8] sm:$0xf]
        %v1148 = vld [vmem:[%s245 + $0x1dc] sm:$0xf]
        %v1149 = vld [vmem:[%s245 + $0x1e0] sm:$0xf]
        %v1150 = vld [vmem:[%s245 + $0x1e4] sm:$0xf]
        %v1151 = vld [vmem:[%s245 + $0x1e8] sm:$0xf]
        %v1152 = vld [vmem:[%s245 + $0x1ec] sm:$0xf]
        %v1153 = vld [vmem:[%s245 + $0x1f0] sm:$0xf]
        %v1154 = vld [vmem:[%s245 + $0x1f4] sm:$0xf]
        %v1155 = vld [vmem:[%s245 + $0x1f8] sm:$0xf]
        %v1156 = vld [vmem:[%s245 + $0x1fc] sm:$0xf]
        %v1157 = vld [vmem:[%s250] sm:$0xf]
        %v1158 = vld [vmem:[%s250 + $0x4] sm:$0xf]
        %v1159 = vld [vmem:[%s250 + $0x8] sm:$0xf]
        %v1160 = vld [vmem:[%s250 + $0xc] sm:$0xf]
        %v1225 = vunpack.c.l.b16 %v1093
        %v1226 = vunpack.c.l.b16 %v1094
        %v1227 = vunpack.c.l.b16 %v1095
        %v1228 = vunpack.c.l.b16 %v1096
        %v1229 = vunpack.c.l.b16 %v1097
        %v1230 = vunpack.c.l.b16 %v1098
        %v1231 = vunpack.c.l.b16 %v1099
        %v1232 = vunpack.c.l.b16 %v1100
        %v1233 = vunpack.c.l.b16 %v1101
        %v1234 = vunpack.c.l.b16 %v1102
        %v1235 = vunpack.c.l.b16 %v1103
        %v1236 = vunpack.c.l.b16 %v1104
        %v1237 = vunpack.c.l.b16 %v1105
        %v1238 = vunpack.c.l.b16 %v1106
        %v1239 = vunpack.c.l.b16 %v1107
        %v1240 = vunpack.c.l.b16 %v1108
        %v1241 = vunpack.c.l.b16 %v1109
        %v1242 = vunpack.c.l.b16 %v1110
        %v1243 = vunpack.c.l.b16 %v1111
        %v1244 = vunpack.c.l.b16 %v1112
        %v1245 = vunpack.c.l.b16 %v1113
        %v1246 = vunpack.c.l.b16 %v1114
        %v1247 = vunpack.c.l.b16 %v1115
        %v1248 = vunpack.c.l.b16 %v1116
        %v1249 = vunpack.c.l.b16 %v1117
        %v1250 = vunpack.c.l.b16 %v1118
        %v1251 = vunpack.c.l.b16 %v1119
        %v1252 = vunpack.c.l.b16 %v1120
        %v1253 = vunpack.c.l.b16 %v1121
        %v1254 = vunpack.c.l.b16 %v1122
        %v1255 = vunpack.c.l.b16 %v1123
        %v1256 = vunpack.c.l.b16 %v1124
        %v1257 = vunpack.c.l.b16 %v1125
        %v1258 = vunpack.c.l.b16 %v1126
        %v1259 = vunpack.c.l.b16 %v1127
        %v1260 = vunpack.c.l.b16 %v1128
        %v1261 = vunpack.c.l.b16 %v1129
        %v1262 = vunpack.c.l.b16 %v1130
        %v1263 = vunpack.c.l.b16 %v1131
        %v1264 = vunpack.c.l.b16 %v1132
        %v1265 = vunpack.c.l.b16 %v1133
        %v1266 = vunpack.c.l.b16 %v1134
        %v1267 = vunpack.c.l.b16 %v1135
        %v1268 = vunpack.c.l.b16 %v1136
        %v1269 = vunpack.c.l.b16 %v1137
        %v1270 = vunpack.c.l.b16 %v1138
        %v1271 = vunpack.c.l.b16 %v1139
        %v1272 = vunpack.c.l.b16 %v1140
        %v1273 = vunpack.c.l.b16 %v1141
        %v1274 = vunpack.c.l.b16 %v1142
        %v1275 = vunpack.c.l.b16 %v1143
        %v1276 = vunpack.c.l.b16 %v1144
        %v1277 = vunpack.c.l.b16 %v1145
        %v1278 = vunpack.c.l.b16 %v1146
        %v1279 = vunpack.c.l.b16 %v1147
        %v1280 = vunpack.c.l.b16 %v1148
        %v1281 = vunpack.c.l.b16 %v1149
        %v1282 = vunpack.c.l.b16 %v1150
        %v1283 = vunpack.c.l.b16 %v1151
        %v1284 = vunpack.c.l.b16 %v1152
        %v1285 = vunpack.c.l.b16 %v1153
        %v1286 = vunpack.c.l.b16 %v1154
        %v1287 = vunpack.c.l.b16 %v1155
        %v1288 = vunpack.c.l.b16 %v1156
        %v1289 = vpack.c.b16 %v1226, %v1225
        %v1290 = vpack.c.b16 %v1228, %v1227
        %v1291 = vpack.c.b16 %v1230, %v1229
        %v1292 = vpack.c.b16 %v1232, %v1231
        %v1293 = vpack.c.b16 %v1234, %v1233
        %v1294 = vpack.c.b16 %v1236, %v1235
        %v1295 = vpack.c.b16 %v1238, %v1237
        %v1296 = vpack.c.b16 %v1240, %v1239
        %v1297 = vpack.c.b16 %v1242, %v1241
        %v1298 = vpack.c.b16 %v1244, %v1243
        %v1299 = vpack.c.b16 %v1246, %v1245
        %v1300 = vpack.c.b16 %v1248, %v1247
        %v1301 = vpack.c.b16 %v1250, %v1249
        %v1302 = vpack.c.b16 %v1252, %v1251
        %v1303 = vpack.c.b16 %v1254, %v1253
        %v1304 = vpack.c.b16 %v1256, %v1255
        %v1305 = vpack.c.b16 %v1258, %v1257
        %v1306 = vpack.c.b16 %v1260, %v1259
        %v1307 = vpack.c.b16 %v1262, %v1261
        %v1308 = vpack.c.b16 %v1264, %v1263
        %v1309 = vpack.c.b16 %v1266, %v1265
        %v1310 = vpack.c.b16 %v1268, %v1267
        %v1311 = vpack.c.b16 %v1270, %v1269
        %v1312 = vpack.c.b16 %v1272, %v1271
        %v1313 = vpack.c.b16 %v1274, %v1273
        %v1314 = vpack.c.b16 %v1276, %v1275
        %v1315 = vpack.c.b16 %v1278, %v1277
        %v1316 = vpack.c.b16 %v1280, %v1279
        %v1317 = vpack.c.b16 %v1282, %v1281
        %v1318 = vpack.c.b16 %v1284, %v1283
        %v1319 = vpack.c.b16 %v1286, %v1285
        %v1320 = vpack.c.b16 %v1288, %v1287
        %v1325 = vunpack.c.l.b16 %v1157
        %v1326 = vunpack.c.l.b16 %v1158
        %v1327 = vunpack.c.l.b16 %v1159
        %v1328 = vunpack.c.l.b16 %v1160
        %v1329 = vpack.c.b16 %v1326, %v1325
        %v1330 = vpack.c.b16 %v1328, %v1327
        %v1334 = vsel %vm501, %v1289, 0
        %v1337 = vsel %vm501, %v1290, 0
        %v1340 = vsel %vm501, %v1291, 0
        %v1343 = vsel %vm501, %v1292, 0
        %v1346 = vsel %vm501, %v1293, 0
        %v1349 = vsel %vm501, %v1294, 0
        %v1352 = vsel %vm501, %v1295, 0
        %v1355 = vsel %vm501, %v1296, 0
        %v1358 = vsel %vm501, %v1297, 0
        %v1361 = vsel %vm501, %v1298, 0
        %v1364 = vsel %vm501, %v1299, 0
        %v1367 = vsel %vm501, %v1300, 0
        %v1370 = vsel %vm501, %v1301, 0
        %v1373 = vsel %vm501, %v1302, 0
        %v1376 = vsel %vm501, %v1303, 0
        %v1379 = vsel %vm501, %v1304, 0
        %v1382 = vsel %vm501, %v1305, 0
        %v1385 = vsel %vm501, %v1306, 0
        %v1388 = vsel %vm501, %v1307, 0
        %v1391 = vsel %vm501, %v1308, 0
        %v1394 = vsel %vm501, %v1309, 0
        %v1397 = vsel %vm501, %v1310, 0
        %v1400 = vsel %vm501, %v1311, 0
        %v1403 = vsel %vm501, %v1312, 0
        %v1406 = vsel %vm501, %v1313, 0
        %v1409 = vsel %vm501, %v1314, 0
        %v1412 = vsel %vm501, %v1315, 0
        %v1415 = vsel %vm501, %v1316, 0
        %v1418 = vsel %vm501, %v1317, 0
        %v1421 = vsel %vm501, %v1318, 0
        %v1424 = vsel %vm501, %v1319, 0
        %v1427 = vsel %vm501, %v1320, 0
        %1429 = vmatpush.bf16.msra.mxu0 0
        %1430 = vmatpush.bf16.msra.mxu0 0
        %1431 = vmatpush.bf16.msra.mxu0 0
        %1432 = vmatpush.bf16.msra.mxu0 0
        %1433 = vmatpush.bf16.msra.mxu0 0
        %1434 = vmatpush.bf16.msra.mxu0 0
        %1435 = vmatpush.bf16.msra.mxu0 %v1330
        %1436 = vmatpush.bf16.msra.mxu0 %v1329
        %1437 = vmatmul.bf16.gmra.mxu0 %v1334
        %v1438 = vpop.f32.mrf.mxu0
        %v1439 = vadd.f32 0.0, %v1438
        %v1440 = vpop.f32.mrf.mxu0
        %v1441 = vadd.f32 0.0, %v1440
        %1442 = vmatmul.bf16.gmra.mxu0 %v1337
        %v1443 = vpop.f32.mrf.mxu0
        %v1444 = vadd.f32 0.0, %v1443
        %v1445 = vpop.f32.mrf.mxu0
        %v1446 = vadd.f32 0.0, %v1445
        %1447 = vmatmul.bf16.gmra.mxu0 %v1340
        %v1448 = vpop.f32.mrf.mxu0
        %v1449 = vadd.f32 0.0, %v1448
        %v1450 = vpop.f32.mrf.mxu0
        %v1451 = vadd.f32 0.0, %v1450
        %1452 = vmatmul.bf16.gmra.mxu0 %v1343
        %v1453 = vpop.f32.mrf.mxu0
        %v1454 = vadd.f32 0.0, %v1453
        %v1455 = vpop.f32.mrf.mxu0
        %v1456 = vadd.f32 0.0, %v1455
        %1457 = vmatmul.bf16.gmra.mxu0 %v1346
        %v1458 = vpop.f32.mrf.mxu0
        %v1459 = vadd.f32 0.0, %v1458
        %v1460 = vpop.f32.mrf.mxu0
        %v1461 = vadd.f32 0.0, %v1460
        %1462 = vmatmul.bf16.gmra.mxu0 %v1349
        %v1463 = vpop.f32.mrf.mxu0
        %v1464 = vadd.f32 0.0, %v1463
        %v1465 = vpop.f32.mrf.mxu0
        %v1466 = vadd.f32 0.0, %v1465
        %1467 = vmatmul.bf16.gmra.mxu0 %v1352
        %v1468 = vpop.f32.mrf.mxu0
        %v1469 = vadd.f32 0.0, %v1468
        %v1470 = vpop.f32.mrf.mxu0
        %v1471 = vadd.f32 0.0, %v1470
        %1472 = vmatmul.bf16.gmra.mxu0 %v1355
        %v1473 = vpop.f32.mrf.mxu0
        %v1474 = vadd.f32 0.0, %v1473
        %v1475 = vpop.f32.mrf.mxu0
        %v1476 = vadd.f32 0.0, %v1475
        %1477 = vmatmul.bf16.gmra.mxu0 %v1358
        %v1478 = vpop.f32.mrf.mxu0
        %v1479 = vadd.f32 0.0, %v1478
        %v1480 = vpop.f32.mrf.mxu0
        %v1481 = vadd.f32 0.0, %v1480
        %1482 = vmatmul.bf16.gmra.mxu0 %v1361
        %v1483 = vpop.f32.mrf.mxu0
        %v1484 = vadd.f32 0.0, %v1483
        %v1485 = vpop.f32.mrf.mxu0
        %v1486 = vadd.f32 0.0, %v1485
        %1487 = vmatmul.bf16.gmra.mxu0 %v1364
        %v1488 = vpop.f32.mrf.mxu0
        %v1489 = vadd.f32 0.0, %v1488
        %v1490 = vpop.f32.mrf.mxu0
        %v1491 = vadd.f32 0.0, %v1490
        %1492 = vmatmul.bf16.gmra.mxu0 %v1367
        %v1493 = vpop.f32.mrf.mxu0
        %v1494 = vadd.f32 0.0, %v1493
        %v1495 = vpop.f32.mrf.mxu0
        %v1496 = vadd.f32 0.0, %v1495
        %1497 = vmatmul.bf16.gmra.mxu0 %v1370
        %v1498 = vpop.f32.mrf.mxu0
        %v1499 = vadd.f32 0.0, %v1498
        %v1500 = vpop.f32.mrf.mxu0
        %v1501 = vadd.f32 0.0, %v1500
        %1502 = vmatmul.bf16.gmra.mxu0 %v1373
        %v1503 = vpop.f32.mrf.mxu0
        %v1504 = vadd.f32 0.0, %v1503
        %v1505 = vpop.f32.mrf.mxu0
        %v1506 = vadd.f32 0.0, %v1505
        %1507 = vmatmul.bf16.gmra.mxu0 %v1376
        %v1508 = vpop.f32.mrf.mxu0
        %v1509 = vadd.f32 0.0, %v1508
        %v1510 = vpop.f32.mrf.mxu0
        %v1511 = vadd.f32 0.0, %v1510
        %1512 = vmatmul.bf16.gmra.mxu0 %v1379
        %v1513 = vpop.f32.mrf.mxu0
        %v1514 = vadd.f32 0.0, %v1513
        %v1515 = vpop.f32.mrf.mxu0
        %v1516 = vadd.f32 0.0, %v1515
        %1517 = vmatmul.bf16.gmra.mxu0 %v1382
        %v1518 = vpop.f32.mrf.mxu0
        %v1519 = vadd.f32 0.0, %v1518
        %v1520 = vpop.f32.mrf.mxu0
        %v1521 = vadd.f32 0.0, %v1520
        %1522 = vmatmul.bf16.gmra.mxu0 %v1385
        %v1523 = vpop.f32.mrf.mxu0
        %v1524 = vadd.f32 0.0, %v1523
        %v1525 = vpop.f32.mrf.mxu0
        %v1526 = vadd.f32 0.0, %v1525
        %1527 = vmatmul.bf16.gmra.mxu0 %v1388
        %v1528 = vpop.f32.mrf.mxu0
        %v1529 = vadd.f32 0.0, %v1528
        %v1530 = vpop.f32.mrf.mxu0
        %v1531 = vadd.f32 0.0, %v1530
        %1532 = vmatmul.bf16.gmra.mxu0 %v1391
        %v1533 = vpop.f32.mrf.mxu0
        %v1534 = vadd.f32 0.0, %v1533
        %v1535 = vpop.f32.mrf.mxu0
        %v1536 = vadd.f32 0.0, %v1535
        %1537 = vmatmul.bf16.gmra.mxu0 %v1394
        %v1538 = vpop.f32.mrf.mxu0
        %v1539 = vadd.f32 0.0, %v1538
        %v1540 = vpop.f32.mrf.mxu0
        %v1541 = vadd.f32 0.0, %v1540
        %1542 = vmatmul.bf16.gmra.mxu0 %v1397
        %v1543 = vpop.f32.mrf.mxu0
        %v1544 = vadd.f32 0.0, %v1543
        %v1545 = vpop.f32.mrf.mxu0
        %v1546 = vadd.f32 0.0, %v1545
        %1547 = vmatmul.bf16.gmra.mxu0 %v1400
        %v1548 = vpop.f32.mrf.mxu0
        %v1549 = vadd.f32 0.0, %v1548
        %v1550 = vpop.f32.mrf.mxu0
        %v1551 = vadd.f32 0.0, %v1550
        %1552 = vmatmul.bf16.gmra.mxu0 %v1403
        %v1553 = vpop.f32.mrf.mxu0
        %v1554 = vadd.f32 0.0, %v1553
        %v1555 = vpop.f32.mrf.mxu0
        %v1556 = vadd.f32 0.0, %v1555
        %1557 = vmatmul.bf16.gmra.mxu0 %v1406
        %v1558 = vpop.f32.mrf.mxu0
        %v1559 = vadd.f32 0.0, %v1558
        %v1560 = vpop.f32.mrf.mxu0
        %v1561 = vadd.f32 0.0, %v1560
        %1562 = vmatmul.bf16.gmra.mxu0 %v1409
        %v1563 = vpop.f32.mrf.mxu0
        %v1564 = vadd.f32 0.0, %v1563
        %v1565 = vpop.f32.mrf.mxu0
        %v1566 = vadd.f32 0.0, %v1565
        %1567 = vmatmul.bf16.gmra.mxu0 %v1412
        %v1568 = vpop.f32.mrf.mxu0
        %v1569 = vadd.f32 0.0, %v1568
        %v1570 = vpop.f32.mrf.mxu0
        %v1571 = vadd.f32 0.0, %v1570
        %1572 = vmatmul.bf16.gmra.mxu0 %v1415
        %v1573 = vpop.f32.mrf.mxu0
        %v1574 = vadd.f32 0.0, %v1573
        %v1575 = vpop.f32.mrf.mxu0
        %v1576 = vadd.f32 0.0, %v1575
        %1577 = vmatmul.bf16.gmra.mxu0 %v1418
        %v1578 = vpop.f32.mrf.mxu0
        %v1579 = vadd.f32 0.0, %v1578
        %v1580 = vpop.f32.mrf.mxu0
        %v1581 = vadd.f32 0.0, %v1580
        %1582 = vmatmul.bf16.gmra.mxu0 %v1421
        %v1583 = vpop.f32.mrf.mxu0
        %v1584 = vadd.f32 0.0, %v1583
        %v1585 = vpop.f32.mrf.mxu0
        %v1586 = vadd.f32 0.0, %v1585
        %1587 = vmatmul.bf16.gmra.mxu0 %v1424
        %v1588 = vpop.f32.mrf.mxu0
        %v1589 = vadd.f32 0.0, %v1588
        %v1590 = vpop.f32.mrf.mxu0
        %v1591 = vadd.f32 0.0, %v1590
        %1592 = vmatmul.bf16.gmra.mxu0 %v1427
        %v1593 = vpop.f32.mrf.mxu0
        %v1594 = vadd.f32 0.0, %v1593
        %v1595 = vpop.f32.mrf.mxu0
        %v1596 = vadd.f32 0.0, %v1595
        %1597 = vdwg.mxu0
        %v1598 = vmul.f32 %v1439, %v768
        %v1599 = vmul.f32 %v1441, %v768
        %v1600 = vmul.f32 %v1444, %v768
        %v1601 = vmul.f32 %v1446, %v768
        %v1602 = vmul.f32 %v1449, %v768
        %v1603 = vmul.f32 %v1451, %v768
        %v1604 = vmul.f32 %v1454, %v768
        %v1605 = vmul.f32 %v1456, %v768
        %v1606 = vmul.f32 %v1459, %v768
        %v1607 = vmul.f32 %v1461, %v768
        %v1608 = vmul.f32 %v1464, %v768
        %v1609 = vmul.f32 %v1466, %v768
        %v1610 = vmul.f32 %v1469, %v768
        %v1611 = vmul.f32 %v1471, %v768
        %v1612 = vmul.f32 %v1474, %v768
        %v1613 = vmul.f32 %v1476, %v768
        %v1614 = vmul.f32 %v1479, %v768
        %v1615 = vmul.f32 %v1481, %v768
        %v1616 = vmul.f32 %v1484, %v768
        %v1617 = vmul.f32 %v1486, %v768
        %v1618 = vmul.f32 %v1489, %v768
        %v1619 = vmul.f32 %v1491, %v768
        %v1620 = vmul.f32 %v1494, %v768
        %v1621 = vmul.f32 %v1496, %v768
        %v1622 = vmul.f32 %v1499, %v768
        %v1623 = vmul.f32 %v1501, %v768
        %v1624 = vmul.f32 %v1504, %v768
        %v1625 = vmul.f32 %v1506, %v768
        %v1626 = vmul.f32 %v1509, %v768
        %v1627 = vmul.f32 %v1511, %v768
        %v1628 = vmul.f32 %v1514, %v768
        %v1629 = vmul.f32 %v1516, %v768
        %v1630 = vmul.f32 %v1519, %v768
        %v1631 = vmul.f32 %v1521, %v768
        %v1632 = vmul.f32 %v1524, %v768
        %v1633 = vmul.f32 %v1526, %v768
        %v1634 = vmul.f32 %v1529, %v768
        %v1635 = vmul.f32 %v1531, %v768
        %v1636 = vmul.f32 %v1534, %v768
        %v1637 = vmul.f32 %v1536, %v768
        %v1638 = vmul.f32 %v1539, %v768
        %v1639 = vmul.f32 %v1541, %v768
        %v1640 = vmul.f32 %v1544, %v768
        %v1641 = vmul.f32 %v1546, %v768
        %v1642 = vmul.f32 %v1549, %v768
        %v1643 = vmul.f32 %v1551, %v768
        %v1644 = vmul.f32 %v1554, %v768
        %v1645 = vmul.f32 %v1556, %v768
        %v1646 = vmul.f32 %v1559, %v768
        %v1647 = vmul.f32 %v1561, %v768
        %v1648 = vmul.f32 %v1564, %v768
        %v1649 = vmul.f32 %v1566, %v768
        %v1650 = vmul.f32 %v1569, %v768
        %v1651 = vmul.f32 %v1571, %v768
        %v1652 = vmul.f32 %v1574, %v768
        %v1653 = vmul.f32 %v1576, %v768
        %v1654 = vmul.f32 %v1579, %v768
        %v1655 = vmul.f32 %v1581, %v768
        %v1656 = vmul.f32 %v1584, %v768
        %v1657 = vmul.f32 %v1586, %v768
        %v1658 = vmul.f32 %v1589, %v768
        %v1659 = vmul.f32 %v1591, %v768
        %v1660 = vmul.f32 %v1594, %v768
        %v1661 = vmul.f32 %v1596, %v768
        %v1662 = vadd.f32 %v1598, %v835
        %v1663 = vadd.f32 %v1599, %v835
        %v1664 = vadd.f32 %v1600, %v835
        %v1665 = vadd.f32 %v1601, %v835
        %v1666 = vadd.f32 %v1602, %v835
        %v1667 = vadd.f32 %v1603, %v835
        %v1668 = vadd.f32 %v1604, %v835
        %v1669 = vadd.f32 %v1605, %v835
        %v1670 = vadd.f32 %v1606, %v835
        %v1671 = vadd.f32 %v1607, %v835
        %v1672 = vadd.f32 %v1608, %v835
        %v1673 = vadd.f32 %v1609, %v835
        %v1674 = vadd.f32 %v1610, %v835
        %v1675 = vadd.f32 %v1611, %v835
        %v1676 = vadd.f32 %v1612, %v835
        %v1677 = vadd.f32 %v1613, %v835
        %v1678 = vadd.f32 %v1614, %v835
        %v1679 = vadd.f32 %v1615, %v835
        %v1680 = vadd.f32 %v1616, %v835
        %v1681 = vadd.f32 %v1617, %v835
        %v1682 = vadd.f32 %v1618, %v835
        %v1683 = vadd.f32 %v1619, %v835
        %v1684 = vadd.f32 %v1620, %v835
        %v1685 = vadd.f32 %v1621, %v835
        %v1686 = vadd.f32 %v1622, %v835
        %v1687 = vadd.f32 %v1623, %v835
        %v1688 = vadd.f32 %v1624, %v835
        %v1689 = vadd.f32 %v1625, %v835
        %v1690 = vadd.f32 %v1626, %v835
        %v1691 = vadd.f32 %v1627, %v835
        %v1692 = vadd.f32 %v1628, %v835
        %v1693 = vadd.f32 %v1629, %v835
        %v1694 = vadd.f32 %v1630, %v835
        %v1695 = vadd.f32 %v1631, %v835
        %v1696 = vadd.f32 %v1632, %v835
        %v1697 = vadd.f32 %v1633, %v835
        %v1698 = vadd.f32 %v1634, %v835
        %v1699 = vadd.f32 %v1635, %v835
        %v1700 = vadd.f32 %v1636, %v835
        %v1701 = vadd.f32 %v1637, %v835
        %v1702 = vadd.f32 %v1638, %v835
        %v1703 = vadd.f32 %v1639, %v835
        %v1704 = vadd.f32 %v1640, %v835
        %v1705 = vadd.f32 %v1641, %v835
        %v1706 = vadd.f32 %v1642, %v835
        %v1707 = vadd.f32 %v1643, %v835
        %v1708 = vadd.f32 %v1644, %v835
        %v1709 = vadd.f32 %v1645, %v835
        %v1710 = vadd.f32 %v1646, %v835
        %v1711 = vadd.f32 %v1647, %v835
        %v1712 = vadd.f32 %v1648, %v835
        %v1713 = vadd.f32 %v1649, %v835
        %v1714 = vadd.f32 %v1650, %v835
        %v1715 = vadd.f32 %v1651, %v835
        %v1716 = vadd.f32 %v1652, %v835
        %v1717 = vadd.f32 %v1653, %v835
        %v1718 = vadd.f32 %v1654, %v835
        %v1719 = vadd.f32 %v1655, %v835
        %v1720 = vadd.f32 %v1656, %v835
        %v1721 = vadd.f32 %v1657, %v835
        %v1722 = vadd.f32 %v1658, %v835
        %v1723 = vadd.f32 %v1659, %v835
        %v1724 = vadd.f32 %v1660, %v835
        %v1725 = vadd.f32 %v1661, %v835
        %v1726 = vmax.f32 %v1662, 0.0
        %v1727 = vmax.f32 %v1663, 0.0
        %v1728 = vmax.f32 %v1664, 0.0
        %v1729 = vmax.f32 %v1665, 0.0
        %v1730 = vmax.f32 %v1666, 0.0
        %v1731 = vmax.f32 %v1667, 0.0
        %v1732 = vmax.f32 %v1668, 0.0
        %v1733 = vmax.f32 %v1669, 0.0
        %v1734 = vmax.f32 %v1670, 0.0
        %v1735 = vmax.f32 %v1671, 0.0
        %v1736 = vmax.f32 %v1672, 0.0
        %v1737 = vmax.f32 %v1673, 0.0
        %v1738 = vmax.f32 %v1674, 0.0
        %v1739 = vmax.f32 %v1675, 0.0
        %v1740 = vmax.f32 %v1676, 0.0
        %v1741 = vmax.f32 %v1677, 0.0
        %v1742 = vmax.f32 %v1678, 0.0
        %v1743 = vmax.f32 %v1679, 0.0
        %v1744 = vmax.f32 %v1680, 0.0
        %v1745 = vmax.f32 %v1681, 0.0
        %v1746 = vmax.f32 %v1682, 0.0
        %v1747 = vmax.f32 %v1683, 0.0
        %v1748 = vmax.f32 %v1684, 0.0
        %v1749 = vmax.f32 %v1685, 0.0
        %v1750 = vmax.f32 %v1686, 0.0
        %v1751 = vmax.f32 %v1687, 0.0
        %v1752 = vmax.f32 %v1688, 0.0
        %v1753 = vmax.f32 %v1689, 0.0
        %v1754 = vmax.f32 %v1690, 0.0
        %v1755 = vmax.f32 %v1691, 0.0
        %v1756 = vmax.f32 %v1692, 0.0
        %v1757 = vmax.f32 %v1693, 0.0
        %v1758 = vmax.f32 %v1694, 0.0
        %v1759 = vmax.f32 %v1695, 0.0
        %v1760 = vmax.f32 %v1696, 0.0
        %v1761 = vmax.f32 %v1697, 0.0
        %v1762 = vmax.f32 %v1698, 0.0
        %v1763 = vmax.f32 %v1699, 0.0
        %v1764 = vmax.f32 %v1700, 0.0
        %v1765 = vmax.f32 %v1701, 0.0
        %v1766 = vmax.f32 %v1702, 0.0
        %v1767 = vmax.f32 %v1703, 0.0
        %v1768 = vmax.f32 %v1704, 0.0
        %v1769 = vmax.f32 %v1705, 0.0
        %v1770 = vmax.f32 %v1706, 0.0
        %v1771 = vmax.f32 %v1707, 0.0
        %v1772 = vmax.f32 %v1708, 0.0
        %v1773 = vmax.f32 %v1709, 0.0
        %v1774 = vmax.f32 %v1710, 0.0
        %v1775 = vmax.f32 %v1711, 0.0
        %v1776 = vmax.f32 %v1712, 0.0
        %v1777 = vmax.f32 %v1713, 0.0
        %v1778 = vmax.f32 %v1714, 0.0
        %v1779 = vmax.f32 %v1715, 0.0
        %v1780 = vmax.f32 %v1716, 0.0
        %v1781 = vmax.f32 %v1717, 0.0
        %v1782 = vmax.f32 %v1718, 0.0
        %v1783 = vmax.f32 %v1719, 0.0
        %v1784 = vmax.f32 %v1720, 0.0
        %v1785 = vmax.f32 %v1721, 0.0
        %v1786 = vmax.f32 %v1722, 0.0
        %v1787 = vmax.f32 %v1723, 0.0
        %v1788 = vmax.f32 %v1724, 0.0
        %v1789 = vmax.f32 %v1725, 0.0
        %v1790 = vpack.c.bf16 %v1726, %v1726
        %v1791 = vpack.c.bf16 %v1727, %v1727
        %v1792 = vpack.c.bf16 %v1728, %v1728
        %v1793 = vpack.c.bf16 %v1729, %v1729
        %v1794 = vpack.c.bf16 %v1730, %v1730
        %v1795 = vpack.c.bf16 %v1731, %v1731
        %v1796 = vpack.c.bf16 %v1732, %v1732
        %v1797 = vpack.c.bf16 %v1733, %v1733
        %v1798 = vpack.c.bf16 %v1734, %v1734
        %v1799 = vpack.c.bf16 %v1735, %v1735
        %v1800 = vpack.c.bf16 %v1736, %v1736
        %v1801 = vpack.c.bf16 %v1737, %v1737
        %v1802 = vpack.c.bf16 %v1738, %v1738
        %v1803 = vpack.c.bf16 %v1739, %v1739
        %v1804 = vpack.c.bf16 %v1740, %v1740
        %v1805 = vpack.c.bf16 %v1741, %v1741
        %v1806 = vpack.c.bf16 %v1742, %v1742
        %v1807 = vpack.c.bf16 %v1743, %v1743
        %v1808 = vpack.c.bf16 %v1744, %v1744
        %v1809 = vpack.c.bf16 %v1745, %v1745
        %v1810 = vpack.c.bf16 %v1746, %v1746
        %v1811 = vpack.c.bf16 %v1747, %v1747
        %v1812 = vpack.c.bf16 %v1748, %v1748
        %v1813 = vpack.c.bf16 %v1749, %v1749
        %v1814 = vpack.c.bf16 %v1750, %v1750
        %v1815 = vpack.c.bf16 %v1751, %v1751
        %v1816 = vpack.c.bf16 %v1752, %v1752
        %v1817 = vpack.c.bf16 %v1753, %v1753
        %v1818 = vpack.c.bf16 %v1754, %v1754
        %v1819 = vpack.c.bf16 %v1755, %v1755
        %v1820 = vpack.c.bf16 %v1756, %v1756
        %v1821 = vpack.c.bf16 %v1757, %v1757
        %v1822 = vpack.c.bf16 %v1758, %v1758
        %v1823 = vpack.c.bf16 %v1759, %v1759
        %v1824 = vpack.c.bf16 %v1760, %v1760
        %v1825 = vpack.c.bf16 %v1761, %v1761
        %v1826 = vpack.c.bf16 %v1762, %v1762
        %v1827 = vpack.c.bf16 %v1763, %v1763
        %v1828 = vpack.c.bf16 %v1764, %v1764
        %v1829 = vpack.c.bf16 %v1765, %v1765
        %v1830 = vpack.c.bf16 %v1766, %v1766
        %v1831 = vpack.c.bf16 %v1767, %v1767
        %v1832 = vpack.c.bf16 %v1768, %v1768
        %v1833 = vpack.c.bf16 %v1769, %v1769
        %v1834 = vpack.c.bf16 %v1770, %v1770
        %v1835 = vpack.c.bf16 %v1771, %v1771
        %v1836 = vpack.c.bf16 %v1772, %v1772
        %v1837 = vpack.c.bf16 %v1773, %v1773
        %v1838 = vpack.c.bf16 %v1774, %v1774
        %v1839 = vpack.c.bf16 %v1775, %v1775
        %v1840 = vpack.c.bf16 %v1776, %v1776
        %v1841 = vpack.c.bf16 %v1777, %v1777
        %v1842 = vpack.c.bf16 %v1778, %v1778
        %v1843 = vpack.c.bf16 %v1779, %v1779
        %v1844 = vpack.c.bf16 %v1780, %v1780
        %v1845 = vpack.c.bf16 %v1781, %v1781
        %v1846 = vpack.c.bf16 %v1782, %v1782
        %v1847 = vpack.c.bf16 %v1783, %v1783
        %v1848 = vpack.c.bf16 %v1784, %v1784
        %v1849 = vpack.c.bf16 %v1785, %v1785
        %v1850 = vpack.c.bf16 %v1786, %v1786
        %v1851 = vpack.c.bf16 %v1787, %v1787
        %v1852 = vpack.c.bf16 %v1788, %v1788
        %v1853 = vpack.c.bf16 %v1789, %v1789
        %1854 = vst [vmem:[%s240 + $0x100] sm:$0xf] %v1790
        %1855 = vst [vmem:[%s240 + $0x104] sm:$0xf] %v1791
        %1856 = vst [vmem:[%s240 + $0x108] sm:$0xf] %v1792
        %1857 = vst [vmem:[%s240 + $0x10c] sm:$0xf] %v1793
        %1858 = vst [vmem:[%s240 + $0x110] sm:$0xf] %v1794
        %1859 = vst [vmem:[%s240 + $0x114] sm:$0xf] %v1795
        %1860 = vst [vmem:[%s240 + $0x118] sm:$0xf] %v1796
        %1861 = vst [vmem:[%s240 + $0x11c] sm:$0xf] %v1797
        %1862 = vst [vmem:[%s240 + $0x120] sm:$0xf] %v1798
        %1863 = vst [vmem:[%s240 + $0x124] sm:$0xf] %v1799
        %1864 = vst [vmem:[%s240 + $0x128] sm:$0xf] %v1800
        %1865 = vst [vmem:[%s240 + $0x12c] sm:$0xf] %v1801
        %1866 = vst [vmem:[%s240 + $0x130] sm:$0xf] %v1802
        %1867 = vst [vmem:[%s240 + $0x134] sm:$0xf] %v1803
        %1868 = vst [vmem:[%s240 + $0x138] sm:$0xf] %v1804
        %1869 = vst [vmem:[%s240 + $0x13c] sm:$0xf] %v1805
        %1870 = vst [vmem:[%s240 + $0x140] sm:$0xf] %v1806
        %1871 = vst [vmem:[%s240 + $0x144] sm:$0xf] %v1807
        %1872 = vst [vmem:[%s240 + $0x148] sm:$0xf] %v1808
        %1873 = vst [vmem:[%s240 + $0x14c] sm:$0xf] %v1809
        %1874 = vst [vmem:[%s240 + $0x150] sm:$0xf] %v1810
        %1875 = vst [vmem:[%s240 + $0x154] sm:$0xf] %v1811
        %1876 = vst [vmem:[%s240 + $0x158] sm:$0xf] %v1812
        %1877 = vst [vmem:[%s240 + $0x15c] sm:$0xf] %v1813
        %1878 = vst [vmem:[%s240 + $0x160] sm:$0xf] %v1814
        %1879 = vst [vmem:[%s240 + $0x164] sm:$0xf] %v1815
        %1880 = vst [vmem:[%s240 + $0x168] sm:$0xf] %v1816
        %1881 = vst [vmem:[%s240 + $0x16c] sm:$0xf] %v1817
        %1882 = vst [vmem:[%s240 + $0x170] sm:$0xf] %v1818
        %1883 = vst [vmem:[%s240 + $0x174] sm:$0xf] %v1819
        %1884 = vst [vmem:[%s240 + $0x178] sm:$0xf] %v1820
        %1885 = vst [vmem:[%s240 + $0x17c] sm:$0xf] %v1821
        %1886 = vst [vmem:[%s240 + $0x180] sm:$0xf] %v1822
        %1887 = vst [vmem:[%s240 + $0x184] sm:$0xf] %v1823
        %1888 = vst [vmem:[%s240 + $0x188] sm:$0xf] %v1824
        %1889 = vst [vmem:[%s240 + $0x18c] sm:$0xf] %v1825
        %1890 = vst [vmem:[%s240 + $0x190] sm:$0xf] %v1826
        %1891 = vst [vmem:[%s240 + $0x194] sm:$0xf] %v1827
        %1892 = vst [vmem:[%s240 + $0x198] sm:$0xf] %v1828
        %1893 = vst [vmem:[%s240 + $0x19c] sm:$0xf] %v1829
        %1894 = vst [vmem:[%s240 + $0x1a0] sm:$0xf] %v1830
        %1895 = vst [vmem:[%s240 + $0x1a4] sm:$0xf] %v1831
        %1896 = vst [vmem:[%s240 + $0x1a8] sm:$0xf] %v1832
        %1897 = vst [vmem:[%s240 + $0x1ac] sm:$0xf] %v1833
        %1898 = vst [vmem:[%s240 + $0x1b0] sm:$0xf] %v1834
        %1899 = vst [vmem:[%s240 + $0x1b4] sm:$0xf] %v1835
        %1900 = vst [vmem:[%s240 + $0x1b8] sm:$0xf] %v1836
        %1901 = vst [vmem:[%s240 + $0x1bc] sm:$0xf] %v1837
        %1902 = vst [vmem:[%s240 + $0x1c0] sm:$0xf] %v1838
        %1903 = vst [vmem:[%s240 + $0x1c4] sm:$0xf] %v1839
        %1904 = vst [vmem:[%s240 + $0x1c8] sm:$0xf] %v1840
        %1905 = vst [vmem:[%s240 + $0x1cc] sm:$0xf] %v1841
        %1906 = vst [vmem:[%s240 + $0x1d0] sm:$0xf] %v1842
        %1907 = vst [vmem:[%s240 + $0x1d4] sm:$0xf] %v1843
        %1908 = vst [vmem:[%s240 + $0x1d8] sm:$0xf] %v1844
        %1909 = vst [vmem:[%s240 + $0x1dc] sm:$0xf] %v1845
        %1910 = vst [vmem:[%s240 + $0x1e0] sm:$0xf] %v1846
        %1911 = vst [vmem:[%s240 + $0x1e4] sm:$0xf] %v1847
        %1912 = vst [vmem:[%s240 + $0x1e8] sm:$0xf] %v1848
        %1913 = vst [vmem:[%s240 + $0x1ec] sm:$0xf] %v1849
        %1914 = vst [vmem:[%s240 + $0x1f0] sm:$0xf] %v1850
        %1915 = vst [vmem:[%s240 + $0x1f4] sm:$0xf] %v1851
        %1916 = vst [vmem:[%s240 + $0x1f8] sm:$0xf] %v1852
        %1917 = vst [vmem:[%s240 + $0x1fc] sm:$0xf] %v1853
        %v1918 = vld [vmem:[%s245 + $0x200] sm:$0xf]
        %v1919 = vld [vmem:[%s245 + $0x204] sm:$0xf]
        %v1920 = vld [vmem:[%s245 + $0x208] sm:$0xf]
        %v1921 = vld [vmem:[%s245 + $0x20c] sm:$0xf]
        %v1922 = vld [vmem:[%s245 + $0x210] sm:$0xf]
        %v1923 = vld [vmem:[%s245 + $0x214] sm:$0xf]
        %v1924 = vld [vmem:[%s245 + $0x218] sm:$0xf]
        %v1925 = vld [vmem:[%s245 + $0x21c] sm:$0xf]
        %v1926 = vld [vmem:[%s245 + $0x220] sm:$0xf]
        %v1927 = vld [vmem:[%s245 + $0x224] sm:$0xf]
        %v1928 = vld [vmem:[%s245 + $0x228] sm:$0xf]
        %v1929 = vld [vmem:[%s245 + $0x22c] sm:$0xf]
        %v1930 = vld [vmem:[%s245 + $0x230] sm:$0xf]
        %v1931 = vld [vmem:[%s245 + $0x234] sm:$0xf]
        %v1932 = vld [vmem:[%s245 + $0x238] sm:$0xf]
        %v1933 = vld [vmem:[%s245 + $0x23c] sm:$0xf]
        %v1934 = vld [vmem:[%s245 + $0x240] sm:$0xf]
        %v1935 = vld [vmem:[%s245 + $0x244] sm:$0xf]
        %v1936 = vld [vmem:[%s245 + $0x248] sm:$0xf]
        %v1937 = vld [vmem:[%s245 + $0x24c] sm:$0xf]
        %v1938 = vld [vmem:[%s245 + $0x250] sm:$0xf]
        %v1939 = vld [vmem:[%s245 + $0x254] sm:$0xf]
        %v1940 = vld [vmem:[%s245 + $0x258] sm:$0xf]
        %v1941 = vld [vmem:[%s245 + $0x25c] sm:$0xf]
        %v1942 = vld [vmem:[%s245 + $0x260] sm:$0xf]
        %v1943 = vld [vmem:[%s245 + $0x264] sm:$0xf]
        %v1944 = vld [vmem:[%s245 + $0x268] sm:$0xf]
        %v1945 = vld [vmem:[%s245 + $0x26c] sm:$0xf]
        %v1946 = vld [vmem:[%s245 + $0x270] sm:$0xf]
        %v1947 = vld [vmem:[%s245 + $0x274] sm:$0xf]
        %v1948 = vld [vmem:[%s245 + $0x278] sm:$0xf]
        %v1949 = vld [vmem:[%s245 + $0x27c] sm:$0xf]
        %v1950 = vld [vmem:[%s245 + $0x280] sm:$0xf]
        %v1951 = vld [vmem:[%s245 + $0x284] sm:$0xf]
        %v1952 = vld [vmem:[%s245 + $0x288] sm:$0xf]
        %v1953 = vld [vmem:[%s245 + $0x28c] sm:$0xf]
        %v1954 = vld [vmem:[%s245 + $0x290] sm:$0xf]
        %v1955 = vld [vmem:[%s245 + $0x294] sm:$0xf]
        %v1956 = vld [vmem:[%s245 + $0x298] sm:$0xf]
        %v1957 = vld [vmem:[%s245 + $0x29c] sm:$0xf]
        %v1958 = vld [vmem:[%s245 + $0x2a0] sm:$0xf]
        %v1959 = vld [vmem:[%s245 + $0x2a4] sm:$0xf]
        %v1960 = vld [vmem:[%s245 + $0x2a8] sm:$0xf]
        %v1961 = vld [vmem:[%s245 + $0x2ac] sm:$0xf]
        %v1962 = vld [vmem:[%s245 + $0x2b0] sm:$0xf]
        %v1963 = vld [vmem:[%s245 + $0x2b4] sm:$0xf]
        %v1964 = vld [vmem:[%s245 + $0x2b8] sm:$0xf]
        %v1965 = vld [vmem:[%s245 + $0x2bc] sm:$0xf]
        %v1966 = vld [vmem:[%s245 + $0x2c0] sm:$0xf]
        %v1967 = vld [vmem:[%s245 + $0x2c4] sm:$0xf]
        %v1968 = vld [vmem:[%s245 + $0x2c8] sm:$0xf]
        %v1969 = vld [vmem:[%s245 + $0x2cc] sm:$0xf]
        %v1970 = vld [vmem:[%s245 + $0x2d0] sm:$0xf]
        %v1971 = vld [vmem:[%s245 + $0x2d4] sm:$0xf]
        %v1972 = vld [vmem:[%s245 + $0x2d8] sm:$0xf]
        %v1973 = vld [vmem:[%s245 + $0x2dc] sm:$0xf]
        %v1974 = vld [vmem:[%s245 + $0x2e0] sm:$0xf]
        %v1975 = vld [vmem:[%s245 + $0x2e4] sm:$0xf]
        %v1976 = vld [vmem:[%s245 + $0x2e8] sm:$0xf]
        %v1977 = vld [vmem:[%s245 + $0x2ec] sm:$0xf]
        %v1978 = vld [vmem:[%s245 + $0x2f0] sm:$0xf]
        %v1979 = vld [vmem:[%s245 + $0x2f4] sm:$0xf]
        %v1980 = vld [vmem:[%s245 + $0x2f8] sm:$0xf]
        %v1981 = vld [vmem:[%s245 + $0x2fc] sm:$0xf]
        %v1982 = vld [vmem:[%s250] sm:$0xf]
        %v1983 = vld [vmem:[%s250 + $0x4] sm:$0xf]
        %v1984 = vld [vmem:[%s250 + $0x8] sm:$0xf]
        %v1985 = vld [vmem:[%s250 + $0xc] sm:$0xf]
        %v2050 = vunpack.c.l.b16 %v1918
        %v2051 = vunpack.c.l.b16 %v1919
        %v2052 = vunpack.c.l.b16 %v1920
        %v2053 = vunpack.c.l.b16 %v1921
        %v2054 = vunpack.c.l.b16 %v1922
        %v2055 = vunpack.c.l.b16 %v1923
        %v2056 = vunpack.c.l.b16 %v1924
        %v2057 = vunpack.c.l.b16 %v1925
        %v2058 = vunpack.c.l.b16 %v1926
        %v2059 = vunpack.c.l.b16 %v1927
        %v2060 = vunpack.c.l.b16 %v1928
        %v2061 = vunpack.c.l.b16 %v1929
        %v2062 = vunpack.c.l.b16 %v1930
        %v2063 = vunpack.c.l.b16 %v1931
        %v2064 = vunpack.c.l.b16 %v1932
        %v2065 = vunpack.c.l.b16 %v1933
        %v2066 = vunpack.c.l.b16 %v1934
        %v2067 = vunpack.c.l.b16 %v1935
        %v2068 = vunpack.c.l.b16 %v1936
        %v2069 = vunpack.c.l.b16 %v1937
        %v2070 = vunpack.c.l.b16 %v1938
        %v2071 = vunpack.c.l.b16 %v1939
        %v2072 = vunpack.c.l.b16 %v1940
        %v2073 = vunpack.c.l.b16 %v1941
        %v2074 = vunpack.c.l.b16 %v1942
        %v2075 = vunpack.c.l.b16 %v1943
        %v2076 = vunpack.c.l.b16 %v1944
        %v2077 = vunpack.c.l.b16 %v1945
        %v2078 = vunpack.c.l.b16 %v1946
        %v2079 = vunpack.c.l.b16 %v1947
        %v2080 = vunpack.c.l.b16 %v1948
        %v2081 = vunpack.c.l.b16 %v1949
        %v2082 = vunpack.c.l.b16 %v1950
        %v2083 = vunpack.c.l.b16 %v1951
        %v2084 = vunpack.c.l.b16 %v1952
        %v2085 = vunpack.c.l.b16 %v1953
        %v2086 = vunpack.c.l.b16 %v1954
        %v2087 = vunpack.c.l.b16 %v1955
        %v2088 = vunpack.c.l.b16 %v1956
        %v2089 = vunpack.c.l.b16 %v1957
        %v2090 = vunpack.c.l.b16 %v1958
        %v2091 = vunpack.c.l.b16 %v1959
        %v2092 = vunpack.c.l.b16 %v1960
        %v2093 = vunpack.c.l.b16 %v1961
        %v2094 = vunpack.c.l.b16 %v1962
        %v2095 = vunpack.c.l.b16 %v1963
        %v2096 = vunpack.c.l.b16 %v1964
        %v2097 = vunpack.c.l.b16 %v1965
        %v2098 = vunpack.c.l.b16 %v1966
        %v2099 = vunpack.c.l.b16 %v1967
        %v2100 = vunpack.c.l.b16 %v1968
        %v2101 = vunpack.c.l.b16 %v1969
        %v2102 = vunpack.c.l.b16 %v1970
        %v2103 = vunpack.c.l.b16 %v1971
        %v2104 = vunpack.c.l.b16 %v1972
        %v2105 = vunpack.c.l.b16 %v1973
        %v2106 = vunpack.c.l.b16 %v1974
        %v2107 = vunpack.c.l.b16 %v1975
        %v2108 = vunpack.c.l.b16 %v1976
        %v2109 = vunpack.c.l.b16 %v1977
        %v2110 = vunpack.c.l.b16 %v1978
        %v2111 = vunpack.c.l.b16 %v1979
        %v2112 = vunpack.c.l.b16 %v1980
        %v2113 = vunpack.c.l.b16 %v1981
        %v2114 = vpack.c.b16 %v2051, %v2050
        %v2115 = vpack.c.b16 %v2053, %v2052
        %v2116 = vpack.c.b16 %v2055, %v2054
        %v2117 = vpack.c.b16 %v2057, %v2056
        %v2118 = vpack.c.b16 %v2059, %v2058
        %v2119 = vpack.c.b16 %v2061, %v2060
        %v2120 = vpack.c.b16 %v2063, %v2062
        %v2121 = vpack.c.b16 %v2065, %v2064
        %v2122 = vpack.c.b16 %v2067, %v2066
        %v2123 = vpack.c.b16 %v2069, %v2068
        %v2124 = vpack.c.b16 %v2071, %v2070
        %v2125 = vpack.c.b16 %v2073, %v2072
        %v2126 = vpack.c.b16 %v2075, %v2074
        %v2127 = vpack.c.b16 %v2077, %v2076
        %v2128 = vpack.c.b16 %v2079, %v2078
        %v2129 = vpack.c.b16 %v2081, %v2080
        %v2130 = vpack.c.b16 %v2083, %v2082
        %v2131 = vpack.c.b16 %v2085, %v2084
        %v2132 = vpack.c.b16 %v2087, %v2086
        %v2133 = vpack.c.b16 %v2089, %v2088
        %v2134 = vpack.c.b16 %v2091, %v2090
        %v2135 = vpack.c.b16 %v2093, %v2092
        %v2136 = vpack.c.b16 %v2095, %v2094
        %v2137 = vpack.c.b16 %v2097, %v2096
        %v2138 = vpack.c.b16 %v2099, %v2098
        %v2139 = vpack.c.b16 %v2101, %v2100
        %v2140 = vpack.c.b16 %v2103, %v2102
        %v2141 = vpack.c.b16 %v2105, %v2104
        %v2142 = vpack.c.b16 %v2107, %v2106
        %v2143 = vpack.c.b16 %v2109, %v2108
        %v2144 = vpack.c.b16 %v2111, %v2110
        %v2145 = vpack.c.b16 %v2113, %v2112
        %v2150 = vunpack.c.l.b16 %v1982
        %v2151 = vunpack.c.l.b16 %v1983
        %v2152 = vunpack.c.l.b16 %v1984
        %v2153 = vunpack.c.l.b16 %v1985
        %v2154 = vpack.c.b16 %v2151, %v2150
        %v2155 = vpack.c.b16 %v2153, %v2152
        %v2159 = vsel %vm501, %v2114, 0
        %v2162 = vsel %vm501, %v2115, 0
        %v2165 = vsel %vm501, %v2116, 0
        %v2168 = vsel %vm501, %v2117, 0
        %v2171 = vsel %vm501, %v2118, 0
        %v2174 = vsel %vm501, %v2119, 0
        %v2177 = vsel %vm501, %v2120, 0
        %v2180 = vsel %vm501, %v2121, 0
        %v2183 = vsel %vm501, %v2122, 0
        %v2186 = vsel %vm501, %v2123, 0
        %v2189 = vsel %vm501, %v2124, 0
        %v2192 = vsel %vm501, %v2125, 0
        %v2195 = vsel %vm501, %v2126, 0
        %v2198 = vsel %vm501, %v2127, 0
        %v2201 = vsel %vm501, %v2128, 0
        %v2204 = vsel %vm501, %v2129, 0
        %v2207 = vsel %vm501, %v2130, 0
        %v2210 = vsel %vm501, %v2131, 0
        %v2213 = vsel %vm501, %v2132, 0
        %v2216 = vsel %vm501, %v2133, 0
        %v2219 = vsel %vm501, %v2134, 0
        %v2222 = vsel %vm501, %v2135, 0
        %v2225 = vsel %vm501, %v2136, 0
        %v2228 = vsel %vm501, %v2137, 0
        %v2231 = vsel %vm501, %v2138, 0
        %v2234 = vsel %vm501, %v2139, 0
        %v2237 = vsel %vm501, %v2140, 0
        %v2240 = vsel %vm501, %v2141, 0
        %v2243 = vsel %vm501, %v2142, 0
        %v2246 = vsel %vm501, %v2143, 0
        %v2249 = vsel %vm501, %v2144, 0
        %v2252 = vsel %vm501, %v2145, 0
        %2254 = vmatpush.bf16.msra.mxu0 0
        %2255 = vmatpush.bf16.msra.mxu0 0
        %2256 = vmatpush.bf16.msra.mxu0 0
        %2257 = vmatpush.bf16.msra.mxu0 0
        %2258 = vmatpush.bf16.msra.mxu0 0
        %2259 = vmatpush.bf16.msra.mxu0 0
        %2260 = vmatpush.bf16.msra.mxu0 %v2155
        %2261 = vmatpush.bf16.msra.mxu0 %v2154
        %2262 = vmatmul.bf16.gmra.mxu0 %v2159
        %v2263 = vpop.f32.mrf.mxu0
        %v2264 = vadd.f32 0.0, %v2263
        %v2265 = vpop.f32.mrf.mxu0
        %v2266 = vadd.f32 0.0, %v2265
        %2267 = vmatmul.bf16.gmra.mxu0 %v2162
        %v2268 = vpop.f32.mrf.mxu0
        %v2269 = vadd.f32 0.0, %v2268
        %v2270 = vpop.f32.mrf.mxu0
        %v2271 = vadd.f32 0.0, %v2270
        %2272 = vmatmul.bf16.gmra.mxu0 %v2165
        %v2273 = vpop.f32.mrf.mxu0
        %v2274 = vadd.f32 0.0, %v2273
        %v2275 = vpop.f32.mrf.mxu0
        %v2276 = vadd.f32 0.0, %v2275
        %2277 = vmatmul.bf16.gmra.mxu0 %v2168
        %v2278 = vpop.f32.mrf.mxu0
        %v2279 = vadd.f32 0.0, %v2278
        %v2280 = vpop.f32.mrf.mxu0
        %v2281 = vadd.f32 0.0, %v2280
        %2282 = vmatmul.bf16.gmra.mxu0 %v2171
        %v2283 = vpop.f32.mrf.mxu0
        %v2284 = vadd.f32 0.0, %v2283
        %v2285 = vpop.f32.mrf.mxu0
        %v2286 = vadd.f32 0.0, %v2285
        %2287 = vmatmul.bf16.gmra.mxu0 %v2174
        %v2288 = vpop.f32.mrf.mxu0
        %v2289 = vadd.f32 0.0, %v2288
        %v2290 = vpop.f32.mrf.mxu0
        %v2291 = vadd.f32 0.0, %v2290
        %2292 = vmatmul.bf16.gmra.mxu0 %v2177
        %v2293 = vpop.f32.mrf.mxu0
        %v2294 = vadd.f32 0.0, %v2293
        %v2295 = vpop.f32.mrf.mxu0
        %v2296 = vadd.f32 0.0, %v2295
        %2297 = vmatmul.bf16.gmra.mxu0 %v2180
        %v2298 = vpop.f32.mrf.mxu0
        %v2299 = vadd.f32 0.0, %v2298
        %v2300 = vpop.f32.mrf.mxu0
        %v2301 = vadd.f32 0.0, %v2300
        %2302 = vmatmul.bf16.gmra.mxu0 %v2183
        %v2303 = vpop.f32.mrf.mxu0
        %v2304 = vadd.f32 0.0, %v2303
        %v2305 = vpop.f32.mrf.mxu0
        %v2306 = vadd.f32 0.0, %v2305
        %2307 = vmatmul.bf16.gmra.mxu0 %v2186
        %v2308 = vpop.f32.mrf.mxu0
        %v2309 = vadd.f32 0.0, %v2308
        %v2310 = vpop.f32.mrf.mxu0
        %v2311 = vadd.f32 0.0, %v2310
        %2312 = vmatmul.bf16.gmra.mxu0 %v2189
        %v2313 = vpop.f32.mrf.mxu0
        %v2314 = vadd.f32 0.0, %v2313
        %v2315 = vpop.f32.mrf.mxu0
        %v2316 = vadd.f32 0.0, %v2315
        %2317 = vmatmul.bf16.gmra.mxu0 %v2192
        %v2318 = vpop.f32.mrf.mxu0
        %v2319 = vadd.f32 0.0, %v2318
        %v2320 = vpop.f32.mrf.mxu0
        %v2321 = vadd.f32 0.0, %v2320
        %2322 = vmatmul.bf16.gmra.mxu0 %v2195
        %v2323 = vpop.f32.mrf.mxu0
        %v2324 = vadd.f32 0.0, %v2323
        %v2325 = vpop.f32.mrf.mxu0
        %v2326 = vadd.f32 0.0, %v2325
        %2327 = vmatmul.bf16.gmra.mxu0 %v2198
        %v2328 = vpop.f32.mrf.mxu0
        %v2329 = vadd.f32 0.0, %v2328
        %v2330 = vpop.f32.mrf.mxu0
        %v2331 = vadd.f32 0.0, %v2330
        %2332 = vmatmul.bf16.gmra.mxu0 %v2201
        %v2333 = vpop.f32.mrf.mxu0
        %v2334 = vadd.f32 0.0, %v2333
        %v2335 = vpop.f32.mrf.mxu0
        %v2336 = vadd.f32 0.0, %v2335
        %2337 = vmatmul.bf16.gmra.mxu0 %v2204
        %v2338 = vpop.f32.mrf.mxu0
        %v2339 = vadd.f32 0.0, %v2338
        %v2340 = vpop.f32.mrf.mxu0
        %v2341 = vadd.f32 0.0, %v2340
        %2342 = vmatmul.bf16.gmra.mxu0 %v2207
        %v2343 = vpop.f32.mrf.mxu0
        %v2344 = vadd.f32 0.0, %v2343
        %v2345 = vpop.f32.mrf.mxu0
        %v2346 = vadd.f32 0.0, %v2345
        %2347 = vmatmul.bf16.gmra.mxu0 %v2210
        %v2348 = vpop.f32.mrf.mxu0
        %v2349 = vadd.f32 0.0, %v2348
        %v2350 = vpop.f32.mrf.mxu0
        %v2351 = vadd.f32 0.0, %v2350
        %2352 = vmatmul.bf16.gmra.mxu0 %v2213
        %v2353 = vpop.f32.mrf.mxu0
        %v2354 = vadd.f32 0.0, %v2353
        %v2355 = vpop.f32.mrf.mxu0
        %v2356 = vadd.f32 0.0, %v2355
        %2357 = vmatmul.bf16.gmra.mxu0 %v2216
        %v2358 = vpop.f32.mrf.mxu0
        %v2359 = vadd.f32 0.0, %v2358
        %v2360 = vpop.f32.mrf.mxu0
        %v2361 = vadd.f32 0.0, %v2360
        %2362 = vmatmul.bf16.gmra.mxu0 %v2219
        %v2363 = vpop.f32.mrf.mxu0
        %v2364 = vadd.f32 0.0, %v2363
        %v2365 = vpop.f32.mrf.mxu0
        %v2366 = vadd.f32 0.0, %v2365
        %2367 = vmatmul.bf16.gmra.mxu0 %v2222
        %v2368 = vpop.f32.mrf.mxu0
        %v2369 = vadd.f32 0.0, %v2368
        %v2370 = vpop.f32.mrf.mxu0
        %v2371 = vadd.f32 0.0, %v2370
        %2372 = vmatmul.bf16.gmra.mxu0 %v2225
        %v2373 = vpop.f32.mrf.mxu0
        %v2374 = vadd.f32 0.0, %v2373
        %v2375 = vpop.f32.mrf.mxu0
        %v2376 = vadd.f32 0.0, %v2375
        %2377 = vmatmul.bf16.gmra.mxu0 %v2228
        %v2378 = vpop.f32.mrf.mxu0
        %v2379 = vadd.f32 0.0, %v2378
        %v2380 = vpop.f32.mrf.mxu0
        %v2381 = vadd.f32 0.0, %v2380
        %2382 = vmatmul.bf16.gmra.mxu0 %v2231
        %v2383 = vpop.f32.mrf.mxu0
        %v2384 = vadd.f32 0.0, %v2383
        %v2385 = vpop.f32.mrf.mxu0
        %v2386 = vadd.f32 0.0, %v2385
        %2387 = vmatmul.bf16.gmra.mxu0 %v2234
        %v2388 = vpop.f32.mrf.mxu0
        %v2389 = vadd.f32 0.0, %v2388
        %v2390 = vpop.f32.mrf.mxu0
        %v2391 = vadd.f32 0.0, %v2390
        %2392 = vmatmul.bf16.gmra.mxu0 %v2237
        %v2393 = vpop.f32.mrf.mxu0
        %v2394 = vadd.f32 0.0, %v2393
        %v2395 = vpop.f32.mrf.mxu0
        %v2396 = vadd.f32 0.0, %v2395
        %2397 = vmatmul.bf16.gmra.mxu0 %v2240
        %v2398 = vpop.f32.mrf.mxu0
        %v2399 = vadd.f32 0.0, %v2398
        %v2400 = vpop.f32.mrf.mxu0
        %v2401 = vadd.f32 0.0, %v2400
        %2402 = vmatmul.bf16.gmra.mxu0 %v2243
        %v2403 = vpop.f32.mrf.mxu0
        %v2404 = vadd.f32 0.0, %v2403
        %v2405 = vpop.f32.mrf.mxu0
        %v2406 = vadd.f32 0.0, %v2405
        %2407 = vmatmul.bf16.gmra.mxu0 %v2246
        %v2408 = vpop.f32.mrf.mxu0
        %v2409 = vadd.f32 0.0, %v2408
        %v2410 = vpop.f32.mrf.mxu0
        %v2411 = vadd.f32 0.0, %v2410
        %2412 = vmatmul.bf16.gmra.mxu0 %v2249
        %v2413 = vpop.f32.mrf.mxu0
        %v2414 = vadd.f32 0.0, %v2413
        %v2415 = vpop.f32.mrf.mxu0
        %v2416 = vadd.f32 0.0, %v2415
        %2417 = vmatmul.bf16.gmra.mxu0 %v2252
        %v2418 = vpop.f32.mrf.mxu0
        %v2419 = vadd.f32 0.0, %v2418
        %v2420 = vpop.f32.mrf.mxu0
        %v2421 = vadd.f32 0.0, %v2420
        %2422 = vdwg.mxu0
        %v2423 = vmul.f32 %v2264, %v768
        %v2424 = vmul.f32 %v2266, %v768
        %v2425 = vmul.f32 %v2269, %v768
        %v2426 = vmul.f32 %v2271, %v768
        %v2427 = vmul.f32 %v2274, %v768
        %v2428 = vmul.f32 %v2276, %v768
        %v2429 = vmul.f32 %v2279, %v768
        %v2430 = vmul.f32 %v2281, %v768
        %v2431 = vmul.f32 %v2284, %v768
        %v2432 = vmul.f32 %v2286, %v768
        %v2433 = vmul.f32 %v2289, %v768
        %v2434 = vmul.f32 %v2291, %v768
        %v2435 = vmul.f32 %v2294, %v768
        %v2436 = vmul.f32 %v2296, %v768
        %v2437 = vmul.f32 %v2299, %v768
        %v2438 = vmul.f32 %v2301, %v768
        %v2439 = vmul.f32 %v2304, %v768
        %v2440 = vmul.f32 %v2306, %v768
        %v2441 = vmul.f32 %v2309, %v768
        %v2442 = vmul.f32 %v2311, %v768
        %v2443 = vmul.f32 %v2314, %v768
        %v2444 = vmul.f32 %v2316, %v768
        %v2445 = vmul.f32 %v2319, %v768
        %v2446 = vmul.f32 %v2321, %v768
        %v2447 = vmul.f32 %v2324, %v768
        %v2448 = vmul.f32 %v2326, %v768
        %v2449 = vmul.f32 %v2329, %v768
        %v2450 = vmul.f32 %v2331, %v768
        %v2451 = vmul.f32 %v2334, %v768
        %v2452 = vmul.f32 %v2336, %v768
        %v2453 = vmul.f32 %v2339, %v768
        %v2454 = vmul.f32 %v2341, %v768
        %v2455 = vmul.f32 %v2344, %v768
        %v2456 = vmul.f32 %v2346, %v768
        %v2457 = vmul.f32 %v2349, %v768
        %v2458 = vmul.f32 %v2351, %v768
        %v2459 = vmul.f32 %v2354, %v768
        %v2460 = vmul.f32 %v2356, %v768
        %v2461 = vmul.f32 %v2359, %v768
        %v2462 = vmul.f32 %v2361, %v768
        %v2463 = vmul.f32 %v2364, %v768
        %v2464 = vmul.f32 %v2366, %v768
        %v2465 = vmul.f32 %v2369, %v768
        %v2466 = vmul.f32 %v2371, %v768
        %v2467 = vmul.f32 %v2374, %v768
        %v2468 = vmul.f32 %v2376, %v768
        %v2469 = vmul.f32 %v2379, %v768
        %v2470 = vmul.f32 %v2381, %v768
        %v2471 = vmul.f32 %v2384, %v768
        %v2472 = vmul.f32 %v2386, %v768
        %v2473 = vmul.f32 %v2389, %v768
        %v2474 = vmul.f32 %v2391, %v768
        %v2475 = vmul.f32 %v2394, %v768
        %v2476 = vmul.f32 %v2396, %v768
        %v2477 = vmul.f32 %v2399, %v768
        %v2478 = vmul.f32 %v2401, %v768
        %v2479 = vmul.f32 %v2404, %v768
        %v2480 = vmul.f32 %v2406, %v768
        %v2481 = vmul.f32 %v2409, %v768
        %v2482 = vmul.f32 %v2411, %v768
        %v2483 = vmul.f32 %v2414, %v768
        %v2484 = vmul.f32 %v2416, %v768
        %v2485 = vmul.f32 %v2419, %v768
        %v2486 = vmul.f32 %v2421, %v768
        %v2487 = vadd.f32 %v2423, %v835
        %v2488 = vadd.f32 %v2424, %v835
        %v2489 = vadd.f32 %v2425, %v835
        %v2490 = vadd.f32 %v2426, %v835
        %v2491 = vadd.f32 %v2427, %v835
        %v2492 = vadd.f32 %v2428, %v835
        %v2493 = vadd.f32 %v2429, %v835
        %v2494 = vadd.f32 %v2430, %v835
        %v2495 = vadd.f32 %v2431, %v835
        %v2496 = vadd.f32 %v2432, %v835
        %v2497 = vadd.f32 %v2433, %v835
        %v2498 = vadd.f32 %v2434, %v835
        %v2499 = vadd.f32 %v2435, %v835
        %v2500 = vadd.f32 %v2436, %v835
        %v2501 = vadd.f32 %v2437, %v835
        %v2502 = vadd.f32 %v2438, %v835
        %v2503 = vadd.f32 %v2439, %v835
        %v2504 = vadd.f32 %v2440, %v835
        %v2505 = vadd.f32 %v2441, %v835
        %v2506 = vadd.f32 %v2442, %v835
        %v2507 = vadd.f32 %v2443, %v835
        %v2508 = vadd.f32 %v2444, %v835
        %v2509 = vadd.f32 %v2445, %v835
        %v2510 = vadd.f32 %v2446, %v835
        %v2511 = vadd.f32 %v2447, %v835
        %v2512 = vadd.f32 %v2448, %v835
        %v2513 = vadd.f32 %v2449, %v835
        %v2514 = vadd.f32 %v2450, %v835
        %v2515 = vadd.f32 %v2451, %v835
        %v2516 = vadd.f32 %v2452, %v835
        %v2517 = vadd.f32 %v2453, %v835
        %v2518 = vadd.f32 %v2454, %v835
        %v2519 = vadd.f32 %v2455, %v835
        %v2520 = vadd.f32 %v2456, %v835
        %v2521 = vadd.f32 %v2457, %v835
        %v2522 = vadd.f32 %v2458, %v835
        %v2523 = vadd.f32 %v2459, %v835
        %v2524 = vadd.f32 %v2460, %v835
        %v2525 = vadd.f32 %v2461, %v835
        %v2526 = vadd.f32 %v2462, %v835
        %v2527 = vadd.f32 %v2463, %v835
        %v2528 = vadd.f32 %v2464, %v835
        %v2529 = vadd.f32 %v2465, %v835
        %v2530 = vadd.f32 %v2466, %v835
        %v2531 = vadd.f32 %v2467, %v835
        %v2532 = vadd.f32 %v2468, %v835
        %v2533 = vadd.f32 %v2469, %v835
        %v2534 = vadd.f32 %v2470, %v835
        %v2535 = vadd.f32 %v2471, %v835
        %v2536 = vadd.f32 %v2472, %v835
        %v2537 = vadd.f32 %v2473, %v835
        %v2538 = vadd.f32 %v2474, %v835
        %v2539 = vadd.f32 %v2475, %v835
        %v2540 = vadd.f32 %v2476, %v835
        %v2541 = vadd.f32 %v2477, %v835
        %v2542 = vadd.f32 %v2478, %v835
        %v2543 = vadd.f32 %v2479, %v835
        %v2544 = vadd.f32 %v2480, %v835
        %v2545 = vadd.f32 %v2481, %v835
        %v2546 = vadd.f32 %v2482, %v835
        %v2547 = vadd.f32 %v2483, %v835
        %v2548 = vadd.f32 %v2484, %v835
        %v2549 = vadd.f32 %v2485, %v835
        %v2550 = vadd.f32 %v2486, %v835
        %v2551 = vmax.f32 %v2487, 0.0
        %v2552 = vmax.f32 %v2488, 0.0
        %v2553 = vmax.f32 %v2489, 0.0
        %v2554 = vmax.f32 %v2490, 0.0
        %v2555 = vmax.f32 %v2491, 0.0
        %v2556 = vmax.f32 %v2492, 0.0
        %v2557 = vmax.f32 %v2493, 0.0
        %v2558 = vmax.f32 %v2494, 0.0
        %v2559 = vmax.f32 %v2495, 0.0
        %v2560 = vmax.f32 %v2496, 0.0
        %v2561 = vmax.f32 %v2497, 0.0
        %v2562 = vmax.f32 %v2498, 0.0
        %v2563 = vmax.f32 %v2499, 0.0
        %v2564 = vmax.f32 %v2500, 0.0
        %v2565 = vmax.f32 %v2501, 0.0
        %v2566 = vmax.f32 %v2502, 0.0
        %v2567 = vmax.f32 %v2503, 0.0
        %v2568 = vmax.f32 %v2504, 0.0
        %v2569 = vmax.f32 %v2505, 0.0
        %v2570 = vmax.f32 %v2506, 0.0
        %v2571 = vmax.f32 %v2507, 0.0
        %v2572 = vmax.f32 %v2508, 0.0
        %v2573 = vmax.f32 %v2509, 0.0
        %v2574 = vmax.f32 %v2510, 0.0
        %v2575 = vmax.f32 %v2511, 0.0
        %v2576 = vmax.f32 %v2512, 0.0
        %v2577 = vmax.f32 %v2513, 0.0
        %v2578 = vmax.f32 %v2514, 0.0
        %v2579 = vmax.f32 %v2515, 0.0
        %v2580 = vmax.f32 %v2516, 0.0
        %v2581 = vmax.f32 %v2517, 0.0
        %v2582 = vmax.f32 %v2518, 0.0
        %v2583 = vmax.f32 %v2519, 0.0
        %v2584 = vmax.f32 %v2520, 0.0
        %v2585 = vmax.f32 %v2521, 0.0
        %v2586 = vmax.f32 %v2522, 0.0
        %v2587 = vmax.f32 %v2523, 0.0
        %v2588 = vmax.f32 %v2524, 0.0
        %v2589 = vmax.f32 %v2525, 0.0
        %v2590 = vmax.f32 %v2526, 0.0
        %v2591 = vmax.f32 %v2527, 0.0
        %v2592 = vmax.f32 %v2528, 0.0
        %v2593 = vmax.f32 %v2529, 0.0
        %v2594 = vmax.f32 %v2530, 0.0
        %v2595 = vmax.f32 %v2531, 0.0
        %v2596 = vmax.f32 %v2532, 0.0
        %v2597 = vmax.f32 %v2533, 0.0
        %v2598 = vmax.f32 %v2534, 0.0
        %v2599 = vmax.f32 %v2535, 0.0
        %v2600 = vmax.f32 %v2536, 0.0
        %v2601 = vmax.f32 %v2537, 0.0
        %v2602 = vmax.f32 %v2538, 0.0
        %v2603 = vmax.f32 %v2539, 0.0
        %v2604 = vmax.f32 %v2540, 0.0
        %v2605 = vmax.f32 %v2541, 0.0
        %v2606 = vmax.f32 %v2542, 0.0
        %v2607 = vmax.f32 %v2543, 0.0
        %v2608 = vmax.f32 %v2544, 0.0
        %v2609 = vmax.f32 %v2545, 0.0
        %v2610 = vmax.f32 %v2546, 0.0
        %v2611 = vmax.f32 %v2547, 0.0
        %v2612 = vmax.f32 %v2548, 0.0
        %v2613 = vmax.f32 %v2549, 0.0
        %v2614 = vmax.f32 %v2550, 0.0
        %v2615 = vpack.c.bf16 %v2551, %v2551
        %v2616 = vpack.c.bf16 %v2552, %v2552
        %v2617 = vpack.c.bf16 %v2553, %v2553
        %v2618 = vpack.c.bf16 %v2554, %v2554
        %v2619 = vpack.c.bf16 %v2555, %v2555
        %v2620 = vpack.c.bf16 %v2556, %v2556
        %v2621 = vpack.c.bf16 %v2557, %v2557
        %v2622 = vpack.c.bf16 %v2558, %v2558
        %v2623 = vpack.c.bf16 %v2559, %v2559
        %v2624 = vpack.c.bf16 %v2560, %v2560
        %v2625 = vpack.c.bf16 %v2561, %v2561
        %v2626 = vpack.c.bf16 %v2562, %v2562
        %v2627 = vpack.c.bf16 %v2563, %v2563
        %v2628 = vpack.c.bf16 %v2564, %v2564
        %v2629 = vpack.c.bf16 %v2565, %v2565
        %v2630 = vpack.c.bf16 %v2566, %v2566
        %v2631 = vpack.c.bf16 %v2567, %v2567
        %v2632 = vpack.c.bf16 %v2568, %v2568
        %v2633 = vpack.c.bf16 %v2569, %v2569
        %v2634 = vpack.c.bf16 %v2570, %v2570
        %v2635 = vpack.c.bf16 %v2571, %v2571
        %v2636 = vpack.c.bf16 %v2572, %v2572
        %v2637 = vpack.c.bf16 %v2573, %v2573
        %v2638 = vpack.c.bf16 %v2574, %v2574
        %v2639 = vpack.c.bf16 %v2575, %v2575
        %v2640 = vpack.c.bf16 %v2576, %v2576
        %v2641 = vpack.c.bf16 %v2577, %v2577
        %v2642 = vpack.c.bf16 %v2578, %v2578
        %v2643 = vpack.c.bf16 %v2579, %v2579
        %v2644 = vpack.c.bf16 %v2580, %v2580
        %v2645 = vpack.c.bf16 %v2581, %v2581
        %v2646 = vpack.c.bf16 %v2582, %v2582
        %v2647 = vpack.c.bf16 %v2583, %v2583
        %v2648 = vpack.c.bf16 %v2584, %v2584
        %v2649 = vpack.c.bf16 %v2585, %v2585
        %v2650 = vpack.c.bf16 %v2586, %v2586
        %v2651 = vpack.c.bf16 %v2587, %v2587
        %v2652 = vpack.c.bf16 %v2588, %v2588
        %v2653 = vpack.c.bf16 %v2589, %v2589
        %v2654 = vpack.c.bf16 %v2590, %v2590
        %v2655 = vpack.c.bf16 %v2591, %v2591
        %v2656 = vpack.c.bf16 %v2592, %v2592
        %v2657 = vpack.c.bf16 %v2593, %v2593
        %v2658 = vpack.c.bf16 %v2594, %v2594
        %v2659 = vpack.c.bf16 %v2595, %v2595
        %v2660 = vpack.c.bf16 %v2596, %v2596
        %v2661 = vpack.c.bf16 %v2597, %v2597
        %v2662 = vpack.c.bf16 %v2598, %v2598
        %v2663 = vpack.c.bf16 %v2599, %v2599
        %v2664 = vpack.c.bf16 %v2600, %v2600
        %v2665 = vpack.c.bf16 %v2601, %v2601
        %v2666 = vpack.c.bf16 %v2602, %v2602
        %v2667 = vpack.c.bf16 %v2603, %v2603
        %v2668 = vpack.c.bf16 %v2604, %v2604
        %v2669 = vpack.c.bf16 %v2605, %v2605
        %v2670 = vpack.c.bf16 %v2606, %v2606
        %v2671 = vpack.c.bf16 %v2607, %v2607
        %v2672 = vpack.c.bf16 %v2608, %v2608
        %v2673 = vpack.c.bf16 %v2609, %v2609
        %v2674 = vpack.c.bf16 %v2610, %v2610
        %v2675 = vpack.c.bf16 %v2611, %v2611
        %v2676 = vpack.c.bf16 %v2612, %v2612
        %v2677 = vpack.c.bf16 %v2613, %v2613
        %v2678 = vpack.c.bf16 %v2614, %v2614
        %2679 = vst [vmem:[%s240 + $0x200] sm:$0xf] %v2615
        %2680 = vst [vmem:[%s240 + $0x204] sm:$0xf] %v2616
        %2681 = vst [vmem:[%s240 + $0x208] sm:$0xf] %v2617
        %2682 = vst [vmem:[%s240 + $0x20c] sm:$0xf] %v2618
        %2683 = vst [vmem:[%s240 + $0x210] sm:$0xf] %v2619
        %2684 = vst [vmem:[%s240 + $0x214] sm:$0xf] %v2620
        %2685 = vst [vmem:[%s240 + $0x218] sm:$0xf] %v2621
        %2686 = vst [vmem:[%s240 + $0x21c] sm:$0xf] %v2622
        %2687 = vst [vmem:[%s240 + $0x220] sm:$0xf] %v2623
        %2688 = vst [vmem:[%s240 + $0x224] sm:$0xf] %v2624
        %2689 = vst [vmem:[%s240 + $0x228] sm:$0xf] %v2625
        %2690 = vst [vmem:[%s240 + $0x22c] sm:$0xf] %v2626
        %2691 = vst [vmem:[%s240 + $0x230] sm:$0xf] %v2627
        %2692 = vst [vmem:[%s240 + $0x234] sm:$0xf] %v2628
        %2693 = vst [vmem:[%s240 + $0x238] sm:$0xf] %v2629
        %2694 = vst [vmem:[%s240 + $0x23c] sm:$0xf] %v2630
        %2695 = vst [vmem:[%s240 + $0x240] sm:$0xf] %v2631
        %2696 = vst [vmem:[%s240 + $0x244] sm:$0xf] %v2632
        %2697 = vst [vmem:[%s240 + $0x248] sm:$0xf] %v2633
        %2698 = vst [vmem:[%s240 + $0x24c] sm:$0xf] %v2634
        %2699 = vst [vmem:[%s240 + $0x250] sm:$0xf] %v2635
        %2700 = vst [vmem:[%s240 + $0x254] sm:$0xf] %v2636
        %2701 = vst [vmem:[%s240 + $0x258] sm:$0xf] %v2637
        %2702 = vst [vmem:[%s240 + $0x25c] sm:$0xf] %v2638
        %2703 = vst [vmem:[%s240 + $0x260] sm:$0xf] %v2639
        %2704 = vst [vmem:[%s240 + $0x264] sm:$0xf] %v2640
        %2705 = vst [vmem:[%s240 + $0x268] sm:$0xf] %v2641
        %2706 = vst [vmem:[%s240 + $0x26c] sm:$0xf] %v2642
        %2707 = vst [vmem:[%s240 + $0x270] sm:$0xf] %v2643
        %2708 = vst [vmem:[%s240 + $0x274] sm:$0xf] %v2644
        %2709 = vst [vmem:[%s240 + $0x278] sm:$0xf] %v2645
        %2710 = vst [vmem:[%s240 + $0x27c] sm:$0xf] %v2646
        %2711 = vst [vmem:[%s240 + $0x280] sm:$0xf] %v2647
        %2712 = vst [vmem:[%s240 + $0x284] sm:$0xf] %v2648
        %2713 = vst [vmem:[%s240 + $0x288] sm:$0xf] %v2649
        %2714 = vst [vmem:[%s240 + $0x28c] sm:$0xf] %v2650
        %2715 = vst [vmem:[%s240 + $0x290] sm:$0xf] %v2651
        %2716 = vst [vmem:[%s240 + $0x294] sm:$0xf] %v2652
        %2717 = vst [vmem:[%s240 + $0x298] sm:$0xf] %v2653
        %2718 = vst [vmem:[%s240 + $0x29c] sm:$0xf] %v2654
        %2719 = vst [vmem:[%s240 + $0x2a0] sm:$0xf] %v2655
        %2720 = vst [vmem:[%s240 + $0x2a4] sm:$0xf] %v2656
        %2721 = vst [vmem:[%s240 + $0x2a8] sm:$0xf] %v2657
        %2722 = vst [vmem:[%s240 + $0x2ac] sm:$0xf] %v2658
        %2723 = vst [vmem:[%s240 + $0x2b0] sm:$0xf] %v2659
        %2724 = vst [vmem:[%s240 + $0x2b4] sm:$0xf] %v2660
        %2725 = vst [vmem:[%s240 + $0x2b8] sm:$0xf] %v2661
        %2726 = vst [vmem:[%s240 + $0x2bc] sm:$0xf] %v2662
        %2727 = vst [vmem:[%s240 + $0x2c0] sm:$0xf] %v2663
        %2728 = vst [vmem:[%s240 + $0x2c4] sm:$0xf] %v2664
        %2729 = vst [vmem:[%s240 + $0x2c8] sm:$0xf] %v2665
        %2730 = vst [vmem:[%s240 + $0x2cc] sm:$0xf] %v2666
        %2731 = vst [vmem:[%s240 + $0x2d0] sm:$0xf] %v2667
        %2732 = vst [vmem:[%s240 + $0x2d4] sm:$0xf] %v2668
        %2733 = vst [vmem:[%s240 + $0x2d8] sm:$0xf] %v2669
        %2734 = vst [vmem:[%s240 + $0x2dc] sm:$0xf] %v2670
        %2735 = vst [vmem:[%s240 + $0x2e0] sm:$0xf] %v2671
        %2736 = vst [vmem:[%s240 + $0x2e4] sm:$0xf] %v2672
        %2737 = vst [vmem:[%s240 + $0x2e8] sm:$0xf] %v2673
        %2738 = vst [vmem:[%s240 + $0x2ec] sm:$0xf] %v2674
        %2739 = vst [vmem:[%s240 + $0x2f0] sm:$0xf] %v2675
        %2740 = vst [vmem:[%s240 + $0x2f4] sm:$0xf] %v2676
        %2741 = vst [vmem:[%s240 + $0x2f8] sm:$0xf] %v2677
        %2742 = vst [vmem:[%s240 + $0x2fc] sm:$0xf] %v2678
        %v2743 = vld [vmem:[%s245 + $0x300] sm:$0xf]
        %v2744 = vld [vmem:[%s245 + $0x304] sm:$0xf]
        %v2745 = vld [vmem:[%s245 + $0x308] sm:$0xf]
        %v2746 = vld [vmem:[%s245 + $0x30c] sm:$0xf]
        %v2747 = vld [vmem:[%s245 + $0x310] sm:$0xf]
        %v2748 = vld [vmem:[%s245 + $0x314] sm:$0xf]
        %v2749 = vld [vmem:[%s245 + $0x318] sm:$0xf]
        %v2750 = vld [vmem:[%s245 + $0x31c] sm:$0xf]
        %v2751 = vld [vmem:[%s245 + $0x320] sm:$0xf]
        %v2752 = vld [vmem:[%s245 + $0x324] sm:$0xf]
        %v2753 = vld [vmem:[%s245 + $0x328] sm:$0xf]
        %v2754 = vld [vmem:[%s245 + $0x32c] sm:$0xf]
        %v2755 = vld [vmem:[%s245 + $0x330] sm:$0xf]
        %v2756 = vld [vmem:[%s245 + $0x334] sm:$0xf]
        %v2757 = vld [vmem:[%s245 + $0x338] sm:$0xf]
        %v2758 = vld [vmem:[%s245 + $0x33c] sm:$0xf]
        %v2759 = vld [vmem:[%s245 + $0x340] sm:$0xf]
        %v2760 = vld [vmem:[%s245 + $0x344] sm:$0xf]
        %v2761 = vld [vmem:[%s245 + $0x348] sm:$0xf]
        %v2762 = vld [vmem:[%s245 + $0x34c] sm:$0xf]
        %v2763 = vld [vmem:[%s245 + $0x350] sm:$0xf]
        %v2764 = vld [vmem:[%s245 + $0x354] sm:$0xf]
        %v2765 = vld [vmem:[%s245 + $0x358] sm:$0xf]
        %v2766 = vld [vmem:[%s245 + $0x35c] sm:$0xf]
        %v2767 = vld [vmem:[%s245 + $0x360] sm:$0xf]
        %v2768 = vld [vmem:[%s245 + $0x364] sm:$0xf]
        %v2769 = vld [vmem:[%s245 + $0x368] sm:$0xf]
        %v2770 = vld [vmem:[%s245 + $0x36c] sm:$0xf]
        %v2771 = vld [vmem:[%s245 + $0x370] sm:$0xf]
        %v2772 = vld [vmem:[%s245 + $0x374] sm:$0xf]
        %v2773 = vld [vmem:[%s245 + $0x378] sm:$0xf]
        %v2774 = vld [vmem:[%s245 + $0x37c] sm:$0xf]
        %v2775 = vld [vmem:[%s245 + $0x380] sm:$0xf]
        %v2776 = vld [vmem:[%s245 + $0x384] sm:$0xf]
        %v2777 = vld [vmem:[%s245 + $0x388] sm:$0xf]
        %v2778 = vld [vmem:[%s245 + $0x38c] sm:$0xf]
        %v2779 = vld [vmem:[%s245 + $0x390] sm:$0xf]
        %v2780 = vld [vmem:[%s245 + $0x394] sm:$0xf]
        %v2781 = vld [vmem:[%s245 + $0x398] sm:$0xf]
        %v2782 = vld [vmem:[%s245 + $0x39c] sm:$0xf]
        %v2783 = vld [vmem:[%s245 + $0x3a0] sm:$0xf]
        %v2784 = vld [vmem:[%s245 + $0x3a4] sm:$0xf]
        %v2785 = vld [vmem:[%s245 + $0x3a8] sm:$0xf]
        %v2786 = vld [vmem:[%s245 + $0x3ac] sm:$0xf]
        %v2787 = vld [vmem:[%s245 + $0x3b0] sm:$0xf]
        %v2788 = vld [vmem:[%s245 + $0x3b4] sm:$0xf]
        %v2789 = vld [vmem:[%s245 + $0x3b8] sm:$0xf]
        %v2790 = vld [vmem:[%s245 + $0x3bc] sm:$0xf]
        %v2791 = vld [vmem:[%s245 + $0x3c0] sm:$0xf]
        %v2792 = vld [vmem:[%s245 + $0x3c4] sm:$0xf]
        %v2793 = vld [vmem:[%s245 + $0x3c8] sm:$0xf]
        %v2794 = vld [vmem:[%s245 + $0x3cc] sm:$0xf]
        %v2795 = vld [vmem:[%s245 + $0x3d0] sm:$0xf]
        %v2796 = vld [vmem:[%s245 + $0x3d4] sm:$0xf]
        %v2797 = vld [vmem:[%s245 + $0x3d8] sm:$0xf]
        %v2798 = vld [vmem:[%s245 + $0x3dc] sm:$0xf]
        %v2799 = vld [vmem:[%s245 + $0x3e0] sm:$0xf]
        %v2800 = vld [vmem:[%s245 + $0x3e4] sm:$0xf]
        %v2801 = vld [vmem:[%s245 + $0x3e8] sm:$0xf]
        %v2802 = vld [vmem:[%s245 + $0x3ec] sm:$0xf]
        %v2803 = vld [vmem:[%s245 + $0x3f0] sm:$0xf]
        %v2804 = vld [vmem:[%s245 + $0x3f4] sm:$0xf]
        %v2805 = vld [vmem:[%s245 + $0x3f8] sm:$0xf]
        %v2806 = vld [vmem:[%s245 + $0x3fc] sm:$0xf]
        %v2807 = vld [vmem:[%s250] sm:$0xf]
        %v2808 = vld [vmem:[%s250 + $0x4] sm:$0xf]
        %v2809 = vld [vmem:[%s250 + $0x8] sm:$0xf]
        %v2810 = vld [vmem:[%s250 + $0xc] sm:$0xf]
        %v2875 = vunpack.c.l.b16 %v2743
        %v2876 = vunpack.c.l.b16 %v2744
        %v2877 = vunpack.c.l.b16 %v2745
        %v2878 = vunpack.c.l.b16 %v2746
        %v2879 = vunpack.c.l.b16 %v2747
        %v2880 = vunpack.c.l.b16 %v2748
        %v2881 = vunpack.c.l.b16 %v2749
        %v2882 = vunpack.c.l.b16 %v2750
        %v2883 = vunpack.c.l.b16 %v2751
        %v2884 = vunpack.c.l.b16 %v2752
        %v2885 = vunpack.c.l.b16 %v2753
        %v2886 = vunpack.c.l.b16 %v2754
        %v2887 = vunpack.c.l.b16 %v2755
        %v2888 = vunpack.c.l.b16 %v2756
        %v2889 = vunpack.c.l.b16 %v2757
        %v2890 = vunpack.c.l.b16 %v2758
        %v2891 = vunpack.c.l.b16 %v2759
        %v2892 = vunpack.c.l.b16 %v2760
        %v2893 = vunpack.c.l.b16 %v2761
        %v2894 = vunpack.c.l.b16 %v2762
        %v2895 = vunpack.c.l.b16 %v2763
        %v2896 = vunpack.c.l.b16 %v2764
        %v2897 = vunpack.c.l.b16 %v2765
        %v2898 = vunpack.c.l.b16 %v2766
        %v2899 = vunpack.c.l.b16 %v2767
        %v2900 = vunpack.c.l.b16 %v2768
        %v2901 = vunpack.c.l.b16 %v2769
        %v2902 = vunpack.c.l.b16 %v2770
        %v2903 = vunpack.c.l.b16 %v2771
        %v2904 = vunpack.c.l.b16 %v2772
        %v2905 = vunpack.c.l.b16 %v2773
        %v2906 = vunpack.c.l.b16 %v2774
        %v2907 = vunpack.c.l.b16 %v2775
        %v2908 = vunpack.c.l.b16 %v2776
        %v2909 = vunpack.c.l.b16 %v2777
        %v2910 = vunpack.c.l.b16 %v2778
        %v2911 = vunpack.c.l.b16 %v2779
        %v2912 = vunpack.c.l.b16 %v2780
        %v2913 = vunpack.c.l.b16 %v2781
        %v2914 = vunpack.c.l.b16 %v2782
        %v2915 = vunpack.c.l.b16 %v2783
        %v2916 = vunpack.c.l.b16 %v2784
        %v2917 = vunpack.c.l.b16 %v2785
        %v2918 = vunpack.c.l.b16 %v2786
        %v2919 = vunpack.c.l.b16 %v2787
        %v2920 = vunpack.c.l.b16 %v2788
        %v2921 = vunpack.c.l.b16 %v2789
        %v2922 = vunpack.c.l.b16 %v2790
        %v2923 = vunpack.c.l.b16 %v2791
        %v2924 = vunpack.c.l.b16 %v2792
        %v2925 = vunpack.c.l.b16 %v2793
        %v2926 = vunpack.c.l.b16 %v2794
        %v2927 = vunpack.c.l.b16 %v2795
        %v2928 = vunpack.c.l.b16 %v2796
        %v2929 = vunpack.c.l.b16 %v2797
        %v2930 = vunpack.c.l.b16 %v2798
        %v2931 = vunpack.c.l.b16 %v2799
        %v2932 = vunpack.c.l.b16 %v2800
        %v2933 = vunpack.c.l.b16 %v2801
        %v2934 = vunpack.c.l.b16 %v2802
        %v2935 = vunpack.c.l.b16 %v2803
        %v2936 = vunpack.c.l.b16 %v2804
        %v2937 = vunpack.c.l.b16 %v2805
        %v2938 = vunpack.c.l.b16 %v2806
        %v2939 = vpack.c.b16 %v2876, %v2875
        %v2940 = vpack.c.b16 %v2878, %v2877
        %v2941 = vpack.c.b16 %v2880, %v2879
        %v2942 = vpack.c.b16 %v2882, %v2881
        %v2943 = vpack.c.b16 %v2884, %v2883
        %v2944 = vpack.c.b16 %v2886, %v2885
        %v2945 = vpack.c.b16 %v2888, %v2887
        %v2946 = vpack.c.b16 %v2890, %v2889
        %v2947 = vpack.c.b16 %v2892, %v2891
        %v2948 = vpack.c.b16 %v2894, %v2893
        %v2949 = vpack.c.b16 %v2896, %v2895
        %v2950 = vpack.c.b16 %v2898, %v2897
        %v2951 = vpack.c.b16 %v2900, %v2899
        %v2952 = vpack.c.b16 %v2902, %v2901
        %v2953 = vpack.c.b16 %v2904, %v2903
        %v2954 = vpack.c.b16 %v2906, %v2905
        %v2955 = vpack.c.b16 %v2908, %v2907
        %v2956 = vpack.c.b16 %v2910, %v2909
        %v2957 = vpack.c.b16 %v2912, %v2911
        %v2958 = vpack.c.b16 %v2914, %v2913
        %v2959 = vpack.c.b16 %v2916, %v2915
        %v2960 = vpack.c.b16 %v2918, %v2917
        %v2961 = vpack.c.b16 %v2920, %v2919
        %v2962 = vpack.c.b16 %v2922, %v2921
        %v2963 = vpack.c.b16 %v2924, %v2923
        %v2964 = vpack.c.b16 %v2926, %v2925
        %v2965 = vpack.c.b16 %v2928, %v2927
        %v2966 = vpack.c.b16 %v2930, %v2929
        %v2967 = vpack.c.b16 %v2932, %v2931
        %v2968 = vpack.c.b16 %v2934, %v2933
        %v2969 = vpack.c.b16 %v2936, %v2935
        %v2970 = vpack.c.b16 %v2938, %v2937
        %v2975 = vunpack.c.l.b16 %v2807
        %v2976 = vunpack.c.l.b16 %v2808
        %v2977 = vunpack.c.l.b16 %v2809
        %v2978 = vunpack.c.l.b16 %v2810
        %v2979 = vpack.c.b16 %v2976, %v2975
        %v2980 = vpack.c.b16 %v2978, %v2977
        %v2984 = vsel %vm501, %v2939, 0
        %v2987 = vsel %vm501, %v2940, 0
        %v2990 = vsel %vm501, %v2941, 0
        %v2993 = vsel %vm501, %v2942, 0
        %v2996 = vsel %vm501, %v2943, 0
        %v2999 = vsel %vm501, %v2944, 0
        %v3002 = vsel %vm501, %v2945, 0
        %v3005 = vsel %vm501, %v2946, 0
        %v3008 = vsel %vm501, %v2947, 0
        %v3011 = vsel %vm501, %v2948, 0
        %v3014 = vsel %vm501, %v2949, 0
        %v3017 = vsel %vm501, %v2950, 0
        %v3020 = vsel %vm501, %v2951, 0
        %v3023 = vsel %vm501, %v2952, 0
        %v3026 = vsel %vm501, %v2953, 0
        %v3029 = vsel %vm501, %v2954, 0
        %v3032 = vsel %vm501, %v2955, 0
        %v3035 = vsel %vm501, %v2956, 0
        %v3038 = vsel %vm501, %v2957, 0
        %v3041 = vsel %vm501, %v2958, 0
        %v3044 = vsel %vm501, %v2959, 0
        %v3047 = vsel %vm501, %v2960, 0
        %v3050 = vsel %vm501, %v2961, 0
        %v3053 = vsel %vm501, %v2962, 0
        %v3056 = vsel %vm501, %v2963, 0
        %v3059 = vsel %vm501, %v2964, 0
        %v3062 = vsel %vm501, %v2965, 0
        %v3065 = vsel %vm501, %v2966, 0
        %v3068 = vsel %vm501, %v2967, 0
        %v3071 = vsel %vm501, %v2968, 0
        %v3074 = vsel %vm501, %v2969, 0
        %v3077 = vsel %vm501, %v2970, 0
        %3079 = vmatpush.bf16.msra.mxu0 0
        %3080 = vmatpush.bf16.msra.mxu0 0
        %3081 = vmatpush.bf16.msra.mxu0 0
        %3082 = vmatpush.bf16.msra.mxu0 0
        %3083 = vmatpush.bf16.msra.mxu0 0
        %3084 = vmatpush.bf16.msra.mxu0 0
        %3085 = vmatpush.bf16.msra.mxu0 %v2980
        %3086 = vmatpush.bf16.msra.mxu0 %v2979
        %3087 = vmatmul.bf16.gmra.mxu0 %v2984
        %v3088 = vpop.f32.mrf.mxu0
        %v3089 = vadd.f32 0.0, %v3088
        %v3090 = vpop.f32.mrf.mxu0
        %v3091 = vadd.f32 0.0, %v3090
        %3092 = vmatmul.bf16.gmra.mxu0 %v2987
        %v3093 = vpop.f32.mrf.mxu0
        %v3094 = vadd.f32 0.0, %v3093
        %v3095 = vpop.f32.mrf.mxu0
        %v3096 = vadd.f32 0.0, %v3095
        %3097 = vmatmul.bf16.gmra.mxu0 %v2990
        %v3098 = vpop.f32.mrf.mxu0
        %v3099 = vadd.f32 0.0, %v3098
        %v3100 = vpop.f32.mrf.mxu0
        %v3101 = vadd.f32 0.0, %v3100
        %3102 = vmatmul.bf16.gmra.mxu0 %v2993
        %v3103 = vpop.f32.mrf.mxu0
        %v3104 = vadd.f32 0.0, %v3103
        %v3105 = vpop.f32.mrf.mxu0
        %v3106 = vadd.f32 0.0, %v3105
        %3107 = vmatmul.bf16.gmra.mxu0 %v2996
        %v3108 = vpop.f32.mrf.mxu0
        %v3109 = vadd.f32 0.0, %v3108
        %v3110 = vpop.f32.mrf.mxu0
        %v3111 = vadd.f32 0.0, %v3110
        %3112 = vmatmul.bf16.gmra.mxu0 %v2999
        %v3113 = vpop.f32.mrf.mxu0
        %v3114 = vadd.f32 0.0, %v3113
        %v3115 = vpop.f32.mrf.mxu0
        %v3116 = vadd.f32 0.0, %v3115
        %3117 = vmatmul.bf16.gmra.mxu0 %v3002
        %v3118 = vpop.f32.mrf.mxu0
        %v3119 = vadd.f32 0.0, %v3118
        %v3120 = vpop.f32.mrf.mxu0
        %v3121 = vadd.f32 0.0, %v3120
        %3122 = vmatmul.bf16.gmra.mxu0 %v3005
        %v3123 = vpop.f32.mrf.mxu0
        %v3124 = vadd.f32 0.0, %v3123
        %v3125 = vpop.f32.mrf.mxu0
        %v3126 = vadd.f32 0.0, %v3125
        %3127 = vmatmul.bf16.gmra.mxu0 %v3008
        %v3128 = vpop.f32.mrf.mxu0
        %v3129 = vadd.f32 0.0, %v3128
        %v3130 = vpop.f32.mrf.mxu0
        %v3131 = vadd.f32 0.0, %v3130
        %3132 = vmatmul.bf16.gmra.mxu0 %v3011
        %v3133 = vpop.f32.mrf.mxu0
        %v3134 = vadd.f32 0.0, %v3133
        %v3135 = vpop.f32.mrf.mxu0
        %v3136 = vadd.f32 0.0, %v3135
        %3137 = vmatmul.bf16.gmra.mxu0 %v3014
        %v3138 = vpop.f32.mrf.mxu0
        %v3139 = vadd.f32 0.0, %v3138
        %v3140 = vpop.f32.mrf.mxu0
        %v3141 = vadd.f32 0.0, %v3140
        %3142 = vmatmul.bf16.gmra.mxu0 %v3017
        %v3143 = vpop.f32.mrf.mxu0
        %v3144 = vadd.f32 0.0, %v3143
        %v3145 = vpop.f32.mrf.mxu0
        %v3146 = vadd.f32 0.0, %v3145
        %3147 = vmatmul.bf16.gmra.mxu0 %v3020
        %v3148 = vpop.f32.mrf.mxu0
        %v3149 = vadd.f32 0.0, %v3148
        %v3150 = vpop.f32.mrf.mxu0
        %v3151 = vadd.f32 0.0, %v3150
        %3152 = vmatmul.bf16.gmra.mxu0 %v3023
        %v3153 = vpop.f32.mrf.mxu0
        %v3154 = vadd.f32 0.0, %v3153
        %v3155 = vpop.f32.mrf.mxu0
        %v3156 = vadd.f32 0.0, %v3155
        %3157 = vmatmul.bf16.gmra.mxu0 %v3026
        %v3158 = vpop.f32.mrf.mxu0
        %v3159 = vadd.f32 0.0, %v3158
        %v3160 = vpop.f32.mrf.mxu0
        %v3161 = vadd.f32 0.0, %v3160
        %3162 = vmatmul.bf16.gmra.mxu0 %v3029
        %v3163 = vpop.f32.mrf.mxu0
        %v3164 = vadd.f32 0.0, %v3163
        %v3165 = vpop.f32.mrf.mxu0
        %v3166 = vadd.f32 0.0, %v3165
        %3167 = vmatmul.bf16.gmra.mxu0 %v3032
        %v3168 = vpop.f32.mrf.mxu0
        %v3169 = vadd.f32 0.0, %v3168
        %v3170 = vpop.f32.mrf.mxu0
        %v3171 = vadd.f32 0.0, %v3170
        %3172 = vmatmul.bf16.gmra.mxu0 %v3035
        %v3173 = vpop.f32.mrf.mxu0
        %v3174 = vadd.f32 0.0, %v3173
        %v3175 = vpop.f32.mrf.mxu0
        %v3176 = vadd.f32 0.0, %v3175
        %3177 = vmatmul.bf16.gmra.mxu0 %v3038
        %v3178 = vpop.f32.mrf.mxu0
        %v3179 = vadd.f32 0.0, %v3178
        %v3180 = vpop.f32.mrf.mxu0
        %v3181 = vadd.f32 0.0, %v3180
        %3182 = vmatmul.bf16.gmra.mxu0 %v3041
        %v3183 = vpop.f32.mrf.mxu0
        %v3184 = vadd.f32 0.0, %v3183
        %v3185 = vpop.f32.mrf.mxu0
        %v3186 = vadd.f32 0.0, %v3185
        %3187 = vmatmul.bf16.gmra.mxu0 %v3044
        %v3188 = vpop.f32.mrf.mxu0
        %v3189 = vadd.f32 0.0, %v3188
        %v3190 = vpop.f32.mrf.mxu0
        %v3191 = vadd.f32 0.0, %v3190
        %3192 = vmatmul.bf16.gmra.mxu0 %v3047
        %v3193 = vpop.f32.mrf.mxu0
        %v3194 = vadd.f32 0.0, %v3193
        %v3195 = vpop.f32.mrf.mxu0
        %v3196 = vadd.f32 0.0, %v3195
        %3197 = vmatmul.bf16.gmra.mxu0 %v3050
        %v3198 = vpop.f32.mrf.mxu0
        %v3199 = vadd.f32 0.0, %v3198
        %v3200 = vpop.f32.mrf.mxu0
        %v3201 = vadd.f32 0.0, %v3200
        %3202 = vmatmul.bf16.gmra.mxu0 %v3053
        %v3203 = vpop.f32.mrf.mxu0
        %v3204 = vadd.f32 0.0, %v3203
        %v3205 = vpop.f32.mrf.mxu0
        %v3206 = vadd.f32 0.0, %v3205
        %3207 = vmatmul.bf16.gmra.mxu0 %v3056
        %v3208 = vpop.f32.mrf.mxu0
        %v3209 = vadd.f32 0.0, %v3208
        %v3210 = vpop.f32.mrf.mxu0
        %v3211 = vadd.f32 0.0, %v3210
        %3212 = vmatmul.bf16.gmra.mxu0 %v3059
        %v3213 = vpop.f32.mrf.mxu0
        %v3214 = vadd.f32 0.0, %v3213
        %v3215 = vpop.f32.mrf.mxu0
        %v3216 = vadd.f32 0.0, %v3215
        %3217 = vmatmul.bf16.gmra.mxu0 %v3062
        %v3218 = vpop.f32.mrf.mxu0
        %v3219 = vadd.f32 0.0, %v3218
        %v3220 = vpop.f32.mrf.mxu0
        %v3221 = vadd.f32 0.0, %v3220
        %3222 = vmatmul.bf16.gmra.mxu0 %v3065
        %v3223 = vpop.f32.mrf.mxu0
        %v3224 = vadd.f32 0.0, %v3223
        %v3225 = vpop.f32.mrf.mxu0
        %v3226 = vadd.f32 0.0, %v3225
        %3227 = vmatmul.bf16.gmra.mxu0 %v3068
        %v3228 = vpop.f32.mrf.mxu0
        %v3229 = vadd.f32 0.0, %v3228
        %v3230 = vpop.f32.mrf.mxu0
        %v3231 = vadd.f32 0.0, %v3230
        %3232 = vmatmul.bf16.gmra.mxu0 %v3071
        %v3233 = vpop.f32.mrf.mxu0
        %v3234 = vadd.f32 0.0, %v3233
        %v3235 = vpop.f32.mrf.mxu0
        %v3236 = vadd.f32 0.0, %v3235
        %3237 = vmatmul.bf16.gmra.mxu0 %v3074
        %v3238 = vpop.f32.mrf.mxu0
        %v3239 = vadd.f32 0.0, %v3238
        %v3240 = vpop.f32.mrf.mxu0
        %v3241 = vadd.f32 0.0, %v3240
        %3242 = vmatmul.bf16.gmra.mxu0 %v3077
        %v3243 = vpop.f32.mrf.mxu0
        %v3244 = vadd.f32 0.0, %v3243
        %v3245 = vpop.f32.mrf.mxu0
        %v3246 = vadd.f32 0.0, %v3245
        %3247 = vdwg.mxu0
        %v3248 = vmul.f32 %v3089, %v768
        %v3249 = vmul.f32 %v3091, %v768
        %v3250 = vmul.f32 %v3094, %v768
        %v3251 = vmul.f32 %v3096, %v768
        %v3252 = vmul.f32 %v3099, %v768
        %v3253 = vmul.f32 %v3101, %v768
        %v3254 = vmul.f32 %v3104, %v768
        %v3255 = vmul.f32 %v3106, %v768
        %v3256 = vmul.f32 %v3109, %v768
        %v3257 = vmul.f32 %v3111, %v768
        %v3258 = vmul.f32 %v3114, %v768
        %v3259 = vmul.f32 %v3116, %v768
        %v3260 = vmul.f32 %v3119, %v768
        %v3261 = vmul.f32 %v3121, %v768
        %v3262 = vmul.f32 %v3124, %v768
        %v3263 = vmul.f32 %v3126, %v768
        %v3264 = vmul.f32 %v3129, %v768
        %v3265 = vmul.f32 %v3131, %v768
        %v3266 = vmul.f32 %v3134, %v768
        %v3267 = vmul.f32 %v3136, %v768
        %v3268 = vmul.f32 %v3139, %v768
        %v3269 = vmul.f32 %v3141, %v768
        %v3270 = vmul.f32 %v3144, %v768
        %v3271 = vmul.f32 %v3146, %v768
        %v3272 = vmul.f32 %v3149, %v768
        %v3273 = vmul.f32 %v3151, %v768
        %v3274 = vmul.f32 %v3154, %v768
        %v3275 = vmul.f32 %v3156, %v768
        %v3276 = vmul.f32 %v3159, %v768
        %v3277 = vmul.f32 %v3161, %v768
        %v3278 = vmul.f32 %v3164, %v768
        %v3279 = vmul.f32 %v3166, %v768
        %v3280 = vmul.f32 %v3169, %v768
        %v3281 = vmul.f32 %v3171, %v768
        %v3282 = vmul.f32 %v3174, %v768
        %v3283 = vmul.f32 %v3176, %v768
        %v3284 = vmul.f32 %v3179, %v768
        %v3285 = vmul.f32 %v3181, %v768
        %v3286 = vmul.f32 %v3184, %v768
        %v3287 = vmul.f32 %v3186, %v768
        %v3288 = vmul.f32 %v3189, %v768
        %v3289 = vmul.f32 %v3191, %v768
        %v3290 = vmul.f32 %v3194, %v768
        %v3291 = vmul.f32 %v3196, %v768
        %v3292 = vmul.f32 %v3199, %v768
        %v3293 = vmul.f32 %v3201, %v768
        %v3294 = vmul.f32 %v3204, %v768
        %v3295 = vmul.f32 %v3206, %v768
        %v3296 = vmul.f32 %v3209, %v768
        %v3297 = vmul.f32 %v3211, %v768
        %v3298 = vmul.f32 %v3214, %v768
        %v3299 = vmul.f32 %v3216, %v768
        %v3300 = vmul.f32 %v3219, %v768
        %v3301 = vmul.f32 %v3221, %v768
        %v3302 = vmul.f32 %v3224, %v768
        %v3303 = vmul.f32 %v3226, %v768
        %v3304 = vmul.f32 %v3229, %v768
        %v3305 = vmul.f32 %v3231, %v768
        %v3306 = vmul.f32 %v3234, %v768
        %v3307 = vmul.f32 %v3236, %v768
        %v3308 = vmul.f32 %v3239, %v768
        %v3309 = vmul.f32 %v3241, %v768
        %v3310 = vmul.f32 %v3244, %v768
        %v3311 = vmul.f32 %v3246, %v768
        %v3312 = vadd.f32 %v3248, %v835
        %v3313 = vadd.f32 %v3249, %v835
        %v3314 = vadd.f32 %v3250, %v835
        %v3315 = vadd.f32 %v3251, %v835
        %v3316 = vadd.f32 %v3252, %v835
        %v3317 = vadd.f32 %v3253, %v835
        %v3318 = vadd.f32 %v3254, %v835
        %v3319 = vadd.f32 %v3255, %v835
        %v3320 = vadd.f32 %v3256, %v835
        %v3321 = vadd.f32 %v3257, %v835
        %v3322 = vadd.f32 %v3258, %v835
        %v3323 = vadd.f32 %v3259, %v835
        %v3324 = vadd.f32 %v3260, %v835
        %v3325 = vadd.f32 %v3261, %v835
        %v3326 = vadd.f32 %v3262, %v835
        %v3327 = vadd.f32 %v3263, %v835
        %v3328 = vadd.f32 %v3264, %v835
        %v3329 = vadd.f32 %v3265, %v835
        %v3330 = vadd.f32 %v3266, %v835
        %v3331 = vadd.f32 %v3267, %v835
        %v3332 = vadd.f32 %v3268, %v835
        %v3333 = vadd.f32 %v3269, %v835
        %v3334 = vadd.f32 %v3270, %v835
        %v3335 = vadd.f32 %v3271, %v835
        %v3336 = vadd.f32 %v3272, %v835
        %v3337 = vadd.f32 %v3273, %v835
        %v3338 = vadd.f32 %v3274, %v835
        %v3339 = vadd.f32 %v3275, %v835
        %v3340 = vadd.f32 %v3276, %v835
        %v3341 = vadd.f32 %v3277, %v835
        %v3342 = vadd.f32 %v3278, %v835
        %v3343 = vadd.f32 %v3279, %v835
        %v3344 = vadd.f32 %v3280, %v835
        %v3345 = vadd.f32 %v3281, %v835
        %v3346 = vadd.f32 %v3282, %v835
        %v3347 = vadd.f32 %v3283, %v835
        %v3348 = vadd.f32 %v3284, %v835
        %v3349 = vadd.f32 %v3285, %v835
        %v3350 = vadd.f32 %v3286, %v835
        %v3351 = vadd.f32 %v3287, %v835
        %v3352 = vadd.f32 %v3288, %v835
        %v3353 = vadd.f32 %v3289, %v835
        %v3354 = vadd.f32 %v3290, %v835
        %v3355 = vadd.f32 %v3291, %v835
        %v3356 = vadd.f32 %v3292, %v835
        %v3357 = vadd.f32 %v3293, %v835
        %v3358 = vadd.f32 %v3294, %v835
        %v3359 = vadd.f32 %v3295, %v835
        %v3360 = vadd.f32 %v3296, %v835
        %v3361 = vadd.f32 %v3297, %v835
        %v3362 = vadd.f32 %v3298, %v835
        %v3363 = vadd.f32 %v3299, %v835
        %v3364 = vadd.f32 %v3300, %v835
        %v3365 = vadd.f32 %v3301, %v835
        %v3366 = vadd.f32 %v3302, %v835
        %v3367 = vadd.f32 %v3303, %v835
        %v3368 = vadd.f32 %v3304, %v835
        %v3369 = vadd.f32 %v3305, %v835
        %v3370 = vadd.f32 %v3306, %v835
        %v3371 = vadd.f32 %v3307, %v835
        %v3372 = vadd.f32 %v3308, %v835
        %v3373 = vadd.f32 %v3309, %v835
        %v3374 = vadd.f32 %v3310, %v835
        %v3375 = vadd.f32 %v3311, %v835
        %v3376 = vmax.f32 %v3312, 0.0
        %v3377 = vmax.f32 %v3313, 0.0
        %v3378 = vmax.f32 %v3314, 0.0
        %v3379 = vmax.f32 %v3315, 0.0
        %v3380 = vmax.f32 %v3316, 0.0
        %v3381 = vmax.f32 %v3317, 0.0
        %v3382 = vmax.f32 %v3318, 0.0
        %v3383 = vmax.f32 %v3319, 0.0
        %v3384 = vmax.f32 %v3320, 0.0
        %v3385 = vmax.f32 %v3321, 0.0
        %v3386 = vmax.f32 %v3322, 0.0
        %v3387 = vmax.f32 %v3323, 0.0
        %v3388 = vmax.f32 %v3324, 0.0
        %v3389 = vmax.f32 %v3325, 0.0
        %v3390 = vmax.f32 %v3326, 0.0
        %v3391 = vmax.f32 %v3327, 0.0
        %v3392 = vmax.f32 %v3328, 0.0
        %v3393 = vmax.f32 %v3329, 0.0
        %v3394 = vmax.f32 %v3330, 0.0
        %v3395 = vmax.f32 %v3331, 0.0
        %v3396 = vmax.f32 %v3332, 0.0
        %v3397 = vmax.f32 %v3333, 0.0
        %v3398 = vmax.f32 %v3334, 0.0
        %v3399 = vmax.f32 %v3335, 0.0
        %v3400 = vmax.f32 %v3336, 0.0
        %v3401 = vmax.f32 %v3337, 0.0
        %v3402 = vmax.f32 %v3338, 0.0
        %v3403 = vmax.f32 %v3339, 0.0
        %v3404 = vmax.f32 %v3340, 0.0
        %v3405 = vmax.f32 %v3341, 0.0
        %v3406 = vmax.f32 %v3342, 0.0
        %v3407 = vmax.f32 %v3343, 0.0
        %v3408 = vmax.f32 %v3344, 0.0
        %v3409 = vmax.f32 %v3345, 0.0
        %v3410 = vmax.f32 %v3346, 0.0
        %v3411 = vmax.f32 %v3347, 0.0
        %v3412 = vmax.f32 %v3348, 0.0
        %v3413 = vmax.f32 %v3349, 0.0
        %v3414 = vmax.f32 %v3350, 0.0
        %v3415 = vmax.f32 %v3351, 0.0
        %v3416 = vmax.f32 %v3352, 0.0
        %v3417 = vmax.f32 %v3353, 0.0
        %v3418 = vmax.f32 %v3354, 0.0
        %v3419 = vmax.f32 %v3355, 0.0
        %v3420 = vmax.f32 %v3356, 0.0
        %v3421 = vmax.f32 %v3357, 0.0
        %v3422 = vmax.f32 %v3358, 0.0
        %v3423 = vmax.f32 %v3359, 0.0
        %v3424 = vmax.f32 %v3360, 0.0
        %v3425 = vmax.f32 %v3361, 0.0
        %v3426 = vmax.f32 %v3362, 0.0
        %v3427 = vmax.f32 %v3363, 0.0
        %v3428 = vmax.f32 %v3364, 0.0
        %v3429 = vmax.f32 %v3365, 0.0
        %v3430 = vmax.f32 %v3366, 0.0
        %v3431 = vmax.f32 %v3367, 0.0
        %v3432 = vmax.f32 %v3368, 0.0
        %v3433 = vmax.f32 %v3369, 0.0
        %v3434 = vmax.f32 %v3370, 0.0
        %v3435 = vmax.f32 %v3371, 0.0
        %v3436 = vmax.f32 %v3372, 0.0
        %v3437 = vmax.f32 %v3373, 0.0
        %v3438 = vmax.f32 %v3374, 0.0
        %v3439 = vmax.f32 %v3375, 0.0
        %v3440 = vpack.c.bf16 %v3376, %v3376
        %v3441 = vpack.c.bf16 %v3377, %v3377
        %v3442 = vpack.c.bf16 %v3378, %v3378
        %v3443 = vpack.c.bf16 %v3379, %v3379
        %v3444 = vpack.c.bf16 %v3380, %v3380
        %v3445 = vpack.c.bf16 %v3381, %v3381
        %v3446 = vpack.c.bf16 %v3382, %v3382
        %v3447 = vpack.c.bf16 %v3383, %v3383
        %v3448 = vpack.c.bf16 %v3384, %v3384
        %v3449 = vpack.c.bf16 %v3385, %v3385
        %v3450 = vpack.c.bf16 %v3386, %v3386
        %v3451 = vpack.c.bf16 %v3387, %v3387
        %v3452 = vpack.c.bf16 %v3388, %v3388
        %v3453 = vpack.c.bf16 %v3389, %v3389
        %v3454 = vpack.c.bf16 %v3390, %v3390
        %v3455 = vpack.c.bf16 %v3391, %v3391
        %v3456 = vpack.c.bf16 %v3392, %v3392
        %v3457 = vpack.c.bf16 %v3393, %v3393
        %v3458 = vpack.c.bf16 %v3394, %v3394
        %v3459 = vpack.c.bf16 %v3395, %v3395
        %v3460 = vpack.c.bf16 %v3396, %v3396
        %v3461 = vpack.c.bf16 %v3397, %v3397
        %v3462 = vpack.c.bf16 %v3398, %v3398
        %v3463 = vpack.c.bf16 %v3399, %v3399
        %v3464 = vpack.c.bf16 %v3400, %v3400
        %v3465 = vpack.c.bf16 %v3401, %v3401
        %v3466 = vpack.c.bf16 %v3402, %v3402
        %v3467 = vpack.c.bf16 %v3403, %v3403
        %v3468 = vpack.c.bf16 %v3404, %v3404
        %v3469 = vpack.c.bf16 %v3405, %v3405
        %v3470 = vpack.c.bf16 %v3406, %v3406
        %v3471 = vpack.c.bf16 %v3407, %v3407
        %v3472 = vpack.c.bf16 %v3408, %v3408
        %v3473 = vpack.c.bf16 %v3409, %v3409
        %v3474 = vpack.c.bf16 %v3410, %v3410
        %v3475 = vpack.c.bf16 %v3411, %v3411
        %v3476 = vpack.c.bf16 %v3412, %v3412
        %v3477 = vpack.c.bf16 %v3413, %v3413
        %v3478 = vpack.c.bf16 %v3414, %v3414
        %v3479 = vpack.c.bf16 %v3415, %v3415
        %v3480 = vpack.c.bf16 %v3416, %v3416
        %v3481 = vpack.c.bf16 %v3417, %v3417
        %v3482 = vpack.c.bf16 %v3418, %v3418
        %v3483 = vpack.c.bf16 %v3419, %v3419
        %v3484 = vpack.c.bf16 %v3420, %v3420
        %v3485 = vpack.c.bf16 %v3421, %v3421
        %v3486 = vpack.c.bf16 %v3422, %v3422
        %v3487 = vpack.c.bf16 %v3423, %v3423
        %v3488 = vpack.c.bf16 %v3424, %v3424
        %v3489 = vpack.c.bf16 %v3425, %v3425
        %v3490 = vpack.c.bf16 %v3426, %v3426
        %v3491 = vpack.c.bf16 %v3427, %v3427
        %v3492 = vpack.c.bf16 %v3428, %v3428
        %v3493 = vpack.c.bf16 %v3429, %v3429
        %v3494 = vpack.c.bf16 %v3430, %v3430
        %v3495 = vpack.c.bf16 %v3431, %v3431
        %v3496 = vpack.c.bf16 %v3432, %v3432
        %v3497 = vpack.c.bf16 %v3433, %v3433
        %v3498 = vpack.c.bf16 %v3434, %v3434
        %v3499 = vpack.c.bf16 %v3435, %v3435
        %v3500 = vpack.c.bf16 %v3436, %v3436
        %v3501 = vpack.c.bf16 %v3437, %v3437
        %v3502 = vpack.c.bf16 %v3438, %v3438
        %v3503 = vpack.c.bf16 %v3439, %v3439
        %3504 = vst [vmem:[%s240 + $0x300] sm:$0xf] %v3440
        %3505 = vst [vmem:[%s240 + $0x304] sm:$0xf] %v3441
        %3506 = vst [vmem:[%s240 + $0x308] sm:$0xf] %v3442
        %3507 = vst [vmem:[%s240 + $0x30c] sm:$0xf] %v3443
        %3508 = vst [vmem:[%s240 + $0x310] sm:$0xf] %v3444
        %3509 = vst [vmem:[%s240 + $0x314] sm:$0xf] %v3445
        %3510 = vst [vmem:[%s240 + $0x318] sm:$0xf] %v3446
        %3511 = vst [vmem:[%s240 + $0x31c] sm:$0xf] %v3447
        %3512 = vst [vmem:[%s240 + $0x320] sm:$0xf] %v3448
        %3513 = vst [vmem:[%s240 + $0x324] sm:$0xf] %v3449
        %3514 = vst [vmem:[%s240 + $0x328] sm:$0xf] %v3450
        %3515 = vst [vmem:[%s240 + $0x32c] sm:$0xf] %v3451
        %3516 = vst [vmem:[%s240 + $0x330] sm:$0xf] %v3452
        %3517 = vst [vmem:[%s240 + $0x334] sm:$0xf] %v3453
        %3518 = vst [vmem:[%s240 + $0x338] sm:$0xf] %v3454
        %3519 = vst [vmem:[%s240 + $0x33c] sm:$0xf] %v3455
        %3520 = vst [vmem:[%s240 + $0x340] sm:$0xf] %v3456
        %3521 = vst [vmem:[%s240 + $0x344] sm:$0xf] %v3457
        %3522 = vst [vmem:[%s240 + $0x348] sm:$0xf] %v3458
        %3523 = vst [vmem:[%s240 + $0x34c] sm:$0xf] %v3459
        %3524 = vst [vmem:[%s240 + $0x350] sm:$0xf] %v3460
        %3525 = vst [vmem:[%s240 + $0x354] sm:$0xf] %v3461
        %3526 = vst [vmem:[%s240 + $0x358] sm:$0xf] %v3462
        %3527 = vst [vmem:[%s240 + $0x35c] sm:$0xf] %v3463
        %3528 = vst [vmem:[%s240 + $0x360] sm:$0xf] %v3464
        %3529 = vst [vmem:[%s240 + $0x364] sm:$0xf] %v3465
        %3530 = vst [vmem:[%s240 + $0x368] sm:$0xf] %v3466
        %3531 = vst [vmem:[%s240 + $0x36c] sm:$0xf] %v3467
        %3532 = vst [vmem:[%s240 + $0x370] sm:$0xf] %v3468
        %3533 = vst [vmem:[%s240 + $0x374] sm:$0xf] %v3469
        %3534 = vst [vmem:[%s240 + $0x378] sm:$0xf] %v3470
        %3535 = vst [vmem:[%s240 + $0x37c] sm:$0xf] %v3471
        %3536 = vst [vmem:[%s240 + $0x380] sm:$0xf] %v3472
        %3537 = vst [vmem:[%s240 + $0x384] sm:$0xf] %v3473
        %3538 = vst [vmem:[%s240 + $0x388] sm:$0xf] %v3474
        %3539 = vst [vmem:[%s240 + $0x38c] sm:$0xf] %v3475
        %3540 = vst [vmem:[%s240 + $0x390] sm:$0xf] %v3476
        %3541 = vst [vmem:[%s240 + $0x394] sm:$0xf] %v3477
        %3542 = vst [vmem:[%s240 + $0x398] sm:$0xf] %v3478
        %3543 = vst [vmem:[%s240 + $0x39c] sm:$0xf] %v3479
        %3544 = vst [vmem:[%s240 + $0x3a0] sm:$0xf] %v3480
        %3545 = vst [vmem:[%s240 + $0x3a4] sm:$0xf] %v3481
        %3546 = vst [vmem:[%s240 + $0x3a8] sm:$0xf] %v3482
        %3547 = vst [vmem:[%s240 + $0x3ac] sm:$0xf] %v3483
        %3548 = vst [vmem:[%s240 + $0x3b0] sm:$0xf] %v3484
        %3549 = vst [vmem:[%s240 + $0x3b4] sm:$0xf] %v3485
        %3550 = vst [vmem:[%s240 + $0x3b8] sm:$0xf] %v3486
        %3551 = vst [vmem:[%s240 + $0x3bc] sm:$0xf] %v3487
        %3552 = vst [vmem:[%s240 + $0x3c0] sm:$0xf] %v3488
        %3553 = vst [vmem:[%s240 + $0x3c4] sm:$0xf] %v3489
        %3554 = vst [vmem:[%s240 + $0x3c8] sm:$0xf] %v3490
        %3555 = vst [vmem:[%s240 + $0x3cc] sm:$0xf] %v3491
        %3556 = vst [vmem:[%s240 + $0x3d0] sm:$0xf] %v3492
        %3557 = vst [vmem:[%s240 + $0x3d4] sm:$0xf] %v3493
        %3558 = vst [vmem:[%s240 + $0x3d8] sm:$0xf] %v3494
        %3559 = vst [vmem:[%s240 + $0x3dc] sm:$0xf] %v3495
        %3560 = vst [vmem:[%s240 + $0x3e0] sm:$0xf] %v3496
        %3561 = vst [vmem:[%s240 + $0x3e4] sm:$0xf] %v3497
        %3562 = vst [vmem:[%s240 + $0x3e8] sm:$0xf] %v3498
        %3563 = vst [vmem:[%s240 + $0x3ec] sm:$0xf] %v3499
        %3564 = vst [vmem:[%s240 + $0x3f0] sm:$0xf] %v3500
        %3565 = vst [vmem:[%s240 + $0x3f4] sm:$0xf] %v3501
        %3566 = vst [vmem:[%s240 + $0x3f8] sm:$0xf] %v3502
        %3567 = vst [vmem:[%s240 + $0x3fc] sm:$0xf] %v3503
        %v3568 = vld [vmem:[%s245 + $0x400] sm:$0xf]
        %v3569 = vld [vmem:[%s245 + $0x404] sm:$0xf]
        %v3570 = vld [vmem:[%s245 + $0x408] sm:$0xf]
        %v3571 = vld [vmem:[%s245 + $0x40c] sm:$0xf]
        %v3572 = vld [vmem:[%s245 + $0x410] sm:$0xf]
        %v3573 = vld [vmem:[%s245 + $0x414] sm:$0xf]
        %v3574 = vld [vmem:[%s245 + $0x418] sm:$0xf]
        %v3575 = vld [vmem:[%s245 + $0x41c] sm:$0xf]
        %v3576 = vld [vmem:[%s245 + $0x420] sm:$0xf]
        %v3577 = vld [vmem:[%s245 + $0x424] sm:$0xf]
        %v3578 = vld [vmem:[%s245 + $0x428] sm:$0xf]
        %v3579 = vld [vmem:[%s245 + $0x42c] sm:$0xf]
        %v3580 = vld [vmem:[%s245 + $0x430] sm:$0xf]
        %v3581 = vld [vmem:[%s245 + $0x434] sm:$0xf]
        %v3582 = vld [vmem:[%s245 + $0x438] sm:$0xf]
        %v3583 = vld [vmem:[%s245 + $0x43c] sm:$0xf]
        %v3584 = vld [vmem:[%s245 + $0x440] sm:$0xf]
        %v3585 = vld [vmem:[%s245 + $0x444] sm:$0xf]
        %v3586 = vld [vmem:[%s245 + $0x448] sm:$0xf]
        %v3587 = vld [vmem:[%s245 + $0x44c] sm:$0xf]
        %v3588 = vld [vmem:[%s245 + $0x450] sm:$0xf]
        %v3589 = vld [vmem:[%s245 + $0x454] sm:$0xf]
        %v3590 = vld [vmem:[%s245 + $0x458] sm:$0xf]
        %v3591 = vld [vmem:[%s245 + $0x45c] sm:$0xf]
        %v3592 = vld [vmem:[%s245 + $0x460] sm:$0xf]
        %v3593 = vld [vmem:[%s245 + $0x464] sm:$0xf]
        %v3594 = vld [vmem:[%s245 + $0x468] sm:$0xf]
        %v3595 = vld [vmem:[%s245 + $0x46c] sm:$0xf]
        %v3596 = vld [vmem:[%s245 + $0x470] sm:$0xf]
        %v3597 = vld [vmem:[%s245 + $0x474] sm:$0xf]
        %v3598 = vld [vmem:[%s245 + $0x478] sm:$0xf]
        %v3599 = vld [vmem:[%s245 + $0x47c] sm:$0xf]
        %v3600 = vld [vmem:[%s245 + $0x480] sm:$0xf]
        %v3601 = vld [vmem:[%s245 + $0x484] sm:$0xf]
        %v3602 = vld [vmem:[%s245 + $0x488] sm:$0xf]
        %v3603 = vld [vmem:[%s245 + $0x48c] sm:$0xf]
        %v3604 = vld [vmem:[%s245 + $0x490] sm:$0xf]
        %v3605 = vld [vmem:[%s245 + $0x494] sm:$0xf]
        %v3606 = vld [vmem:[%s245 + $0x498] sm:$0xf]
        %v3607 = vld [vmem:[%s245 + $0x49c] sm:$0xf]
        %v3608 = vld [vmem:[%s245 + $0x4a0] sm:$0xf]
        %v3609 = vld [vmem:[%s245 + $0x4a4] sm:$0xf]
        %v3610 = vld [vmem:[%s245 + $0x4a8] sm:$0xf]
        %v3611 = vld [vmem:[%s245 + $0x4ac] sm:$0xf]
        %v3612 = vld [vmem:[%s245 + $0x4b0] sm:$0xf]
        %v3613 = vld [vmem:[%s245 + $0x4b4] sm:$0xf]
        %v3614 = vld [vmem:[%s245 + $0x4b8] sm:$0xf]
        %v3615 = vld [vmem:[%s245 + $0x4bc] sm:$0xf]
        %v3616 = vld [vmem:[%s245 + $0x4c0] sm:$0xf]
        %v3617 = vld [vmem:[%s245 + $0x4c4] sm:$0xf]
        %v3618 = vld [vmem:[%s245 + $0x4c8] sm:$0xf]
        %v3619 = vld [vmem:[%s245 + $0x4cc] sm:$0xf]
        %v3620 = vld [vmem:[%s245 + $0x4d0] sm:$0xf]
        %v3621 = vld [vmem:[%s245 + $0x4d4] sm:$0xf]
        %v3622 = vld [vmem:[%s245 + $0x4d8] sm:$0xf]
        %v3623 = vld [vmem:[%s245 + $0x4dc] sm:$0xf]
        %v3624 = vld [vmem:[%s245 + $0x4e0] sm:$0xf]
        %v3625 = vld [vmem:[%s245 + $0x4e4] sm:$0xf]
        %v3626 = vld [vmem:[%s245 + $0x4e8] sm:$0xf]
        %v3627 = vld [vmem:[%s245 + $0x4ec] sm:$0xf]
        %v3628 = vld [vmem:[%s245 + $0x4f0] sm:$0xf]
        %v3629 = vld [vmem:[%s245 + $0x4f4] sm:$0xf]
        %v3630 = vld [vmem:[%s245 + $0x4f8] sm:$0xf]
        %v3631 = vld [vmem:[%s245 + $0x4fc] sm:$0xf]
        %v3632 = vld [vmem:[%s250] sm:$0xf]
        %v3633 = vld [vmem:[%s250 + $0x4] sm:$0xf]
        %v3634 = vld [vmem:[%s250 + $0x8] sm:$0xf]
        %v3635 = vld [vmem:[%s250 + $0xc] sm:$0xf]
        %v3700 = vunpack.c.l.b16 %v3568
        %v3701 = vunpack.c.l.b16 %v3569
        %v3702 = vunpack.c.l.b16 %v3570
        %v3703 = vunpack.c.l.b16 %v3571
        %v3704 = vunpack.c.l.b16 %v3572
        %v3705 = vunpack.c.l.b16 %v3573
        %v3706 = vunpack.c.l.b16 %v3574
        %v3707 = vunpack.c.l.b16 %v3575
        %v3708 = vunpack.c.l.b16 %v3576
        %v3709 = vunpack.c.l.b16 %v3577
        %v3710 = vunpack.c.l.b16 %v3578
        %v3711 = vunpack.c.l.b16 %v3579
        %v3712 = vunpack.c.l.b16 %v3580
        %v3713 = vunpack.c.l.b16 %v3581
        %v3714 = vunpack.c.l.b16 %v3582
        %v3715 = vunpack.c.l.b16 %v3583
        %v3716 = vunpack.c.l.b16 %v3584
        %v3717 = vunpack.c.l.b16 %v3585
        %v3718 = vunpack.c.l.b16 %v3586
        %v3719 = vunpack.c.l.b16 %v3587
        %v3720 = vunpack.c.l.b16 %v3588
        %v3721 = vunpack.c.l.b16 %v3589
        %v3722 = vunpack.c.l.b16 %v3590
        %v3723 = vunpack.c.l.b16 %v3591
        %v3724 = vunpack.c.l.b16 %v3592
        %v3725 = vunpack.c.l.b16 %v3593
        %v3726 = vunpack.c.l.b16 %v3594
        %v3727 = vunpack.c.l.b16 %v3595
        %v3728 = vunpack.c.l.b16 %v3596
        %v3729 = vunpack.c.l.b16 %v3597
        %v3730 = vunpack.c.l.b16 %v3598
        %v3731 = vunpack.c.l.b16 %v3599
        %v3732 = vunpack.c.l.b16 %v3600
        %v3733 = vunpack.c.l.b16 %v3601
        %v3734 = vunpack.c.l.b16 %v3602
        %v3735 = vunpack.c.l.b16 %v3603
        %v3736 = vunpack.c.l.b16 %v3604
        %v3737 = vunpack.c.l.b16 %v3605
        %v3738 = vunpack.c.l.b16 %v3606
        %v3739 = vunpack.c.l.b16 %v3607
        %v3740 = vunpack.c.l.b16 %v3608
        %v3741 = vunpack.c.l.b16 %v3609
        %v3742 = vunpack.c.l.b16 %v3610
        %v3743 = vunpack.c.l.b16 %v3611
        %v3744 = vunpack.c.l.b16 %v3612
        %v3745 = vunpack.c.l.b16 %v3613
        %v3746 = vunpack.c.l.b16 %v3614
        %v3747 = vunpack.c.l.b16 %v3615
        %v3748 = vunpack.c.l.b16 %v3616
        %v3749 = vunpack.c.l.b16 %v3617
        %v3750 = vunpack.c.l.b16 %v3618
        %v3751 = vunpack.c.l.b16 %v3619
        %v3752 = vunpack.c.l.b16 %v3620
        %v3753 = vunpack.c.l.b16 %v3621
        %v3754 = vunpack.c.l.b16 %v3622
        %v3755 = vunpack.c.l.b16 %v3623
        %v3756 = vunpack.c.l.b16 %v3624
        %v3757 = vunpack.c.l.b16 %v3625
        %v3758 = vunpack.c.l.b16 %v3626
        %v3759 = vunpack.c.l.b16 %v3627
        %v3760 = vunpack.c.l.b16 %v3628
        %v3761 = vunpack.c.l.b16 %v3629
        %v3762 = vunpack.c.l.b16 %v3630
        %v3763 = vunpack.c.l.b16 %v3631
        %v3764 = vpack.c.b16 %v3701, %v3700
        %v3765 = vpack.c.b16 %v3703, %v3702
        %v3766 = vpack.c.b16 %v3705, %v3704
        %v3767 = vpack.c.b16 %v3707, %v3706
        %v3768 = vpack.c.b16 %v3709, %v3708
        %v3769 = vpack.c.b16 %v3711, %v3710
        %v3770 = vpack.c.b16 %v3713, %v3712
        %v3771 = vpack.c.b16 %v3715, %v3714
        %v3772 = vpack.c.b16 %v3717, %v3716
        %v3773 = vpack.c.b16 %v3719, %v3718
        %v3774 = vpack.c.b16 %v3721, %v3720
        %v3775 = vpack.c.b16 %v3723, %v3722
        %v3776 = vpack.c.b16 %v3725, %v3724
        %v3777 = vpack.c.b16 %v3727, %v3726
        %v3778 = vpack.c.b16 %v3729, %v3728
        %v3779 = vpack.c.b16 %v3731, %v3730
        %v3780 = vpack.c.b16 %v3733, %v3732
        %v3781 = vpack.c.b16 %v3735, %v3734
        %v3782 = vpack.c.b16 %v3737, %v3736
        %v3783 = vpack.c.b16 %v3739, %v3738
        %v3784 = vpack.c.b16 %v3741, %v3740
        %v3785 = vpack.c.b16 %v3743, %v3742
        %v3786 = vpack.c.b16 %v3745, %v3744
        %v3787 = vpack.c.b16 %v3747, %v3746
        %v3788 = vpack.c.b16 %v3749, %v3748
        %v3789 = vpack.c.b16 %v3751, %v3750
        %v3790 = vpack.c.b16 %v3753, %v3752
        %v3791 = vpack.c.b16 %v3755, %v3754
        %v3792 = vpack.c.b16 %v3757, %v3756
        %v3793 = vpack.c.b16 %v3759, %v3758
        %v3794 = vpack.c.b16 %v3761, %v3760
        %v3795 = vpack.c.b16 %v3763, %v3762
        %v3800 = vunpack.c.l.b16 %v3632
        %v3801 = vunpack.c.l.b16 %v3633
        %v3802 = vunpack.c.l.b16 %v3634
        %v3803 = vunpack.c.l.b16 %v3635
        %v3804 = vpack.c.b16 %v3801, %v3800
        %v3805 = vpack.c.b16 %v3803, %v3802
        %v3809 = vsel %vm501, %v3764, 0
        %v3812 = vsel %vm501, %v3765, 0
        %v3815 = vsel %vm501, %v3766, 0
        %v3818 = vsel %vm501, %v3767, 0
        %v3821 = vsel %vm501, %v3768, 0
        %v3824 = vsel %vm501, %v3769, 0
        %v3827 = vsel %vm501, %v3770, 0
        %v3830 = vsel %vm501, %v3771, 0
        %v3833 = vsel %vm501, %v3772, 0
        %v3836 = vsel %vm501, %v3773, 0
        %v3839 = vsel %vm501, %v3774, 0
        %v3842 = vsel %vm501, %v3775, 0
        %v3845 = vsel %vm501, %v3776, 0
        %v3848 = vsel %vm501, %v3777, 0
        %v3851 = vsel %vm501, %v3778, 0
        %v3854 = vsel %vm501, %v3779, 0
        %v3857 = vsel %vm501, %v3780, 0
        %v3860 = vsel %vm501, %v3781, 0
        %v3863 = vsel %vm501, %v3782, 0
        %v3866 = vsel %vm501, %v3783, 0
        %v3869 = vsel %vm501, %v3784, 0
        %v3872 = vsel %vm501, %v3785, 0
        %v3875 = vsel %vm501, %v3786, 0
        %v3878 = vsel %vm501, %v3787, 0
        %v3881 = vsel %vm501, %v3788, 0
        %v3884 = vsel %vm501, %v3789, 0
        %v3887 = vsel %vm501, %v3790, 0
        %v3890 = vsel %vm501, %v3791, 0
        %v3893 = vsel %vm501, %v3792, 0
        %v3896 = vsel %vm501, %v3793, 0
        %v3899 = vsel %vm501, %v3794, 0
        %v3902 = vsel %vm501, %v3795, 0
        %3904 = vmatpush.bf16.msra.mxu0 0
        %3905 = vmatpush.bf16.msra.mxu0 0
        %3906 = vmatpush.bf16.msra.mxu0 0
        %3907 = vmatpush.bf16.msra.mxu0 0
        %3908 = vmatpush.bf16.msra.mxu0 0
        %3909 = vmatpush.bf16.msra.mxu0 0
        %3910 = vmatpush.bf16.msra.mxu0 %v3805
        %3911 = vmatpush.bf16.msra.mxu0 %v3804
        %3912 = vmatmul.bf16.gmra.mxu0 %v3809
        %v3913 = vpop.f32.mrf.mxu0
        %v3914 = vadd.f32 0.0, %v3913
        %v3915 = vpop.f32.mrf.mxu0
        %v3916 = vadd.f32 0.0, %v3915
        %3917 = vmatmul.bf16.gmra.mxu0 %v3812
        %v3918 = vpop.f32.mrf.mxu0
        %v3919 = vadd.f32 0.0, %v3918
        %v3920 = vpop.f32.mrf.mxu0
        %v3921 = vadd.f32 0.0, %v3920
        %3922 = vmatmul.bf16.gmra.mxu0 %v3815
        %v3923 = vpop.f32.mrf.mxu0
        %v3924 = vadd.f32 0.0, %v3923
        %v3925 = vpop.f32.mrf.mxu0
        %v3926 = vadd.f32 0.0, %v3925
        %3927 = vmatmul.bf16.gmra.mxu0 %v3818
        %v3928 = vpop.f32.mrf.mxu0
        %v3929 = vadd.f32 0.0, %v3928
        %v3930 = vpop.f32.mrf.mxu0
        %v3931 = vadd.f32 0.0, %v3930
        %3932 = vmatmul.bf16.gmra.mxu0 %v3821
        %v3933 = vpop.f32.mrf.mxu0
        %v3934 = vadd.f32 0.0, %v3933
        %v3935 = vpop.f32.mrf.mxu0
        %v3936 = vadd.f32 0.0, %v3935
        %3937 = vmatmul.bf16.gmra.mxu0 %v3824
        %v3938 = vpop.f32.mrf.mxu0
        %v3939 = vadd.f32 0.0, %v3938
        %v3940 = vpop.f32.mrf.mxu0
        %v3941 = vadd.f32 0.0, %v3940
        %3942 = vmatmul.bf16.gmra.mxu0 %v3827
        %v3943 = vpop.f32.mrf.mxu0
        %v3944 = vadd.f32 0.0, %v3943
        %v3945 = vpop.f32.mrf.mxu0
        %v3946 = vadd.f32 0.0, %v3945
        %3947 = vmatmul.bf16.gmra.mxu0 %v3830
        %v3948 = vpop.f32.mrf.mxu0
        %v3949 = vadd.f32 0.0, %v3948
        %v3950 = vpop.f32.mrf.mxu0
        %v3951 = vadd.f32 0.0, %v3950
        %3952 = vmatmul.bf16.gmra.mxu0 %v3833
        %v3953 = vpop.f32.mrf.mxu0
        %v3954 = vadd.f32 0.0, %v3953
        %v3955 = vpop.f32.mrf.mxu0
        %v3956 = vadd.f32 0.0, %v3955
        %3957 = vmatmul.bf16.gmra.mxu0 %v3836
        %v3958 = vpop.f32.mrf.mxu0
        %v3959 = vadd.f32 0.0, %v3958
        %v3960 = vpop.f32.mrf.mxu0
        %v3961 = vadd.f32 0.0, %v3960
        %3962 = vmatmul.bf16.gmra.mxu0 %v3839
        %v3963 = vpop.f32.mrf.mxu0
        %v3964 = vadd.f32 0.0, %v3963
        %v3965 = vpop.f32.mrf.mxu0
        %v3966 = vadd.f32 0.0, %v3965
        %3967 = vmatmul.bf16.gmra.mxu0 %v3842
        %v3968 = vpop.f32.mrf.mxu0
        %v3969 = vadd.f32 0.0, %v3968
        %v3970 = vpop.f32.mrf.mxu0
        %v3971 = vadd.f32 0.0, %v3970
        %3972 = vmatmul.bf16.gmra.mxu0 %v3845
        %v3973 = vpop.f32.mrf.mxu0
        %v3974 = vadd.f32 0.0, %v3973
        %v3975 = vpop.f32.mrf.mxu0
        %v3976 = vadd.f32 0.0, %v3975
        %3977 = vmatmul.bf16.gmra.mxu0 %v3848
        %v3978 = vpop.f32.mrf.mxu0
        %v3979 = vadd.f32 0.0, %v3978
        %v3980 = vpop.f32.mrf.mxu0
        %v3981 = vadd.f32 0.0, %v3980
        %3982 = vmatmul.bf16.gmra.mxu0 %v3851
        %v3983 = vpop.f32.mrf.mxu0
        %v3984 = vadd.f32 0.0, %v3983
        %v3985 = vpop.f32.mrf.mxu0
        %v3986 = vadd.f32 0.0, %v3985
        %3987 = vmatmul.bf16.gmra.mxu0 %v3854
        %v3988 = vpop.f32.mrf.mxu0
        %v3989 = vadd.f32 0.0, %v3988
        %v3990 = vpop.f32.mrf.mxu0
        %v3991 = vadd.f32 0.0, %v3990
        %3992 = vmatmul.bf16.gmra.mxu0 %v3857
        %v3993 = vpop.f32.mrf.mxu0
        %v3994 = vadd.f32 0.0, %v3993
        %v3995 = vpop.f32.mrf.mxu0
        %v3996 = vadd.f32 0.0, %v3995
        %3997 = vmatmul.bf16.gmra.mxu0 %v3860
        %v3998 = vpop.f32.mrf.mxu0
        %v3999 = vadd.f32 0.0, %v3998
        %v4000 = vpop.f32.mrf.mxu0
        %v4001 = vadd.f32 0.0, %v4000
        %4002 = vmatmul.bf16.gmra.mxu0 %v3863
        %v4003 = vpop.f32.mrf.mxu0
        %v4004 = vadd.f32 0.0, %v4003
        %v4005 = vpop.f32.mrf.mxu0
        %v4006 = vadd.f32 0.0, %v4005
        %4007 = vmatmul.bf16.gmra.mxu0 %v3866
        %v4008 = vpop.f32.mrf.mxu0
        %v4009 = vadd.f32 0.0, %v4008
        %v4010 = vpop.f32.mrf.mxu0
        %v4011 = vadd.f32 0.0, %v4010
        %4012 = vmatmul.bf16.gmra.mxu0 %v3869
        %v4013 = vpop.f32.mrf.mxu0
        %v4014 = vadd.f32 0.0, %v4013
        %v4015 = vpop.f32.mrf.mxu0
        %v4016 = vadd.f32 0.0, %v4015
        %4017 = vmatmul.bf16.gmra.mxu0 %v3872
        %v4018 = vpop.f32.mrf.mxu0
        %v4019 = vadd.f32 0.0, %v4018
        %v4020 = vpop.f32.mrf.mxu0
        %v4021 = vadd.f32 0.0, %v4020
        %4022 = vmatmul.bf16.gmra.mxu0 %v3875
        %v4023 = vpop.f32.mrf.mxu0
        %v4024 = vadd.f32 0.0, %v4023
        %v4025 = vpop.f32.mrf.mxu0
        %v4026 = vadd.f32 0.0, %v4025
        %4027 = vmatmul.bf16.gmra.mxu0 %v3878
        %v4028 = vpop.f32.mrf.mxu0
        %v4029 = vadd.f32 0.0, %v4028
        %v4030 = vpop.f32.mrf.mxu0
        %v4031 = vadd.f32 0.0, %v4030
        %4032 = vmatmul.bf16.gmra.mxu0 %v3881
        %v4033 = vpop.f32.mrf.mxu0
        %v4034 = vadd.f32 0.0, %v4033
        %v4035 = vpop.f32.mrf.mxu0
        %v4036 = vadd.f32 0.0, %v4035
        %4037 = vmatmul.bf16.gmra.mxu0 %v3884
        %v4038 = vpop.f32.mrf.mxu0
        %v4039 = vadd.f32 0.0, %v4038
        %v4040 = vpop.f32.mrf.mxu0
        %v4041 = vadd.f32 0.0, %v4040
        %4042 = vmatmul.bf16.gmra.mxu0 %v3887
        %v4043 = vpop.f32.mrf.mxu0
        %v4044 = vadd.f32 0.0, %v4043
        %v4045 = vpop.f32.mrf.mxu0
        %v4046 = vadd.f32 0.0, %v4045
        %4047 = vmatmul.bf16.gmra.mxu0 %v3890
        %v4048 = vpop.f32.mrf.mxu0
        %v4049 = vadd.f32 0.0, %v4048
        %v4050 = vpop.f32.mrf.mxu0
        %v4051 = vadd.f32 0.0, %v4050
        %4052 = vmatmul.bf16.gmra.mxu0 %v3893
        %v4053 = vpop.f32.mrf.mxu0
        %v4054 = vadd.f32 0.0, %v4053
        %v4055 = vpop.f32.mrf.mxu0
        %v4056 = vadd.f32 0.0, %v4055
        %4057 = vmatmul.bf16.gmra.mxu0 %v3896
        %v4058 = vpop.f32.mrf.mxu0
        %v4059 = vadd.f32 0.0, %v4058
        %v4060 = vpop.f32.mrf.mxu0
        %v4061 = vadd.f32 0.0, %v4060
        %4062 = vmatmul.bf16.gmra.mxu0 %v3899
        %v4063 = vpop.f32.mrf.mxu0
        %v4064 = vadd.f32 0.0, %v4063
        %v4065 = vpop.f32.mrf.mxu0
        %v4066 = vadd.f32 0.0, %v4065
        %4067 = vmatmul.bf16.gmra.mxu0 %v3902
        %v4068 = vpop.f32.mrf.mxu0
        %v4069 = vadd.f32 0.0, %v4068
        %v4070 = vpop.f32.mrf.mxu0
        %v4071 = vadd.f32 0.0, %v4070
        %4072 = vdwg.mxu0
        %v4073 = vmul.f32 %v3914, %v768
        %v4074 = vmul.f32 %v3916, %v768
        %v4075 = vmul.f32 %v3919, %v768
        %v4076 = vmul.f32 %v3921, %v768
        %v4077 = vmul.f32 %v3924, %v768
        %v4078 = vmul.f32 %v3926, %v768
        %v4079 = vmul.f32 %v3929, %v768
        %v4080 = vmul.f32 %v3931, %v768
        %v4081 = vmul.f32 %v3934, %v768
        %v4082 = vmul.f32 %v3936, %v768
        %v4083 = vmul.f32 %v3939, %v768
        %v4084 = vmul.f32 %v3941, %v768
        %v4085 = vmul.f32 %v3944, %v768
        %v4086 = vmul.f32 %v3946, %v768
        %v4087 = vmul.f32 %v3949, %v768
        %v4088 = vmul.f32 %v3951, %v768
        %v4089 = vmul.f32 %v3954, %v768
        %v4090 = vmul.f32 %v3956, %v768
        %v4091 = vmul.f32 %v3959, %v768
        %v4092 = vmul.f32 %v3961, %v768
        %v4093 = vmul.f32 %v3964, %v768
        %v4094 = vmul.f32 %v3966, %v768
        %v4095 = vmul.f32 %v3969, %v768
        %v4096 = vmul.f32 %v3971, %v768
        %v4097 = vmul.f32 %v3974, %v768
        %v4098 = vmul.f32 %v3976, %v768
        %v4099 = vmul.f32 %v3979, %v768
        %v4100 = vmul.f32 %v3981, %v768
        %v4101 = vmul.f32 %v3984, %v768
        %v4102 = vmul.f32 %v3986, %v768
        %v4103 = vmul.f32 %v3989, %v768
        %v4104 = vmul.f32 %v3991, %v768
        %v4105 = vmul.f32 %v3994, %v768
        %v4106 = vmul.f32 %v3996, %v768
        %v4107 = vmul.f32 %v3999, %v768
        %v4108 = vmul.f32 %v4001, %v768
        %v4109 = vmul.f32 %v4004, %v768
        %v4110 = vmul.f32 %v4006, %v768
        %v4111 = vmul.f32 %v4009, %v768
        %v4112 = vmul.f32 %v4011, %v768
        %v4113 = vmul.f32 %v4014, %v768
        %v4114 = vmul.f32 %v4016, %v768
        %v4115 = vmul.f32 %v4019, %v768
        %v4116 = vmul.f32 %v4021, %v768
        %v4117 = vmul.f32 %v4024, %v768
        %v4118 = vmul.f32 %v4026, %v768
        %v4119 = vmul.f32 %v4029, %v768
        %v4120 = vmul.f32 %v4031, %v768
        %v4121 = vmul.f32 %v4034, %v768
        %v4122 = vmul.f32 %v4036, %v768
        %v4123 = vmul.f32 %v4039, %v768
        %v4124 = vmul.f32 %v4041, %v768
        %v4125 = vmul.f32 %v4044, %v768
        %v4126 = vmul.f32 %v4046, %v768
        %v4127 = vmul.f32 %v4049, %v768
        %v4128 = vmul.f32 %v4051, %v768
        %v4129 = vmul.f32 %v4054, %v768
        %v4130 = vmul.f32 %v4056, %v768
        %v4131 = vmul.f32 %v4059, %v768
        %v4132 = vmul.f32 %v4061, %v768
        %v4133 = vmul.f32 %v4064, %v768
        %v4134 = vmul.f32 %v4066, %v768
        %v4135 = vmul.f32 %v4069, %v768
        %v4136 = vmul.f32 %v4071, %v768
        %v4137 = vadd.f32 %v4073, %v835
        %v4138 = vadd.f32 %v4074, %v835
        %v4139 = vadd.f32 %v4075, %v835
        %v4140 = vadd.f32 %v4076, %v835
        %v4141 = vadd.f32 %v4077, %v835
        %v4142 = vadd.f32 %v4078, %v835
        %v4143 = vadd.f32 %v4079, %v835
        %v4144 = vadd.f32 %v4080, %v835
        %v4145 = vadd.f32 %v4081, %v835
        %v4146 = vadd.f32 %v4082, %v835
        %v4147 = vadd.f32 %v4083, %v835
        %v4148 = vadd.f32 %v4084, %v835
        %v4149 = vadd.f32 %v4085, %v835
        %v4150 = vadd.f32 %v4086, %v835
        %v4151 = vadd.f32 %v4087, %v835
        %v4152 = vadd.f32 %v4088, %v835
        %v4153 = vadd.f32 %v4089, %v835
        %v4154 = vadd.f32 %v4090, %v835
        %v4155 = vadd.f32 %v4091, %v835
        %v4156 = vadd.f32 %v4092, %v835
        %v4157 = vadd.f32 %v4093, %v835
        %v4158 = vadd.f32 %v4094, %v835
        %v4159 = vadd.f32 %v4095, %v835
        %v4160 = vadd.f32 %v4096, %v835
        %v4161 = vadd.f32 %v4097, %v835
        %v4162 = vadd.f32 %v4098, %v835
        %v4163 = vadd.f32 %v4099, %v835
        %v4164 = vadd.f32 %v4100, %v835
        %v4165 = vadd.f32 %v4101, %v835
        %v4166 = vadd.f32 %v4102, %v835
        %v4167 = vadd.f32 %v4103, %v835
        %v4168 = vadd.f32 %v4104, %v835
        %v4169 = vadd.f32 %v4105, %v835
        %v4170 = vadd.f32 %v4106, %v835
        %v4171 = vadd.f32 %v4107, %v835
        %v4172 = vadd.f32 %v4108, %v835
        %v4173 = vadd.f32 %v4109, %v835
        %v4174 = vadd.f32 %v4110, %v835
        %v4175 = vadd.f32 %v4111, %v835
        %v4176 = vadd.f32 %v4112, %v835
        %v4177 = vadd.f32 %v4113, %v835
        %v4178 = vadd.f32 %v4114, %v835
        %v4179 = vadd.f32 %v4115, %v835
        %v4180 = vadd.f32 %v4116, %v835
        %v4181 = vadd.f32 %v4117, %v835
        %v4182 = vadd.f32 %v4118, %v835
        %v4183 = vadd.f32 %v4119, %v835
        %v4184 = vadd.f32 %v4120, %v835
        %v4185 = vadd.f32 %v4121, %v835
        %v4186 = vadd.f32 %v4122, %v835
        %v4187 = vadd.f32 %v4123, %v835
        %v4188 = vadd.f32 %v4124, %v835
        %v4189 = vadd.f32 %v4125, %v835
        %v4190 = vadd.f32 %v4126, %v835
        %v4191 = vadd.f32 %v4127, %v835
        %v4192 = vadd.f32 %v4128, %v835
        %v4193 = vadd.f32 %v4129, %v835
        %v4194 = vadd.f32 %v4130, %v835
        %v4195 = vadd.f32 %v4131, %v835
        %v4196 = vadd.f32 %v4132, %v835
        %v4197 = vadd.f32 %v4133, %v835
        %v4198 = vadd.f32 %v4134, %v835
        %v4199 = vadd.f32 %v4135, %v835
        %v4200 = vadd.f32 %v4136, %v835
        %v4201 = vmax.f32 %v4137, 0.0
        %v4202 = vmax.f32 %v4138, 0.0
        %v4203 = vmax.f32 %v4139, 0.0
        %v4204 = vmax.f32 %v4140, 0.0
        %v4205 = vmax.f32 %v4141, 0.0
        %v4206 = vmax.f32 %v4142, 0.0
        %v4207 = vmax.f32 %v4143, 0.0
        %v4208 = vmax.f32 %v4144, 0.0
        %v4209 = vmax.f32 %v4145, 0.0
        %v4210 = vmax.f32 %v4146, 0.0
        %v4211 = vmax.f32 %v4147, 0.0
        %v4212 = vmax.f32 %v4148, 0.0
        %v4213 = vmax.f32 %v4149, 0.0
        %v4214 = vmax.f32 %v4150, 0.0
        %v4215 = vmax.f32 %v4151, 0.0
        %v4216 = vmax.f32 %v4152, 0.0
        %v4217 = vmax.f32 %v4153, 0.0
        %v4218 = vmax.f32 %v4154, 0.0
        %v4219 = vmax.f32 %v4155, 0.0
        %v4220 = vmax.f32 %v4156, 0.0
        %v4221 = vmax.f32 %v4157, 0.0
        %v4222 = vmax.f32 %v4158, 0.0
        %v4223 = vmax.f32 %v4159, 0.0
        %v4224 = vmax.f32 %v4160, 0.0
        %v4225 = vmax.f32 %v4161, 0.0
        %v4226 = vmax.f32 %v4162, 0.0
        %v4227 = vmax.f32 %v4163, 0.0
        %v4228 = vmax.f32 %v4164, 0.0
        %v4229 = vmax.f32 %v4165, 0.0
        %v4230 = vmax.f32 %v4166, 0.0
        %v4231 = vmax.f32 %v4167, 0.0
        %v4232 = vmax.f32 %v4168, 0.0
        %v4233 = vmax.f32 %v4169, 0.0
        %v4234 = vmax.f32 %v4170, 0.0
        %v4235 = vmax.f32 %v4171, 0.0
        %v4236 = vmax.f32 %v4172, 0.0
        %v4237 = vmax.f32 %v4173, 0.0
        %v4238 = vmax.f32 %v4174, 0.0
        %v4239 = vmax.f32 %v4175, 0.0
        %v4240 = vmax.f32 %v4176, 0.0
        %v4241 = vmax.f32 %v4177, 0.0
        %v4242 = vmax.f32 %v4178, 0.0
        %v4243 = vmax.f32 %v4179, 0.0
        %v4244 = vmax.f32 %v4180, 0.0
        %v4245 = vmax.f32 %v4181, 0.0
        %v4246 = vmax.f32 %v4182, 0.0
        %v4247 = vmax.f32 %v4183, 0.0
        %v4248 = vmax.f32 %v4184, 0.0
        %v4249 = vmax.f32 %v4185, 0.0
        %v4250 = vmax.f32 %v4186, 0.0
        %v4251 = vmax.f32 %v4187, 0.0
        %v4252 = vmax.f32 %v4188, 0.0
        %v4253 = vmax.f32 %v4189, 0.0
        %v4254 = vmax.f32 %v4190, 0.0
        %v4255 = vmax.f32 %v4191, 0.0
        %v4256 = vmax.f32 %v4192, 0.0
        %v4257 = vmax.f32 %v4193, 0.0
        %v4258 = vmax.f32 %v4194, 0.0
        %v4259 = vmax.f32 %v4195, 0.0
        %v4260 = vmax.f32 %v4196, 0.0
        %v4261 = vmax.f32 %v4197, 0.0
        %v4262 = vmax.f32 %v4198, 0.0
        %v4263 = vmax.f32 %v4199, 0.0
        %v4264 = vmax.f32 %v4200, 0.0
        %v4265 = vpack.c.bf16 %v4201, %v4201
        %v4266 = vpack.c.bf16 %v4202, %v4202
        %v4267 = vpack.c.bf16 %v4203, %v4203
        %v4268 = vpack.c.bf16 %v4204, %v4204
        %v4269 = vpack.c.bf16 %v4205, %v4205
        %v4270 = vpack.c.bf16 %v4206, %v4206
        %v4271 = vpack.c.bf16 %v4207, %v4207
        %v4272 = vpack.c.bf16 %v4208, %v4208
        %v4273 = vpack.c.bf16 %v4209, %v4209
        %v4274 = vpack.c.bf16 %v4210, %v4210
        %v4275 = vpack.c.bf16 %v4211, %v4211
        %v4276 = vpack.c.bf16 %v4212, %v4212
        %v4277 = vpack.c.bf16 %v4213, %v4213
        %v4278 = vpack.c.bf16 %v4214, %v4214
        %v4279 = vpack.c.bf16 %v4215, %v4215
        %v4280 = vpack.c.bf16 %v4216, %v4216
        %v4281 = vpack.c.bf16 %v4217, %v4217
        %v4282 = vpack.c.bf16 %v4218, %v4218
        %v4283 = vpack.c.bf16 %v4219, %v4219
        %v4284 = vpack.c.bf16 %v4220, %v4220
        %v4285 = vpack.c.bf16 %v4221, %v4221
        %v4286 = vpack.c.bf16 %v4222, %v4222
        %v4287 = vpack.c.bf16 %v4223, %v4223
        %v4288 = vpack.c.bf16 %v4224, %v4224
        %v4289 = vpack.c.bf16 %v4225, %v4225
        %v4290 = vpack.c.bf16 %v4226, %v4226
        %v4291 = vpack.c.bf16 %v4227, %v4227
        %v4292 = vpack.c.bf16 %v4228, %v4228
        %v4293 = vpack.c.bf16 %v4229, %v4229
        %v4294 = vpack.c.bf16 %v4230, %v4230
        %v4295 = vpack.c.bf16 %v4231, %v4231
        %v4296 = vpack.c.bf16 %v4232, %v4232
        %v4297 = vpack.c.bf16 %v4233, %v4233
        %v4298 = vpack.c.bf16 %v4234, %v4234
        %v4299 = vpack.c.bf16 %v4235, %v4235
        %v4300 = vpack.c.bf16 %v4236, %v4236
        %v4301 = vpack.c.bf16 %v4237, %v4237
        %v4302 = vpack.c.bf16 %v4238, %v4238
        %v4303 = vpack.c.bf16 %v4239, %v4239
        %v4304 = vpack.c.bf16 %v4240, %v4240
        %v4305 = vpack.c.bf16 %v4241, %v4241
        %v4306 = vpack.c.bf16 %v4242, %v4242
        %v4307 = vpack.c.bf16 %v4243, %v4243
        %v4308 = vpack.c.bf16 %v4244, %v4244
        %v4309 = vpack.c.bf16 %v4245, %v4245
        %v4310 = vpack.c.bf16 %v4246, %v4246
        %v4311 = vpack.c.bf16 %v4247, %v4247
        %v4312 = vpack.c.bf16 %v4248, %v4248
        %v4313 = vpack.c.bf16 %v4249, %v4249
        %v4314 = vpack.c.bf16 %v4250, %v4250
        %v4315 = vpack.c.bf16 %v4251, %v4251
        %v4316 = vpack.c.bf16 %v4252, %v4252
        %v4317 = vpack.c.bf16 %v4253, %v4253
        %v4318 = vpack.c.bf16 %v4254, %v4254
        %v4319 = vpack.c.bf16 %v4255, %v4255
        %v4320 = vpack.c.bf16 %v4256, %v4256
        %v4321 = vpack.c.bf16 %v4257, %v4257
        %v4322 = vpack.c.bf16 %v4258, %v4258
        %v4323 = vpack.c.bf16 %v4259, %v4259
        %v4324 = vpack.c.bf16 %v4260, %v4260
        %v4325 = vpack.c.bf16 %v4261, %v4261
        %v4326 = vpack.c.bf16 %v4262, %v4262
        %v4327 = vpack.c.bf16 %v4263, %v4263
        %v4328 = vpack.c.bf16 %v4264, %v4264
        %4329 = vst [vmem:[%s240 + $0x400] sm:$0xf] %v4265
        %4330 = vst [vmem:[%s240 + $0x404] sm:$0xf] %v4266
        %4331 = vst [vmem:[%s240 + $0x408] sm:$0xf] %v4267
        %4332 = vst [vmem:[%s240 + $0x40c] sm:$0xf] %v4268
        %4333 = vst [vmem:[%s240 + $0x410] sm:$0xf] %v4269
        %4334 = vst [vmem:[%s240 + $0x414] sm:$0xf] %v4270
        %4335 = vst [vmem:[%s240 + $0x418] sm:$0xf] %v4271
        %4336 = vst [vmem:[%s240 + $0x41c] sm:$0xf] %v4272
        %4337 = vst [vmem:[%s240 + $0x420] sm:$0xf] %v4273
        %4338 = vst [vmem:[%s240 + $0x424] sm:$0xf] %v4274
        %4339 = vst [vmem:[%s240 + $0x428] sm:$0xf] %v4275
        %4340 = vst [vmem:[%s240 + $0x42c] sm:$0xf] %v4276
        %4341 = vst [vmem:[%s240 + $0x430] sm:$0xf] %v4277
        %4342 = vst [vmem:[%s240 + $0x434] sm:$0xf] %v4278
        %4343 = vst [vmem:[%s240 + $0x438] sm:$0xf] %v4279
        %4344 = vst [vmem:[%s240 + $0x43c] sm:$0xf] %v4280
        %4345 = vst [vmem:[%s240 + $0x440] sm:$0xf] %v4281
        %4346 = vst [vmem:[%s240 + $0x444] sm:$0xf] %v4282
        %4347 = vst [vmem:[%s240 + $0x448] sm:$0xf] %v4283
        %4348 = vst [vmem:[%s240 + $0x44c] sm:$0xf] %v4284
        %4349 = vst [vmem:[%s240 + $0x450] sm:$0xf] %v4285
        %4350 = vst [vmem:[%s240 + $0x454] sm:$0xf] %v4286
        %4351 = vst [vmem:[%s240 + $0x458] sm:$0xf] %v4287
        %4352 = vst [vmem:[%s240 + $0x45c] sm:$0xf] %v4288
        %4353 = vst [vmem:[%s240 + $0x460] sm:$0xf] %v4289
        %4354 = vst [vmem:[%s240 + $0x464] sm:$0xf] %v4290
        %4355 = vst [vmem:[%s240 + $0x468] sm:$0xf] %v4291
        %4356 = vst [vmem:[%s240 + $0x46c] sm:$0xf] %v4292
        %4357 = vst [vmem:[%s240 + $0x470] sm:$0xf] %v4293
        %4358 = vst [vmem:[%s240 + $0x474] sm:$0xf] %v4294
        %4359 = vst [vmem:[%s240 + $0x478] sm:$0xf] %v4295
        %4360 = vst [vmem:[%s240 + $0x47c] sm:$0xf] %v4296
        %4361 = vst [vmem:[%s240 + $0x480] sm:$0xf] %v4297
        %4362 = vst [vmem:[%s240 + $0x484] sm:$0xf] %v4298
        %4363 = vst [vmem:[%s240 + $0x488] sm:$0xf] %v4299
        %4364 = vst [vmem:[%s240 + $0x48c] sm:$0xf] %v4300
        %4365 = vst [vmem:[%s240 + $0x490] sm:$0xf] %v4301
        %4366 = vst [vmem:[%s240 + $0x494] sm:$0xf] %v4302
        %4367 = vst [vmem:[%s240 + $0x498] sm:$0xf] %v4303
        %4368 = vst [vmem:[%s240 + $0x49c] sm:$0xf] %v4304
        %4369 = vst [vmem:[%s240 + $0x4a0] sm:$0xf] %v4305
        %4370 = vst [vmem:[%s240 + $0x4a4] sm:$0xf] %v4306
        %4371 = vst [vmem:[%s240 + $0x4a8] sm:$0xf] %v4307
        %4372 = vst [vmem:[%s240 + $0x4ac] sm:$0xf] %v4308
        %4373 = vst [vmem:[%s240 + $0x4b0] sm:$0xf] %v4309
        %4374 = vst [vmem:[%s240 + $0x4b4] sm:$0xf] %v4310
        %4375 = vst [vmem:[%s240 + $0x4b8] sm:$0xf] %v4311
        %4376 = vst [vmem:[%s240 + $0x4bc] sm:$0xf] %v4312
        %4377 = vst [vmem:[%s240 + $0x4c0] sm:$0xf] %v4313
        %4378 = vst [vmem:[%s240 + $0x4c4] sm:$0xf] %v4314
        %4379 = vst [vmem:[%s240 + $0x4c8] sm:$0xf] %v4315
        %4380 = vst [vmem:[%s240 + $0x4cc] sm:$0xf] %v4316
        %4381 = vst [vmem:[%s240 + $0x4d0] sm:$0xf] %v4317
        %4382 = vst [vmem:[%s240 + $0x4d4] sm:$0xf] %v4318
        %4383 = vst [vmem:[%s240 + $0x4d8] sm:$0xf] %v4319
        %4384 = vst [vmem:[%s240 + $0x4dc] sm:$0xf] %v4320
        %4385 = vst [vmem:[%s240 + $0x4e0] sm:$0xf] %v4321
        %4386 = vst [vmem:[%s240 + $0x4e4] sm:$0xf] %v4322
        %4387 = vst [vmem:[%s240 + $0x4e8] sm:$0xf] %v4323
        %4388 = vst [vmem:[%s240 + $0x4ec] sm:$0xf] %v4324
        %4389 = vst [vmem:[%s240 + $0x4f0] sm:$0xf] %v4325
        %4390 = vst [vmem:[%s240 + $0x4f4] sm:$0xf] %v4326
        %4391 = vst [vmem:[%s240 + $0x4f8] sm:$0xf] %v4327
        %4392 = vst [vmem:[%s240 + $0x4fc] sm:$0xf] %v4328
        %v4393 = vld [vmem:[%s245 + $0x500] sm:$0xf]
        %v4394 = vld [vmem:[%s245 + $0x504] sm:$0xf]
        %v4395 = vld [vmem:[%s245 + $0x508] sm:$0xf]
        %v4396 = vld [vmem:[%s245 + $0x50c] sm:$0xf]
        %v4397 = vld [vmem:[%s245 + $0x510] sm:$0xf]
        %v4398 = vld [vmem:[%s245 + $0x514] sm:$0xf]
        %v4399 = vld [vmem:[%s245 + $0x518] sm:$0xf]
        %v4400 = vld [vmem:[%s245 + $0x51c] sm:$0xf]
        %v4401 = vld [vmem:[%s245 + $0x520] sm:$0xf]
        %v4402 = vld [vmem:[%s245 + $0x524] sm:$0xf]
        %v4403 = vld [vmem:[%s245 + $0x528] sm:$0xf]
        %v4404 = vld [vmem:[%s245 + $0x52c] sm:$0xf]
        %v4405 = vld [vmem:[%s245 + $0x530] sm:$0xf]
        %v4406 = vld [vmem:[%s245 + $0x534] sm:$0xf]
        %v4407 = vld [vmem:[%s245 + $0x538] sm:$0xf]
        %v4408 = vld [vmem:[%s245 + $0x53c] sm:$0xf]
        %v4409 = vld [vmem:[%s245 + $0x540] sm:$0xf]
        %v4410 = vld [vmem:[%s245 + $0x544] sm:$0xf]
        %v4411 = vld [vmem:[%s245 + $0x548] sm:$0xf]
        %v4412 = vld [vmem:[%s245 + $0x54c] sm:$0xf]
        %v4413 = vld [vmem:[%s245 + $0x550] sm:$0xf]
        %v4414 = vld [vmem:[%s245 + $0x554] sm:$0xf]
        %v4415 = vld [vmem:[%s245 + $0x558] sm:$0xf]
        %v4416 = vld [vmem:[%s245 + $0x55c] sm:$0xf]
        %v4417 = vld [vmem:[%s245 + $0x560] sm:$0xf]
        %v4418 = vld [vmem:[%s245 + $0x564] sm:$0xf]
        %v4419 = vld [vmem:[%s245 + $0x568] sm:$0xf]
        %v4420 = vld [vmem:[%s245 + $0x56c] sm:$0xf]
        %v4421 = vld [vmem:[%s245 + $0x570] sm:$0xf]
        %v4422 = vld [vmem:[%s245 + $0x574] sm:$0xf]
        %v4423 = vld [vmem:[%s245 + $0x578] sm:$0xf]
        %v4424 = vld [vmem:[%s245 + $0x57c] sm:$0xf]
        %v4425 = vld [vmem:[%s245 + $0x580] sm:$0xf]
        %v4426 = vld [vmem:[%s245 + $0x584] sm:$0xf]
        %v4427 = vld [vmem:[%s245 + $0x588] sm:$0xf]
        %v4428 = vld [vmem:[%s245 + $0x58c] sm:$0xf]
        %v4429 = vld [vmem:[%s245 + $0x590] sm:$0xf]
        %v4430 = vld [vmem:[%s245 + $0x594] sm:$0xf]
        %v4431 = vld [vmem:[%s245 + $0x598] sm:$0xf]
        %v4432 = vld [vmem:[%s245 + $0x59c] sm:$0xf]
        %v4433 = vld [vmem:[%s245 + $0x5a0] sm:$0xf]
        %v4434 = vld [vmem:[%s245 + $0x5a4] sm:$0xf]
        %v4435 = vld [vmem:[%s245 + $0x5a8] sm:$0xf]
        %v4436 = vld [vmem:[%s245 + $0x5ac] sm:$0xf]
        %v4437 = vld [vmem:[%s245 + $0x5b0] sm:$0xf]
        %v4438 = vld [vmem:[%s245 + $0x5b4] sm:$0xf]
        %v4439 = vld [vmem:[%s245 + $0x5b8] sm:$0xf]
        %v4440 = vld [vmem:[%s245 + $0x5bc] sm:$0xf]
        %v4441 = vld [vmem:[%s245 + $0x5c0] sm:$0xf]
        %v4442 = vld [vmem:[%s245 + $0x5c4] sm:$0xf]
        %v4443 = vld [vmem:[%s245 + $0x5c8] sm:$0xf]
        %v4444 = vld [vmem:[%s245 + $0x5cc] sm:$0xf]
        %v4445 = vld [vmem:[%s245 + $0x5d0] sm:$0xf]
        %v4446 = vld [vmem:[%s245 + $0x5d4] sm:$0xf]
        %v4447 = vld [vmem:[%s245 + $0x5d8] sm:$0xf]
        %v4448 = vld [vmem:[%s245 + $0x5dc] sm:$0xf]
        %v4449 = vld [vmem:[%s245 + $0x5e0] sm:$0xf]
        %v4450 = vld [vmem:[%s245 + $0x5e4] sm:$0xf]
        %v4451 = vld [vmem:[%s245 + $0x5e8] sm:$0xf]
        %v4452 = vld [vmem:[%s245 + $0x5ec] sm:$0xf]
        %v4453 = vld [vmem:[%s245 + $0x5f0] sm:$0xf]
        %v4454 = vld [vmem:[%s245 + $0x5f4] sm:$0xf]
        %v4455 = vld [vmem:[%s245 + $0x5f8] sm:$0xf]
        %v4456 = vld [vmem:[%s245 + $0x5fc] sm:$0xf]
        %v4457 = vld [vmem:[%s250] sm:$0xf]
        %v4458 = vld [vmem:[%s250 + $0x4] sm:$0xf]
        %v4459 = vld [vmem:[%s250 + $0x8] sm:$0xf]
        %v4460 = vld [vmem:[%s250 + $0xc] sm:$0xf]
        %v4525 = vunpack.c.l.b16 %v4393
        %v4526 = vunpack.c.l.b16 %v4394
        %v4527 = vunpack.c.l.b16 %v4395
        %v4528 = vunpack.c.l.b16 %v4396
        %v4529 = vunpack.c.l.b16 %v4397
        %v4530 = vunpack.c.l.b16 %v4398
        %v4531 = vunpack.c.l.b16 %v4399
        %v4532 = vunpack.c.l.b16 %v4400
        %v4533 = vunpack.c.l.b16 %v4401
        %v4534 = vunpack.c.l.b16 %v4402
        %v4535 = vunpack.c.l.b16 %v4403
        %v4536 = vunpack.c.l.b16 %v4404
        %v4537 = vunpack.c.l.b16 %v4405
        %v4538 = vunpack.c.l.b16 %v4406
        %v4539 = vunpack.c.l.b16 %v4407
        %v4540 = vunpack.c.l.b16 %v4408
        %v4541 = vunpack.c.l.b16 %v4409
        %v4542 = vunpack.c.l.b16 %v4410
        %v4543 = vunpack.c.l.b16 %v4411
        %v4544 = vunpack.c.l.b16 %v4412
        %v4545 = vunpack.c.l.b16 %v4413
        %v4546 = vunpack.c.l.b16 %v4414
        %v4547 = vunpack.c.l.b16 %v4415
        %v4548 = vunpack.c.l.b16 %v4416
        %v4549 = vunpack.c.l.b16 %v4417
        %v4550 = vunpack.c.l.b16 %v4418
        %v4551 = vunpack.c.l.b16 %v4419
        %v4552 = vunpack.c.l.b16 %v4420
        %v4553 = vunpack.c.l.b16 %v4421
        %v4554 = vunpack.c.l.b16 %v4422
        %v4555 = vunpack.c.l.b16 %v4423
        %v4556 = vunpack.c.l.b16 %v4424
        %v4557 = vunpack.c.l.b16 %v4425
        %v4558 = vunpack.c.l.b16 %v4426
        %v4559 = vunpack.c.l.b16 %v4427
        %v4560 = vunpack.c.l.b16 %v4428
        %v4561 = vunpack.c.l.b16 %v4429
        %v4562 = vunpack.c.l.b16 %v4430
        %v4563 = vunpack.c.l.b16 %v4431
        %v4564 = vunpack.c.l.b16 %v4432
        %v4565 = vunpack.c.l.b16 %v4433
        %v4566 = vunpack.c.l.b16 %v4434
        %v4567 = vunpack.c.l.b16 %v4435
        %v4568 = vunpack.c.l.b16 %v4436
        %v4569 = vunpack.c.l.b16 %v4437
        %v4570 = vunpack.c.l.b16 %v4438
        %v4571 = vunpack.c.l.b16 %v4439
        %v4572 = vunpack.c.l.b16 %v4440
        %v4573 = vunpack.c.l.b16 %v4441
        %v4574 = vunpack.c.l.b16 %v4442
        %v4575 = vunpack.c.l.b16 %v4443
        %v4576 = vunpack.c.l.b16 %v4444
        %v4577 = vunpack.c.l.b16 %v4445
        %v4578 = vunpack.c.l.b16 %v4446
        %v4579 = vunpack.c.l.b16 %v4447
        %v4580 = vunpack.c.l.b16 %v4448
        %v4581 = vunpack.c.l.b16 %v4449
        %v4582 = vunpack.c.l.b16 %v4450
        %v4583 = vunpack.c.l.b16 %v4451
        %v4584 = vunpack.c.l.b16 %v4452
        %v4585 = vunpack.c.l.b16 %v4453
        %v4586 = vunpack.c.l.b16 %v4454
        %v4587 = vunpack.c.l.b16 %v4455
        %v4588 = vunpack.c.l.b16 %v4456
        %v4589 = vpack.c.b16 %v4526, %v4525
        %v4590 = vpack.c.b16 %v4528, %v4527
        %v4591 = vpack.c.b16 %v4530, %v4529
        %v4592 = vpack.c.b16 %v4532, %v4531
        %v4593 = vpack.c.b16 %v4534, %v4533
        %v4594 = vpack.c.b16 %v4536, %v4535
        %v4595 = vpack.c.b16 %v4538, %v4537
        %v4596 = vpack.c.b16 %v4540, %v4539
        %v4597 = vpack.c.b16 %v4542, %v4541
        %v4598 = vpack.c.b16 %v4544, %v4543
        %v4599 = vpack.c.b16 %v4546, %v4545
        %v4600 = vpack.c.b16 %v4548, %v4547
        %v4601 = vpack.c.b16 %v4550, %v4549
        %v4602 = vpack.c.b16 %v4552, %v4551
        %v4603 = vpack.c.b16 %v4554, %v4553
        %v4604 = vpack.c.b16 %v4556, %v4555
        %v4605 = vpack.c.b16 %v4558, %v4557
        %v4606 = vpack.c.b16 %v4560, %v4559
        %v4607 = vpack.c.b16 %v4562, %v4561
        %v4608 = vpack.c.b16 %v4564, %v4563
        %v4609 = vpack.c.b16 %v4566, %v4565
        %v4610 = vpack.c.b16 %v4568, %v4567
        %v4611 = vpack.c.b16 %v4570, %v4569
        %v4612 = vpack.c.b16 %v4572, %v4571
        %v4613 = vpack.c.b16 %v4574, %v4573
        %v4614 = vpack.c.b16 %v4576, %v4575
        %v4615 = vpack.c.b16 %v4578, %v4577
        %v4616 = vpack.c.b16 %v4580, %v4579
        %v4617 = vpack.c.b16 %v4582, %v4581
        %v4618 = vpack.c.b16 %v4584, %v4583
        %v4619 = vpack.c.b16 %v4586, %v4585
        %v4620 = vpack.c.b16 %v4588, %v4587
        %v4625 = vunpack.c.l.b16 %v4457
        %v4626 = vunpack.c.l.b16 %v4458
        %v4627 = vunpack.c.l.b16 %v4459
        %v4628 = vunpack.c.l.b16 %v4460
        %v4629 = vpack.c.b16 %v4626, %v4625
        %v4630 = vpack.c.b16 %v4628, %v4627
        %v4634 = vsel %vm501, %v4589, 0
        %v4637 = vsel %vm501, %v4590, 0
        %v4640 = vsel %vm501, %v4591, 0
        %v4643 = vsel %vm501, %v4592, 0
        %v4646 = vsel %vm501, %v4593, 0
        %v4649 = vsel %vm501, %v4594, 0
        %v4652 = vsel %vm501, %v4595, 0
        %v4655 = vsel %vm501, %v4596, 0
        %v4658 = vsel %vm501, %v4597, 0
        %v4661 = vsel %vm501, %v4598, 0
        %v4664 = vsel %vm501, %v4599, 0
        %v4667 = vsel %vm501, %v4600, 0
        %v4670 = vsel %vm501, %v4601, 0
        %v4673 = vsel %vm501, %v4602, 0
        %v4676 = vsel %vm501, %v4603, 0
        %v4679 = vsel %vm501, %v4604, 0
        %v4682 = vsel %vm501, %v4605, 0
        %v4685 = vsel %vm501, %v4606, 0
        %v4688 = vsel %vm501, %v4607, 0
        %v4691 = vsel %vm501, %v4608, 0
        %v4694 = vsel %vm501, %v4609, 0
        %v4697 = vsel %vm501, %v4610, 0
        %v4700 = vsel %vm501, %v4611, 0
        %v4703 = vsel %vm501, %v4612, 0
        %v4706 = vsel %vm501, %v4613, 0
        %v4709 = vsel %vm501, %v4614, 0
        %v4712 = vsel %vm501, %v4615, 0
        %v4715 = vsel %vm501, %v4616, 0
        %v4718 = vsel %vm501, %v4617, 0
        %v4721 = vsel %vm501, %v4618, 0
        %v4724 = vsel %vm501, %v4619, 0
        %v4727 = vsel %vm501, %v4620, 0
        %4729 = vmatpush.bf16.msra.mxu0 0
        %4730 = vmatpush.bf16.msra.mxu0 0
        %4731 = vmatpush.bf16.msra.mxu0 0
        %4732 = vmatpush.bf16.msra.mxu0 0
        %4733 = vmatpush.bf16.msra.mxu0 0
        %4734 = vmatpush.bf16.msra.mxu0 0
        %4735 = vmatpush.bf16.msra.mxu0 %v4630
        %4736 = vmatpush.bf16.msra.mxu0 %v4629
        %4737 = vmatmul.bf16.gmra.mxu0 %v4634
        %v4738 = vpop.f32.mrf.mxu0
        %v4739 = vadd.f32 0.0, %v4738
        %v4740 = vpop.f32.mrf.mxu0
        %v4741 = vadd.f32 0.0, %v4740
        %4742 = vmatmul.bf16.gmra.mxu0 %v4637
        %v4743 = vpop.f32.mrf.mxu0
        %v4744 = vadd.f32 0.0, %v4743
        %v4745 = vpop.f32.mrf.mxu0
        %v4746 = vadd.f32 0.0, %v4745
        %4747 = vmatmul.bf16.gmra.mxu0 %v4640
        %v4748 = vpop.f32.mrf.mxu0
        %v4749 = vadd.f32 0.0, %v4748
        %v4750 = vpop.f32.mrf.mxu0
        %v4751 = vadd.f32 0.0, %v4750
        %4752 = vmatmul.bf16.gmra.mxu0 %v4643
        %v4753 = vpop.f32.mrf.mxu0
        %v4754 = vadd.f32 0.0, %v4753
        %v4755 = vpop.f32.mrf.mxu0
        %v4756 = vadd.f32 0.0, %v4755
        %4757 = vmatmul.bf16.gmra.mxu0 %v4646
        %v4758 = vpop.f32.mrf.mxu0
        %v4759 = vadd.f32 0.0, %v4758
        %v4760 = vpop.f32.mrf.mxu0
        %v4761 = vadd.f32 0.0, %v4760
        %4762 = vmatmul.bf16.gmra.mxu0 %v4649
        %v4763 = vpop.f32.mrf.mxu0
        %v4764 = vadd.f32 0.0, %v4763
        %v4765 = vpop.f32.mrf.mxu0
        %v4766 = vadd.f32 0.0, %v4765
        %4767 = vmatmul.bf16.gmra.mxu0 %v4652
        %v4768 = vpop.f32.mrf.mxu0
        %v4769 = vadd.f32 0.0, %v4768
        %v4770 = vpop.f32.mrf.mxu0
        %v4771 = vadd.f32 0.0, %v4770
        %4772 = vmatmul.bf16.gmra.mxu0 %v4655
        %v4773 = vpop.f32.mrf.mxu0
        %v4774 = vadd.f32 0.0, %v4773
        %v4775 = vpop.f32.mrf.mxu0
        %v4776 = vadd.f32 0.0, %v4775
        %4777 = vmatmul.bf16.gmra.mxu0 %v4658
        %v4778 = vpop.f32.mrf.mxu0
        %v4779 = vadd.f32 0.0, %v4778
        %v4780 = vpop.f32.mrf.mxu0
        %v4781 = vadd.f32 0.0, %v4780
        %4782 = vmatmul.bf16.gmra.mxu0 %v4661
        %v4783 = vpop.f32.mrf.mxu0
        %v4784 = vadd.f32 0.0, %v4783
        %v4785 = vpop.f32.mrf.mxu0
        %v4786 = vadd.f32 0.0, %v4785
        %4787 = vmatmul.bf16.gmra.mxu0 %v4664
        %v4788 = vpop.f32.mrf.mxu0
        %v4789 = vadd.f32 0.0, %v4788
        %v4790 = vpop.f32.mrf.mxu0
        %v4791 = vadd.f32 0.0, %v4790
        %4792 = vmatmul.bf16.gmra.mxu0 %v4667
        %v4793 = vpop.f32.mrf.mxu0
        %v4794 = vadd.f32 0.0, %v4793
        %v4795 = vpop.f32.mrf.mxu0
        %v4796 = vadd.f32 0.0, %v4795
        %4797 = vmatmul.bf16.gmra.mxu0 %v4670
        %v4798 = vpop.f32.mrf.mxu0
        %v4799 = vadd.f32 0.0, %v4798
        %v4800 = vpop.f32.mrf.mxu0
        %v4801 = vadd.f32 0.0, %v4800
        %4802 = vmatmul.bf16.gmra.mxu0 %v4673
        %v4803 = vpop.f32.mrf.mxu0
        %v4804 = vadd.f32 0.0, %v4803
        %v4805 = vpop.f32.mrf.mxu0
        %v4806 = vadd.f32 0.0, %v4805
        %4807 = vmatmul.bf16.gmra.mxu0 %v4676
        %v4808 = vpop.f32.mrf.mxu0
        %v4809 = vadd.f32 0.0, %v4808
        %v4810 = vpop.f32.mrf.mxu0
        %v4811 = vadd.f32 0.0, %v4810
        %4812 = vmatmul.bf16.gmra.mxu0 %v4679
        %v4813 = vpop.f32.mrf.mxu0
        %v4814 = vadd.f32 0.0, %v4813
        %v4815 = vpop.f32.mrf.mxu0
        %v4816 = vadd.f32 0.0, %v4815
        %4817 = vmatmul.bf16.gmra.mxu0 %v4682
        %v4818 = vpop.f32.mrf.mxu0
        %v4819 = vadd.f32 0.0, %v4818
        %v4820 = vpop.f32.mrf.mxu0
        %v4821 = vadd.f32 0.0, %v4820
        %4822 = vmatmul.bf16.gmra.mxu0 %v4685
        %v4823 = vpop.f32.mrf.mxu0
        %v4824 = vadd.f32 0.0, %v4823
        %v4825 = vpop.f32.mrf.mxu0
        %v4826 = vadd.f32 0.0, %v4825
        %4827 = vmatmul.bf16.gmra.mxu0 %v4688
        %v4828 = vpop.f32.mrf.mxu0
        %v4829 = vadd.f32 0.0, %v4828
        %v4830 = vpop.f32.mrf.mxu0
        %v4831 = vadd.f32 0.0, %v4830
        %4832 = vmatmul.bf16.gmra.mxu0 %v4691
        %v4833 = vpop.f32.mrf.mxu0
        %v4834 = vadd.f32 0.0, %v4833
        %v4835 = vpop.f32.mrf.mxu0
        %v4836 = vadd.f32 0.0, %v4835
        %4837 = vmatmul.bf16.gmra.mxu0 %v4694
        %v4838 = vpop.f32.mrf.mxu0
        %v4839 = vadd.f32 0.0, %v4838
        %v4840 = vpop.f32.mrf.mxu0
        %v4841 = vadd.f32 0.0, %v4840
        %4842 = vmatmul.bf16.gmra.mxu0 %v4697
        %v4843 = vpop.f32.mrf.mxu0
        %v4844 = vadd.f32 0.0, %v4843
        %v4845 = vpop.f32.mrf.mxu0
        %v4846 = vadd.f32 0.0, %v4845
        %4847 = vmatmul.bf16.gmra.mxu0 %v4700
        %v4848 = vpop.f32.mrf.mxu0
        %v4849 = vadd.f32 0.0, %v4848
        %v4850 = vpop.f32.mrf.mxu0
        %v4851 = vadd.f32 0.0, %v4850
        %4852 = vmatmul.bf16.gmra.mxu0 %v4703
        %v4853 = vpop.f32.mrf.mxu0
        %v4854 = vadd.f32 0.0, %v4853
        %v4855 = vpop.f32.mrf.mxu0
        %v4856 = vadd.f32 0.0, %v4855
        %4857 = vmatmul.bf16.gmra.mxu0 %v4706
        %v4858 = vpop.f32.mrf.mxu0
        %v4859 = vadd.f32 0.0, %v4858
        %v4860 = vpop.f32.mrf.mxu0
        %v4861 = vadd.f32 0.0, %v4860
        %4862 = vmatmul.bf16.gmra.mxu0 %v4709
        %v4863 = vpop.f32.mrf.mxu0
        %v4864 = vadd.f32 0.0, %v4863
        %v4865 = vpop.f32.mrf.mxu0
        %v4866 = vadd.f32 0.0, %v4865
        %4867 = vmatmul.bf16.gmra.mxu0 %v4712
        %v4868 = vpop.f32.mrf.mxu0
        %v4869 = vadd.f32 0.0, %v4868
        %v4870 = vpop.f32.mrf.mxu0
        %v4871 = vadd.f32 0.0, %v4870
        %4872 = vmatmul.bf16.gmra.mxu0 %v4715
        %v4873 = vpop.f32.mrf.mxu0
        %v4874 = vadd.f32 0.0, %v4873
        %v4875 = vpop.f32.mrf.mxu0
        %v4876 = vadd.f32 0.0, %v4875
        %4877 = vmatmul.bf16.gmra.mxu0 %v4718
        %v4878 = vpop.f32.mrf.mxu0
        %v4879 = vadd.f32 0.0, %v4878
        %v4880 = vpop.f32.mrf.mxu0
        %v4881 = vadd.f32 0.0, %v4880
        %4882 = vmatmul.bf16.gmra.mxu0 %v4721
        %v4883 = vpop.f32.mrf.mxu0
        %v4884 = vadd.f32 0.0, %v4883
        %v4885 = vpop.f32.mrf.mxu0
        %v4886 = vadd.f32 0.0, %v4885
        %4887 = vmatmul.bf16.gmra.mxu0 %v4724
        %v4888 = vpop.f32.mrf.mxu0
        %v4889 = vadd.f32 0.0, %v4888
        %v4890 = vpop.f32.mrf.mxu0
        %v4891 = vadd.f32 0.0, %v4890
        %4892 = vmatmul.bf16.gmra.mxu0 %v4727
        %v4893 = vpop.f32.mrf.mxu0
        %v4894 = vadd.f32 0.0, %v4893
        %v4895 = vpop.f32.mrf.mxu0
        %v4896 = vadd.f32 0.0, %v4895
        %4897 = vdwg.mxu0
        %v4898 = vmul.f32 %v4739, %v768
        %v4899 = vmul.f32 %v4741, %v768
        %v4900 = vmul.f32 %v4744, %v768
        %v4901 = vmul.f32 %v4746, %v768
        %v4902 = vmul.f32 %v4749, %v768
        %v4903 = vmul.f32 %v4751, %v768
        %v4904 = vmul.f32 %v4754, %v768
        %v4905 = vmul.f32 %v4756, %v768
        %v4906 = vmul.f32 %v4759, %v768
        %v4907 = vmul.f32 %v4761, %v768
        %v4908 = vmul.f32 %v4764, %v768
        %v4909 = vmul.f32 %v4766, %v768
        %v4910 = vmul.f32 %v4769, %v768
        %v4911 = vmul.f32 %v4771, %v768
        %v4912 = vmul.f32 %v4774, %v768
        %v4913 = vmul.f32 %v4776, %v768
        %v4914 = vmul.f32 %v4779, %v768
        %v4915 = vmul.f32 %v4781, %v768
        %v4916 = vmul.f32 %v4784, %v768
        %v4917 = vmul.f32 %v4786, %v768
        %v4918 = vmul.f32 %v4789, %v768
        %v4919 = vmul.f32 %v4791, %v768
        %v4920 = vmul.f32 %v4794, %v768
        %v4921 = vmul.f32 %v4796, %v768
        %v4922 = vmul.f32 %v4799, %v768
        %v4923 = vmul.f32 %v4801, %v768
        %v4924 = vmul.f32 %v4804, %v768
        %v4925 = vmul.f32 %v4806, %v768
        %v4926 = vmul.f32 %v4809, %v768
        %v4927 = vmul.f32 %v4811, %v768
        %v4928 = vmul.f32 %v4814, %v768
        %v4929 = vmul.f32 %v4816, %v768
        %v4930 = vmul.f32 %v4819, %v768
        %v4931 = vmul.f32 %v4821, %v768
        %v4932 = vmul.f32 %v4824, %v768
        %v4933 = vmul.f32 %v4826, %v768
        %v4934 = vmul.f32 %v4829, %v768
        %v4935 = vmul.f32 %v4831, %v768
        %v4936 = vmul.f32 %v4834, %v768
        %v4937 = vmul.f32 %v4836, %v768
        %v4938 = vmul.f32 %v4839, %v768
        %v4939 = vmul.f32 %v4841, %v768
        %v4940 = vmul.f32 %v4844, %v768
        %v4941 = vmul.f32 %v4846, %v768
        %v4942 = vmul.f32 %v4849, %v768
        %v4943 = vmul.f32 %v4851, %v768
        %v4944 = vmul.f32 %v4854, %v768
        %v4945 = vmul.f32 %v4856, %v768
        %v4946 = vmul.f32 %v4859, %v768
        %v4947 = vmul.f32 %v4861, %v768
        %v4948 = vmul.f32 %v4864, %v768
        %v4949 = vmul.f32 %v4866, %v768
        %v4950 = vmul.f32 %v4869, %v768
        %v4951 = vmul.f32 %v4871, %v768
        %v4952 = vmul.f32 %v4874, %v768
        %v4953 = vmul.f32 %v4876, %v768
        %v4954 = vmul.f32 %v4879, %v768
        %v4955 = vmul.f32 %v4881, %v768
        %v4956 = vmul.f32 %v4884, %v768
        %v4957 = vmul.f32 %v4886, %v768
        %v4958 = vmul.f32 %v4889, %v768
        %v4959 = vmul.f32 %v4891, %v768
        %v4960 = vmul.f32 %v4894, %v768
        %v4961 = vmul.f32 %v4896, %v768
        %v4962 = vadd.f32 %v4898, %v835
        %v4963 = vadd.f32 %v4899, %v835
        %v4964 = vadd.f32 %v4900, %v835
        %v4965 = vadd.f32 %v4901, %v835
        %v4966 = vadd.f32 %v4902, %v835
        %v4967 = vadd.f32 %v4903, %v835
        %v4968 = vadd.f32 %v4904, %v835
        %v4969 = vadd.f32 %v4905, %v835
        %v4970 = vadd.f32 %v4906, %v835
        %v4971 = vadd.f32 %v4907, %v835
        %v4972 = vadd.f32 %v4908, %v835
        %v4973 = vadd.f32 %v4909, %v835
        %v4974 = vadd.f32 %v4910, %v835
        %v4975 = vadd.f32 %v4911, %v835
        %v4976 = vadd.f32 %v4912, %v835
        %v4977 = vadd.f32 %v4913, %v835
        %v4978 = vadd.f32 %v4914, %v835
        %v4979 = vadd.f32 %v4915, %v835
        %v4980 = vadd.f32 %v4916, %v835
        %v4981 = vadd.f32 %v4917, %v835
        %v4982 = vadd.f32 %v4918, %v835
        %v4983 = vadd.f32 %v4919, %v835
        %v4984 = vadd.f32 %v4920, %v835
        %v4985 = vadd.f32 %v4921, %v835
        %v4986 = vadd.f32 %v4922, %v835
        %v4987 = vadd.f32 %v4923, %v835
        %v4988 = vadd.f32 %v4924, %v835
        %v4989 = vadd.f32 %v4925, %v835
        %v4990 = vadd.f32 %v4926, %v835
        %v4991 = vadd.f32 %v4927, %v835
        %v4992 = vadd.f32 %v4928, %v835
        %v4993 = vadd.f32 %v4929, %v835
        %v4994 = vadd.f32 %v4930, %v835
        %v4995 = vadd.f32 %v4931, %v835
        %v4996 = vadd.f32 %v4932, %v835
        %v4997 = vadd.f32 %v4933, %v835
        %v4998 = vadd.f32 %v4934, %v835
        %v4999 = vadd.f32 %v4935, %v835
        %v5000 = vadd.f32 %v4936, %v835
        %v5001 = vadd.f32 %v4937, %v835
        %v5002 = vadd.f32 %v4938, %v835
        %v5003 = vadd.f32 %v4939, %v835
        %v5004 = vadd.f32 %v4940, %v835
        %v5005 = vadd.f32 %v4941, %v835
        %v5006 = vadd.f32 %v4942, %v835
        %v5007 = vadd.f32 %v4943, %v835
        %v5008 = vadd.f32 %v4944, %v835
        %v5009 = vadd.f32 %v4945, %v835
        %v5010 = vadd.f32 %v4946, %v835
        %v5011 = vadd.f32 %v4947, %v835
        %v5012 = vadd.f32 %v4948, %v835
        %v5013 = vadd.f32 %v4949, %v835
        %v5014 = vadd.f32 %v4950, %v835
        %v5015 = vadd.f32 %v4951, %v835
        %v5016 = vadd.f32 %v4952, %v835
        %v5017 = vadd.f32 %v4953, %v835
        %v5018 = vadd.f32 %v4954, %v835
        %v5019 = vadd.f32 %v4955, %v835
        %v5020 = vadd.f32 %v4956, %v835
        %v5021 = vadd.f32 %v4957, %v835
        %v5022 = vadd.f32 %v4958, %v835
        %v5023 = vadd.f32 %v4959, %v835
        %v5024 = vadd.f32 %v4960, %v835
        %v5025 = vadd.f32 %v4961, %v835
        %v5026 = vmax.f32 %v4962, 0.0
        %v5027 = vmax.f32 %v4963, 0.0
        %v5028 = vmax.f32 %v4964, 0.0
        %v5029 = vmax.f32 %v4965, 0.0
        %v5030 = vmax.f32 %v4966, 0.0
        %v5031 = vmax.f32 %v4967, 0.0
        %v5032 = vmax.f32 %v4968, 0.0
        %v5033 = vmax.f32 %v4969, 0.0
        %v5034 = vmax.f32 %v4970, 0.0
        %v5035 = vmax.f32 %v4971, 0.0
        %v5036 = vmax.f32 %v4972, 0.0
        %v5037 = vmax.f32 %v4973, 0.0
        %v5038 = vmax.f32 %v4974, 0.0
        %v5039 = vmax.f32 %v4975, 0.0
        %v5040 = vmax.f32 %v4976, 0.0
        %v5041 = vmax.f32 %v4977, 0.0
        %v5042 = vmax.f32 %v4978, 0.0
        %v5043 = vmax.f32 %v4979, 0.0
        %v5044 = vmax.f32 %v4980, 0.0
        %v5045 = vmax.f32 %v4981, 0.0
        %v5046 = vmax.f32 %v4982, 0.0
        %v5047 = vmax.f32 %v4983, 0.0
        %v5048 = vmax.f32 %v4984, 0.0
        %v5049 = vmax.f32 %v4985, 0.0
        %v5050 = vmax.f32 %v4986, 0.0
        %v5051 = vmax.f32 %v4987, 0.0
        %v5052 = vmax.f32 %v4988, 0.0
        %v5053 = vmax.f32 %v4989, 0.0
        %v5054 = vmax.f32 %v4990, 0.0
        %v5055 = vmax.f32 %v4991, 0.0
        %v5056 = vmax.f32 %v4992, 0.0
        %v5057 = vmax.f32 %v4993, 0.0
        %v5058 = vmax.f32 %v4994, 0.0
        %v5059 = vmax.f32 %v4995, 0.0
        %v5060 = vmax.f32 %v4996, 0.0
        %v5061 = vmax.f32 %v4997, 0.0
        %v5062 = vmax.f32 %v4998, 0.0
        %v5063 = vmax.f32 %v4999, 0.0
        %v5064 = vmax.f32 %v5000, 0.0
        %v5065 = vmax.f32 %v5001, 0.0
        %v5066 = vmax.f32 %v5002, 0.0
        %v5067 = vmax.f32 %v5003, 0.0
        %v5068 = vmax.f32 %v5004, 0.0
        %v5069 = vmax.f32 %v5005, 0.0
        %v5070 = vmax.f32 %v5006, 0.0
        %v5071 = vmax.f32 %v5007, 0.0
        %v5072 = vmax.f32 %v5008, 0.0
        %v5073 = vmax.f32 %v5009, 0.0
        %v5074 = vmax.f32 %v5010, 0.0
        %v5075 = vmax.f32 %v5011, 0.0
        %v5076 = vmax.f32 %v5012, 0.0
        %v5077 = vmax.f32 %v5013, 0.0
        %v5078 = vmax.f32 %v5014, 0.0
        %v5079 = vmax.f32 %v5015, 0.0
        %v5080 = vmax.f32 %v5016, 0.0
        %v5081 = vmax.f32 %v5017, 0.0
        %v5082 = vmax.f32 %v5018, 0.0
        %v5083 = vmax.f32 %v5019, 0.0
        %v5084 = vmax.f32 %v5020, 0.0
        %v5085 = vmax.f32 %v5021, 0.0
        %v5086 = vmax.f32 %v5022, 0.0
        %v5087 = vmax.f32 %v5023, 0.0
        %v5088 = vmax.f32 %v5024, 0.0
        %v5089 = vmax.f32 %v5025, 0.0
        %v5090 = vpack.c.bf16 %v5026, %v5026
        %v5091 = vpack.c.bf16 %v5027, %v5027
        %v5092 = vpack.c.bf16 %v5028, %v5028
        %v5093 = vpack.c.bf16 %v5029, %v5029
        %v5094 = vpack.c.bf16 %v5030, %v5030
        %v5095 = vpack.c.bf16 %v5031, %v5031
        %v5096 = vpack.c.bf16 %v5032, %v5032
        %v5097 = vpack.c.bf16 %v5033, %v5033
        %v5098 = vpack.c.bf16 %v5034, %v5034
        %v5099 = vpack.c.bf16 %v5035, %v5035
        %v5100 = vpack.c.bf16 %v5036, %v5036
        %v5101 = vpack.c.bf16 %v5037, %v5037
        %v5102 = vpack.c.bf16 %v5038, %v5038
        %v5103 = vpack.c.bf16 %v5039, %v5039
        %v5104 = vpack.c.bf16 %v5040, %v5040
        %v5105 = vpack.c.bf16 %v5041, %v5041
        %v5106 = vpack.c.bf16 %v5042, %v5042
        %v5107 = vpack.c.bf16 %v5043, %v5043
        %v5108 = vpack.c.bf16 %v5044, %v5044
        %v5109 = vpack.c.bf16 %v5045, %v5045
        %v5110 = vpack.c.bf16 %v5046, %v5046
        %v5111 = vpack.c.bf16 %v5047, %v5047
        %v5112 = vpack.c.bf16 %v5048, %v5048
        %v5113 = vpack.c.bf16 %v5049, %v5049
        %v5114 = vpack.c.bf16 %v5050, %v5050
        %v5115 = vpack.c.bf16 %v5051, %v5051
        %v5116 = vpack.c.bf16 %v5052, %v5052
        %v5117 = vpack.c.bf16 %v5053, %v5053
        %v5118 = vpack.c.bf16 %v5054, %v5054
        %v5119 = vpack.c.bf16 %v5055, %v5055
        %v5120 = vpack.c.bf16 %v5056, %v5056
        %v5121 = vpack.c.bf16 %v5057, %v5057
        %v5122 = vpack.c.bf16 %v5058, %v5058
        %v5123 = vpack.c.bf16 %v5059, %v5059
        %v5124 = vpack.c.bf16 %v5060, %v5060
        %v5125 = vpack.c.bf16 %v5061, %v5061
        %v5126 = vpack.c.bf16 %v5062, %v5062
        %v5127 = vpack.c.bf16 %v5063, %v5063
        %v5128 = vpack.c.bf16 %v5064, %v5064
        %v5129 = vpack.c.bf16 %v5065, %v5065
        %v5130 = vpack.c.bf16 %v5066, %v5066
        %v5131 = vpack.c.bf16 %v5067, %v5067
        %v5132 = vpack.c.bf16 %v5068, %v5068
        %v5133 = vpack.c.bf16 %v5069, %v5069
        %v5134 = vpack.c.bf16 %v5070, %v5070
        %v5135 = vpack.c.bf16 %v5071, %v5071
        %v5136 = vpack.c.bf16 %v5072, %v5072
        %v5137 = vpack.c.bf16 %v5073, %v5073
        %v5138 = vpack.c.bf16 %v5074, %v5074
        %v5139 = vpack.c.bf16 %v5075, %v5075
        %v5140 = vpack.c.bf16 %v5076, %v5076
        %v5141 = vpack.c.bf16 %v5077, %v5077
        %v5142 = vpack.c.bf16 %v5078, %v5078
        %v5143 = vpack.c.bf16 %v5079, %v5079
        %v5144 = vpack.c.bf16 %v5080, %v5080
        %v5145 = vpack.c.bf16 %v5081, %v5081
        %v5146 = vpack.c.bf16 %v5082, %v5082
        %v5147 = vpack.c.bf16 %v5083, %v5083
        %v5148 = vpack.c.bf16 %v5084, %v5084
        %v5149 = vpack.c.bf16 %v5085, %v5085
        %v5150 = vpack.c.bf16 %v5086, %v5086
        %v5151 = vpack.c.bf16 %v5087, %v5087
        %v5152 = vpack.c.bf16 %v5088, %v5088
        %v5153 = vpack.c.bf16 %v5089, %v5089
        %5154 = vst [vmem:[%s240 + $0x500] sm:$0xf] %v5090
        %5155 = vst [vmem:[%s240 + $0x504] sm:$0xf] %v5091
        %5156 = vst [vmem:[%s240 + $0x508] sm:$0xf] %v5092
        %5157 = vst [vmem:[%s240 + $0x50c] sm:$0xf] %v5093
        %5158 = vst [vmem:[%s240 + $0x510] sm:$0xf] %v5094
        %5159 = vst [vmem:[%s240 + $0x514] sm:$0xf] %v5095
        %5160 = vst [vmem:[%s240 + $0x518] sm:$0xf] %v5096
        %5161 = vst [vmem:[%s240 + $0x51c] sm:$0xf] %v5097
        %5162 = vst [vmem:[%s240 + $0x520] sm:$0xf] %v5098
        %5163 = vst [vmem:[%s240 + $0x524] sm:$0xf] %v5099
        %5164 = vst [vmem:[%s240 + $0x528] sm:$0xf] %v5100
        %5165 = vst [vmem:[%s240 + $0x52c] sm:$0xf] %v5101
        %5166 = vst [vmem:[%s240 + $0x530] sm:$0xf] %v5102
        %5167 = vst [vmem:[%s240 + $0x534] sm:$0xf] %v5103
        %5168 = vst [vmem:[%s240 + $0x538] sm:$0xf] %v5104
        %5169 = vst [vmem:[%s240 + $0x53c] sm:$0xf] %v5105
        %5170 = vst [vmem:[%s240 + $0x540] sm:$0xf] %v5106
        %5171 = vst [vmem:[%s240 + $0x544] sm:$0xf] %v5107
        %5172 = vst [vmem:[%s240 + $0x548] sm:$0xf] %v5108
        %5173 = vst [vmem:[%s240 + $0x54c] sm:$0xf] %v5109
        %5174 = vst [vmem:[%s240 + $0x550] sm:$0xf] %v5110
        %5175 = vst [vmem:[%s240 + $0x554] sm:$0xf] %v5111
        %5176 = vst [vmem:[%s240 + $0x558] sm:$0xf] %v5112
        %5177 = vst [vmem:[%s240 + $0x55c] sm:$0xf] %v5113
        %5178 = vst [vmem:[%s240 + $0x560] sm:$0xf] %v5114
        %5179 = vst [vmem:[%s240 + $0x564] sm:$0xf] %v5115
        %5180 = vst [vmem:[%s240 + $0x568] sm:$0xf] %v5116
        %5181 = vst [vmem:[%s240 + $0x56c] sm:$0xf] %v5117
        %5182 = vst [vmem:[%s240 + $0x570] sm:$0xf] %v5118
        %5183 = vst [vmem:[%s240 + $0x574] sm:$0xf] %v5119
        %5184 = vst [vmem:[%s240 + $0x578] sm:$0xf] %v5120
        %5185 = vst [vmem:[%s240 + $0x57c] sm:$0xf] %v5121
        %5186 = vst [vmem:[%s240 + $0x580] sm:$0xf] %v5122
        %5187 = vst [vmem:[%s240 + $0x584] sm:$0xf] %v5123
        %5188 = vst [vmem:[%s240 + $0x588] sm:$0xf] %v5124
        %5189 = vst [vmem:[%s240 + $0x58c] sm:$0xf] %v5125
        %5190 = vst [vmem:[%s240 + $0x590] sm:$0xf] %v5126
        %5191 = vst [vmem:[%s240 + $0x594] sm:$0xf] %v5127
        %5192 = vst [vmem:[%s240 + $0x598] sm:$0xf] %v5128
        %5193 = vst [vmem:[%s240 + $0x59c] sm:$0xf] %v5129
        %5194 = vst [vmem:[%s240 + $0x5a0] sm:$0xf] %v5130
        %5195 = vst [vmem:[%s240 + $0x5a4] sm:$0xf] %v5131
        %5196 = vst [vmem:[%s240 + $0x5a8] sm:$0xf] %v5132
        %5197 = vst [vmem:[%s240 + $0x5ac] sm:$0xf] %v5133
        %5198 = vst [vmem:[%s240 + $0x5b0] sm:$0xf] %v5134
        %5199 = vst [vmem:[%s240 + $0x5b4] sm:$0xf] %v5135
        %5200 = vst [vmem:[%s240 + $0x5b8] sm:$0xf] %v5136
        %5201 = vst [vmem:[%s240 + $0x5bc] sm:$0xf] %v5137
        %5202 = vst [vmem:[%s240 + $0x5c0] sm:$0xf] %v5138
        %5203 = vst [vmem:[%s240 + $0x5c4] sm:$0xf] %v5139
        %5204 = vst [vmem:[%s240 + $0x5c8] sm:$0xf] %v5140
        %5205 = vst [vmem:[%s240 + $0x5cc] sm:$0xf] %v5141
        %5206 = vst [vmem:[%s240 + $0x5d0] sm:$0xf] %v5142
        %5207 = vst [vmem:[%s240 + $0x5d4] sm:$0xf] %v5143
        %5208 = vst [vmem:[%s240 + $0x5d8] sm:$0xf] %v5144
        %5209 = vst [vmem:[%s240 + $0x5dc] sm:$0xf] %v5145
        %5210 = vst [vmem:[%s240 + $0x5e0] sm:$0xf] %v5146
        %5211 = vst [vmem:[%s240 + $0x5e4] sm:$0xf] %v5147
        %5212 = vst [vmem:[%s240 + $0x5e8] sm:$0xf] %v5148
        %5213 = vst [vmem:[%s240 + $0x5ec] sm:$0xf] %v5149
        %5214 = vst [vmem:[%s240 + $0x5f0] sm:$0xf] %v5150
        %5215 = vst [vmem:[%s240 + $0x5f4] sm:$0xf] %v5151
        %5216 = vst [vmem:[%s240 + $0x5f8] sm:$0xf] %v5152
        %5217 = vst [vmem:[%s240 + $0x5fc] sm:$0xf] %v5153
        %v5218 = vld [vmem:[%s245 + $0x600] sm:$0xf]
        %v5219 = vld [vmem:[%s245 + $0x604] sm:$0xf]
        %v5220 = vld [vmem:[%s245 + $0x608] sm:$0xf]
        %v5221 = vld [vmem:[%s245 + $0x60c] sm:$0xf]
        %v5222 = vld [vmem:[%s245 + $0x610] sm:$0xf]
        %v5223 = vld [vmem:[%s245 + $0x614] sm:$0xf]
        %v5224 = vld [vmem:[%s245 + $0x618] sm:$0xf]
        %v5225 = vld [vmem:[%s245 + $0x61c] sm:$0xf]
        %v5226 = vld [vmem:[%s245 + $0x620] sm:$0xf]
        %v5227 = vld [vmem:[%s245 + $0x624] sm:$0xf]
        %v5228 = vld [vmem:[%s245 + $0x628] sm:$0xf]
        %v5229 = vld [vmem:[%s245 + $0x62c] sm:$0xf]
        %v5230 = vld [vmem:[%s245 + $0x630] sm:$0xf]
        %v5231 = vld [vmem:[%s245 + $0x634] sm:$0xf]
        %v5232 = vld [vmem:[%s245 + $0x638] sm:$0xf]
        %v5233 = vld [vmem:[%s245 + $0x63c] sm:$0xf]
        %v5234 = vld [vmem:[%s245 + $0x640] sm:$0xf]
        %v5235 = vld [vmem:[%s245 + $0x644] sm:$0xf]
        %v5236 = vld [vmem:[%s245 + $0x648] sm:$0xf]
        %v5237 = vld [vmem:[%s245 + $0x64c] sm:$0xf]
        %v5238 = vld [vmem:[%s245 + $0x650] sm:$0xf]
        %v5239 = vld [vmem:[%s245 + $0x654] sm:$0xf]
        %v5240 = vld [vmem:[%s245 + $0x658] sm:$0xf]
        %v5241 = vld [vmem:[%s245 + $0x65c] sm:$0xf]
        %v5242 = vld [vmem:[%s245 + $0x660] sm:$0xf]
        %v5243 = vld [vmem:[%s245 + $0x664] sm:$0xf]
        %v5244 = vld [vmem:[%s245 + $0x668] sm:$0xf]
        %v5245 = vld [vmem:[%s245 + $0x66c] sm:$0xf]
        %v5246 = vld [vmem:[%s245 + $0x670] sm:$0xf]
        %v5247 = vld [vmem:[%s245 + $0x674] sm:$0xf]
        %v5248 = vld [vmem:[%s245 + $0x678] sm:$0xf]
        %v5249 = vld [vmem:[%s245 + $0x67c] sm:$0xf]
        %v5250 = vld [vmem:[%s245 + $0x680] sm:$0xf]
        %v5251 = vld [vmem:[%s245 + $0x684] sm:$0xf]
        %v5252 = vld [vmem:[%s245 + $0x688] sm:$0xf]
        %v5253 = vld [vmem:[%s245 + $0x68c] sm:$0xf]
        %v5254 = vld [vmem:[%s245 + $0x690] sm:$0xf]
        %v5255 = vld [vmem:[%s245 + $0x694] sm:$0xf]
        %v5256 = vld [vmem:[%s245 + $0x698] sm:$0xf]
        %v5257 = vld [vmem:[%s245 + $0x69c] sm:$0xf]
        %v5258 = vld [vmem:[%s245 + $0x6a0] sm:$0xf]
        %v5259 = vld [vmem:[%s245 + $0x6a4] sm:$0xf]
        %v5260 = vld [vmem:[%s245 + $0x6a8] sm:$0xf]
        %v5261 = vld [vmem:[%s245 + $0x6ac] sm:$0xf]
        %v5262 = vld [vmem:[%s245 + $0x6b0] sm:$0xf]
        %v5263 = vld [vmem:[%s245 + $0x6b4] sm:$0xf]
        %v5264 = vld [vmem:[%s245 + $0x6b8] sm:$0xf]
        %v5265 = vld [vmem:[%s245 + $0x6bc] sm:$0xf]
        %v5266 = vld [vmem:[%s245 + $0x6c0] sm:$0xf]
        %v5267 = vld [vmem:[%s245 + $0x6c4] sm:$0xf]
        %v5268 = vld [vmem:[%s245 + $0x6c8] sm:$0xf]
        %v5269 = vld [vmem:[%s245 + $0x6cc] sm:$0xf]
        %v5270 = vld [vmem:[%s245 + $0x6d0] sm:$0xf]
        %v5271 = vld [vmem:[%s245 + $0x6d4] sm:$0xf]
        %v5272 = vld [vmem:[%s245 + $0x6d8] sm:$0xf]
        %v5273 = vld [vmem:[%s245 + $0x6dc] sm:$0xf]
        %v5274 = vld [vmem:[%s245 + $0x6e0] sm:$0xf]
        %v5275 = vld [vmem:[%s245 + $0x6e4] sm:$0xf]
        %v5276 = vld [vmem:[%s245 + $0x6e8] sm:$0xf]
        %v5277 = vld [vmem:[%s245 + $0x6ec] sm:$0xf]
        %v5278 = vld [vmem:[%s245 + $0x6f0] sm:$0xf]
        %v5279 = vld [vmem:[%s245 + $0x6f4] sm:$0xf]
        %v5280 = vld [vmem:[%s245 + $0x6f8] sm:$0xf]
        %v5281 = vld [vmem:[%s245 + $0x6fc] sm:$0xf]
        %v5282 = vld [vmem:[%s250] sm:$0xf]
        %v5283 = vld [vmem:[%s250 + $0x4] sm:$0xf]
        %v5284 = vld [vmem:[%s250 + $0x8] sm:$0xf]
        %v5285 = vld [vmem:[%s250 + $0xc] sm:$0xf]
        %v5350 = vunpack.c.l.b16 %v5218
        %v5351 = vunpack.c.l.b16 %v5219
        %v5352 = vunpack.c.l.b16 %v5220
        %v5353 = vunpack.c.l.b16 %v5221
        %v5354 = vunpack.c.l.b16 %v5222
        %v5355 = vunpack.c.l.b16 %v5223
        %v5356 = vunpack.c.l.b16 %v5224
        %v5357 = vunpack.c.l.b16 %v5225
        %v5358 = vunpack.c.l.b16 %v5226
        %v5359 = vunpack.c.l.b16 %v5227
        %v5360 = vunpack.c.l.b16 %v5228
        %v5361 = vunpack.c.l.b16 %v5229
        %v5362 = vunpack.c.l.b16 %v5230
        %v5363 = vunpack.c.l.b16 %v5231
        %v5364 = vunpack.c.l.b16 %v5232
        %v5365 = vunpack.c.l.b16 %v5233
        %v5366 = vunpack.c.l.b16 %v5234
        %v5367 = vunpack.c.l.b16 %v5235
        %v5368 = vunpack.c.l.b16 %v5236
        %v5369 = vunpack.c.l.b16 %v5237
        %v5370 = vunpack.c.l.b16 %v5238
        %v5371 = vunpack.c.l.b16 %v5239
        %v5372 = vunpack.c.l.b16 %v5240
        %v5373 = vunpack.c.l.b16 %v5241
        %v5374 = vunpack.c.l.b16 %v5242
        %v5375 = vunpack.c.l.b16 %v5243
        %v5376 = vunpack.c.l.b16 %v5244
        %v5377 = vunpack.c.l.b16 %v5245
        %v5378 = vunpack.c.l.b16 %v5246
        %v5379 = vunpack.c.l.b16 %v5247
        %v5380 = vunpack.c.l.b16 %v5248
        %v5381 = vunpack.c.l.b16 %v5249
        %v5382 = vunpack.c.l.b16 %v5250
        %v5383 = vunpack.c.l.b16 %v5251
        %v5384 = vunpack.c.l.b16 %v5252
        %v5385 = vunpack.c.l.b16 %v5253
        %v5386 = vunpack.c.l.b16 %v5254
        %v5387 = vunpack.c.l.b16 %v5255
        %v5388 = vunpack.c.l.b16 %v5256
        %v5389 = vunpack.c.l.b16 %v5257
        %v5390 = vunpack.c.l.b16 %v5258
        %v5391 = vunpack.c.l.b16 %v5259
        %v5392 = vunpack.c.l.b16 %v5260
        %v5393 = vunpack.c.l.b16 %v5261
        %v5394 = vunpack.c.l.b16 %v5262
        %v5395 = vunpack.c.l.b16 %v5263
        %v5396 = vunpack.c.l.b16 %v5264
        %v5397 = vunpack.c.l.b16 %v5265
        %v5398 = vunpack.c.l.b16 %v5266
        %v5399 = vunpack.c.l.b16 %v5267
        %v5400 = vunpack.c.l.b16 %v5268
        %v5401 = vunpack.c.l.b16 %v5269
        %v5402 = vunpack.c.l.b16 %v5270
        %v5403 = vunpack.c.l.b16 %v5271
        %v5404 = vunpack.c.l.b16 %v5272
        %v5405 = vunpack.c.l.b16 %v5273
        %v5406 = vunpack.c.l.b16 %v5274
        %v5407 = vunpack.c.l.b16 %v5275
        %v5408 = vunpack.c.l.b16 %v5276
        %v5409 = vunpack.c.l.b16 %v5277
        %v5410 = vunpack.c.l.b16 %v5278
        %v5411 = vunpack.c.l.b16 %v5279
        %v5412 = vunpack.c.l.b16 %v5280
        %v5413 = vunpack.c.l.b16 %v5281
        %v5414 = vpack.c.b16 %v5351, %v5350
        %v5415 = vpack.c.b16 %v5353, %v5352
        %v5416 = vpack.c.b16 %v5355, %v5354
        %v5417 = vpack.c.b16 %v5357, %v5356
        %v5418 = vpack.c.b16 %v5359, %v5358
        %v5419 = vpack.c.b16 %v5361, %v5360
        %v5420 = vpack.c.b16 %v5363, %v5362
        %v5421 = vpack.c.b16 %v5365, %v5364
        %v5422 = vpack.c.b16 %v5367, %v5366
        %v5423 = vpack.c.b16 %v5369, %v5368
        %v5424 = vpack.c.b16 %v5371, %v5370
        %v5425 = vpack.c.b16 %v5373, %v5372
        %v5426 = vpack.c.b16 %v5375, %v5374
        %v5427 = vpack.c.b16 %v5377, %v5376
        %v5428 = vpack.c.b16 %v5379, %v5378
        %v5429 = vpack.c.b16 %v5381, %v5380
        %v5430 = vpack.c.b16 %v5383, %v5382
        %v5431 = vpack.c.b16 %v5385, %v5384
        %v5432 = vpack.c.b16 %v5387, %v5386
        %v5433 = vpack.c.b16 %v5389, %v5388
        %v5434 = vpack.c.b16 %v5391, %v5390
        %v5435 = vpack.c.b16 %v5393, %v5392
        %v5436 = vpack.c.b16 %v5395, %v5394
        %v5437 = vpack.c.b16 %v5397, %v5396
        %v5438 = vpack.c.b16 %v5399, %v5398
        %v5439 = vpack.c.b16 %v5401, %v5400
        %v5440 = vpack.c.b16 %v5403, %v5402
        %v5441 = vpack.c.b16 %v5405, %v5404
        %v5442 = vpack.c.b16 %v5407, %v5406
        %v5443 = vpack.c.b16 %v5409, %v5408
        %v5444 = vpack.c.b16 %v5411, %v5410
        %v5445 = vpack.c.b16 %v5413, %v5412
        %v5450 = vunpack.c.l.b16 %v5282
        %v5451 = vunpack.c.l.b16 %v5283
        %v5452 = vunpack.c.l.b16 %v5284
        %v5453 = vunpack.c.l.b16 %v5285
        %v5454 = vpack.c.b16 %v5451, %v5450
        %v5455 = vpack.c.b16 %v5453, %v5452
        %v5459 = vsel %vm501, %v5414, 0
        %v5462 = vsel %vm501, %v5415, 0
        %v5465 = vsel %vm501, %v5416, 0
        %v5468 = vsel %vm501, %v5417, 0
        %v5471 = vsel %vm501, %v5418, 0
        %v5474 = vsel %vm501, %v5419, 0
        %v5477 = vsel %vm501, %v5420, 0
        %v5480 = vsel %vm501, %v5421, 0
        %v5483 = vsel %vm501, %v5422, 0
        %v5486 = vsel %vm501, %v5423, 0
        %v5489 = vsel %vm501, %v5424, 0
        %v5492 = vsel %vm501, %v5425, 0
        %v5495 = vsel %vm501, %v5426, 0
        %v5498 = vsel %vm501, %v5427, 0
        %v5501 = vsel %vm501, %v5428, 0
        %v5504 = vsel %vm501, %v5429, 0
        %v5507 = vsel %vm501, %v5430, 0
        %v5510 = vsel %vm501, %v5431, 0
        %v5513 = vsel %vm501, %v5432, 0
        %v5516 = vsel %vm501, %v5433, 0
        %v5519 = vsel %vm501, %v5434, 0
        %v5522 = vsel %vm501, %v5435, 0
        %v5525 = vsel %vm501, %v5436, 0
        %v5528 = vsel %vm501, %v5437, 0
        %v5531 = vsel %vm501, %v5438, 0
        %v5534 = vsel %vm501, %v5439, 0
        %v5537 = vsel %vm501, %v5440, 0
        %v5540 = vsel %vm501, %v5441, 0
        %v5543 = vsel %vm501, %v5442, 0
        %v5546 = vsel %vm501, %v5443, 0
        %v5549 = vsel %vm501, %v5444, 0
        %v5552 = vsel %vm501, %v5445, 0
        %5554 = vmatpush.bf16.msra.mxu0 0
        %5555 = vmatpush.bf16.msra.mxu0 0
        %5556 = vmatpush.bf16.msra.mxu0 0
        %5557 = vmatpush.bf16.msra.mxu0 0
        %5558 = vmatpush.bf16.msra.mxu0 0
        %5559 = vmatpush.bf16.msra.mxu0 0
        %5560 = vmatpush.bf16.msra.mxu0 %v5455
        %5561 = vmatpush.bf16.msra.mxu0 %v5454
        %5562 = vmatmul.bf16.gmra.mxu0 %v5459
        %v5563 = vpop.f32.mrf.mxu0
        %v5564 = vadd.f32 0.0, %v5563
        %v5565 = vpop.f32.mrf.mxu0
        %v5566 = vadd.f32 0.0, %v5565
        %5567 = vmatmul.bf16.gmra.mxu0 %v5462
        %v5568 = vpop.f32.mrf.mxu0
        %v5569 = vadd.f32 0.0, %v5568
        %v5570 = vpop.f32.mrf.mxu0
        %v5571 = vadd.f32 0.0, %v5570
        %5572 = vmatmul.bf16.gmra.mxu0 %v5465
        %v5573 = vpop.f32.mrf.mxu0
        %v5574 = vadd.f32 0.0, %v5573
        %v5575 = vpop.f32.mrf.mxu0
        %v5576 = vadd.f32 0.0, %v5575
        %5577 = vmatmul.bf16.gmra.mxu0 %v5468
        %v5578 = vpop.f32.mrf.mxu0
        %v5579 = vadd.f32 0.0, %v5578
        %v5580 = vpop.f32.mrf.mxu0
        %v5581 = vadd.f32 0.0, %v5580
        %5582 = vmatmul.bf16.gmra.mxu0 %v5471
        %v5583 = vpop.f32.mrf.mxu0
        %v5584 = vadd.f32 0.0, %v5583
        %v5585 = vpop.f32.mrf.mxu0
        %v5586 = vadd.f32 0.0, %v5585
        %5587 = vmatmul.bf16.gmra.mxu0 %v5474
        %v5588 = vpop.f32.mrf.mxu0
        %v5589 = vadd.f32 0.0, %v5588
        %v5590 = vpop.f32.mrf.mxu0
        %v5591 = vadd.f32 0.0, %v5590
        %5592 = vmatmul.bf16.gmra.mxu0 %v5477
        %v5593 = vpop.f32.mrf.mxu0
        %v5594 = vadd.f32 0.0, %v5593
        %v5595 = vpop.f32.mrf.mxu0
        %v5596 = vadd.f32 0.0, %v5595
        %5597 = vmatmul.bf16.gmra.mxu0 %v5480
        %v5598 = vpop.f32.mrf.mxu0
        %v5599 = vadd.f32 0.0, %v5598
        %v5600 = vpop.f32.mrf.mxu0
        %v5601 = vadd.f32 0.0, %v5600
        %5602 = vmatmul.bf16.gmra.mxu0 %v5483
        %v5603 = vpop.f32.mrf.mxu0
        %v5604 = vadd.f32 0.0, %v5603
        %v5605 = vpop.f32.mrf.mxu0
        %v5606 = vadd.f32 0.0, %v5605
        %5607 = vmatmul.bf16.gmra.mxu0 %v5486
        %v5608 = vpop.f32.mrf.mxu0
        %v5609 = vadd.f32 0.0, %v5608
        %v5610 = vpop.f32.mrf.mxu0
        %v5611 = vadd.f32 0.0, %v5610
        %5612 = vmatmul.bf16.gmra.mxu0 %v5489
        %v5613 = vpop.f32.mrf.mxu0
        %v5614 = vadd.f32 0.0, %v5613
        %v5615 = vpop.f32.mrf.mxu0
        %v5616 = vadd.f32 0.0, %v5615
        %5617 = vmatmul.bf16.gmra.mxu0 %v5492
        %v5618 = vpop.f32.mrf.mxu0
        %v5619 = vadd.f32 0.0, %v5618
        %v5620 = vpop.f32.mrf.mxu0
        %v5621 = vadd.f32 0.0, %v5620
        %5622 = vmatmul.bf16.gmra.mxu0 %v5495
        %v5623 = vpop.f32.mrf.mxu0
        %v5624 = vadd.f32 0.0, %v5623
        %v5625 = vpop.f32.mrf.mxu0
        %v5626 = vadd.f32 0.0, %v5625
        %5627 = vmatmul.bf16.gmra.mxu0 %v5498
        %v5628 = vpop.f32.mrf.mxu0
        %v5629 = vadd.f32 0.0, %v5628
        %v5630 = vpop.f32.mrf.mxu0
        %v5631 = vadd.f32 0.0, %v5630
        %5632 = vmatmul.bf16.gmra.mxu0 %v5501
        %v5633 = vpop.f32.mrf.mxu0
        %v5634 = vadd.f32 0.0, %v5633
        %v5635 = vpop.f32.mrf.mxu0
        %v5636 = vadd.f32 0.0, %v5635
        %5637 = vmatmul.bf16.gmra.mxu0 %v5504
        %v5638 = vpop.f32.mrf.mxu0
        %v5639 = vadd.f32 0.0, %v5638
        %v5640 = vpop.f32.mrf.mxu0
        %v5641 = vadd.f32 0.0, %v5640
        %5642 = vmatmul.bf16.gmra.mxu0 %v5507
        %v5643 = vpop.f32.mrf.mxu0
        %v5644 = vadd.f32 0.0, %v5643
        %v5645 = vpop.f32.mrf.mxu0
        %v5646 = vadd.f32 0.0, %v5645
        %5647 = vmatmul.bf16.gmra.mxu0 %v5510
        %v5648 = vpop.f32.mrf.mxu0
        %v5649 = vadd.f32 0.0, %v5648
        %v5650 = vpop.f32.mrf.mxu0
        %v5651 = vadd.f32 0.0, %v5650
        %5652 = vmatmul.bf16.gmra.mxu0 %v5513
        %v5653 = vpop.f32.mrf.mxu0
        %v5654 = vadd.f32 0.0, %v5653
        %v5655 = vpop.f32.mrf.mxu0
        %v5656 = vadd.f32 0.0, %v5655
        %5657 = vmatmul.bf16.gmra.mxu0 %v5516
        %v5658 = vpop.f32.mrf.mxu0
        %v5659 = vadd.f32 0.0, %v5658
        %v5660 = vpop.f32.mrf.mxu0
        %v5661 = vadd.f32 0.0, %v5660
        %5662 = vmatmul.bf16.gmra.mxu0 %v5519
        %v5663 = vpop.f32.mrf.mxu0
        %v5664 = vadd.f32 0.0, %v5663
        %v5665 = vpop.f32.mrf.mxu0
        %v5666 = vadd.f32 0.0, %v5665
        %5667 = vmatmul.bf16.gmra.mxu0 %v5522
        %v5668 = vpop.f32.mrf.mxu0
        %v5669 = vadd.f32 0.0, %v5668
        %v5670 = vpop.f32.mrf.mxu0
        %v5671 = vadd.f32 0.0, %v5670
        %5672 = vmatmul.bf16.gmra.mxu0 %v5525
        %v5673 = vpop.f32.mrf.mxu0
        %v5674 = vadd.f32 0.0, %v5673
        %v5675 = vpop.f32.mrf.mxu0
        %v5676 = vadd.f32 0.0, %v5675
        %5677 = vmatmul.bf16.gmra.mxu0 %v5528
        %v5678 = vpop.f32.mrf.mxu0
        %v5679 = vadd.f32 0.0, %v5678
        %v5680 = vpop.f32.mrf.mxu0
        %v5681 = vadd.f32 0.0, %v5680
        %5682 = vmatmul.bf16.gmra.mxu0 %v5531
        %v5683 = vpop.f32.mrf.mxu0
        %v5684 = vadd.f32 0.0, %v5683
        %v5685 = vpop.f32.mrf.mxu0
        %v5686 = vadd.f32 0.0, %v5685
        %5687 = vmatmul.bf16.gmra.mxu0 %v5534
        %v5688 = vpop.f32.mrf.mxu0
        %v5689 = vadd.f32 0.0, %v5688
        %v5690 = vpop.f32.mrf.mxu0
        %v5691 = vadd.f32 0.0, %v5690
        %5692 = vmatmul.bf16.gmra.mxu0 %v5537
        %v5693 = vpop.f32.mrf.mxu0
        %v5694 = vadd.f32 0.0, %v5693
        %v5695 = vpop.f32.mrf.mxu0
        %v5696 = vadd.f32 0.0, %v5695
        %5697 = vmatmul.bf16.gmra.mxu0 %v5540
        %v5698 = vpop.f32.mrf.mxu0
        %v5699 = vadd.f32 0.0, %v5698
        %v5700 = vpop.f32.mrf.mxu0
        %v5701 = vadd.f32 0.0, %v5700
        %5702 = vmatmul.bf16.gmra.mxu0 %v5543
        %v5703 = vpop.f32.mrf.mxu0
        %v5704 = vadd.f32 0.0, %v5703
        %v5705 = vpop.f32.mrf.mxu0
        %v5706 = vadd.f32 0.0, %v5705
        %5707 = vmatmul.bf16.gmra.mxu0 %v5546
        %v5708 = vpop.f32.mrf.mxu0
        %v5709 = vadd.f32 0.0, %v5708
        %v5710 = vpop.f32.mrf.mxu0
        %v5711 = vadd.f32 0.0, %v5710
        %5712 = vmatmul.bf16.gmra.mxu0 %v5549
        %v5713 = vpop.f32.mrf.mxu0
        %v5714 = vadd.f32 0.0, %v5713
        %v5715 = vpop.f32.mrf.mxu0
        %v5716 = vadd.f32 0.0, %v5715
        %5717 = vmatmul.bf16.gmra.mxu0 %v5552
        %v5718 = vpop.f32.mrf.mxu0
        %v5719 = vadd.f32 0.0, %v5718
        %v5720 = vpop.f32.mrf.mxu0
        %v5721 = vadd.f32 0.0, %v5720
        %5722 = vdwg.mxu0
        %v5723 = vmul.f32 %v5564, %v768
        %v5724 = vmul.f32 %v5566, %v768
        %v5725 = vmul.f32 %v5569, %v768
        %v5726 = vmul.f32 %v5571, %v768
        %v5727 = vmul.f32 %v5574, %v768
        %v5728 = vmul.f32 %v5576, %v768
        %v5729 = vmul.f32 %v5579, %v768
        %v5730 = vmul.f32 %v5581, %v768
        %v5731 = vmul.f32 %v5584, %v768
        %v5732 = vmul.f32 %v5586, %v768
        %v5733 = vmul.f32 %v5589, %v768
        %v5734 = vmul.f32 %v5591, %v768
        %v5735 = vmul.f32 %v5594, %v768
        %v5736 = vmul.f32 %v5596, %v768
        %v5737 = vmul.f32 %v5599, %v768
        %v5738 = vmul.f32 %v5601, %v768
        %v5739 = vmul.f32 %v5604, %v768
        %v5740 = vmul.f32 %v5606, %v768
        %v5741 = vmul.f32 %v5609, %v768
        %v5742 = vmul.f32 %v5611, %v768
        %v5743 = vmul.f32 %v5614, %v768
        %v5744 = vmul.f32 %v5616, %v768
        %v5745 = vmul.f32 %v5619, %v768
        %v5746 = vmul.f32 %v5621, %v768
        %v5747 = vmul.f32 %v5624, %v768
        %v5748 = vmul.f32 %v5626, %v768
        %v5749 = vmul.f32 %v5629, %v768
        %v5750 = vmul.f32 %v5631, %v768
        %v5751 = vmul.f32 %v5634, %v768
        %v5752 = vmul.f32 %v5636, %v768
        %v5753 = vmul.f32 %v5639, %v768
        %v5754 = vmul.f32 %v5641, %v768
        %v5755 = vmul.f32 %v5644, %v768
        %v5756 = vmul.f32 %v5646, %v768
        %v5757 = vmul.f32 %v5649, %v768
        %v5758 = vmul.f32 %v5651, %v768
        %v5759 = vmul.f32 %v5654, %v768
        %v5760 = vmul.f32 %v5656, %v768
        %v5761 = vmul.f32 %v5659, %v768
        %v5762 = vmul.f32 %v5661, %v768
        %v5763 = vmul.f32 %v5664, %v768
        %v5764 = vmul.f32 %v5666, %v768
        %v5765 = vmul.f32 %v5669, %v768
        %v5766 = vmul.f32 %v5671, %v768
        %v5767 = vmul.f32 %v5674, %v768
        %v5768 = vmul.f32 %v5676, %v768
        %v5769 = vmul.f32 %v5679, %v768
        %v5770 = vmul.f32 %v5681, %v768
        %v5771 = vmul.f32 %v5684, %v768
        %v5772 = vmul.f32 %v5686, %v768
        %v5773 = vmul.f32 %v5689, %v768
        %v5774 = vmul.f32 %v5691, %v768
        %v5775 = vmul.f32 %v5694, %v768
        %v5776 = vmul.f32 %v5696, %v768
        %v5777 = vmul.f32 %v5699, %v768
        %v5778 = vmul.f32 %v5701, %v768
        %v5779 = vmul.f32 %v5704, %v768
        %v5780 = vmul.f32 %v5706, %v768
        %v5781 = vmul.f32 %v5709, %v768
        %v5782 = vmul.f32 %v5711, %v768
        %v5783 = vmul.f32 %v5714, %v768
        %v5784 = vmul.f32 %v5716, %v768
        %v5785 = vmul.f32 %v5719, %v768
        %v5786 = vmul.f32 %v5721, %v768
        %v5787 = vadd.f32 %v5723, %v835
        %v5788 = vadd.f32 %v5724, %v835
        %v5789 = vadd.f32 %v5725, %v835
        %v5790 = vadd.f32 %v5726, %v835
        %v5791 = vadd.f32 %v5727, %v835
        %v5792 = vadd.f32 %v5728, %v835
        %v5793 = vadd.f32 %v5729, %v835
        %v5794 = vadd.f32 %v5730, %v835
        %v5795 = vadd.f32 %v5731, %v835
        %v5796 = vadd.f32 %v5732, %v835
        %v5797 = vadd.f32 %v5733, %v835
        %v5798 = vadd.f32 %v5734, %v835
        %v5799 = vadd.f32 %v5735, %v835
        %v5800 = vadd.f32 %v5736, %v835
        %v5801 = vadd.f32 %v5737, %v835
        %v5802 = vadd.f32 %v5738, %v835
        %v5803 = vadd.f32 %v5739, %v835
        %v5804 = vadd.f32 %v5740, %v835
        %v5805 = vadd.f32 %v5741, %v835
        %v5806 = vadd.f32 %v5742, %v835
        %v5807 = vadd.f32 %v5743, %v835
        %v5808 = vadd.f32 %v5744, %v835
        %v5809 = vadd.f32 %v5745, %v835
        %v5810 = vadd.f32 %v5746, %v835
        %v5811 = vadd.f32 %v5747, %v835
        %v5812 = vadd.f32 %v5748, %v835
        %v5813 = vadd.f32 %v5749, %v835
        %v5814 = vadd.f32 %v5750, %v835
        %v5815 = vadd.f32 %v5751, %v835
        %v5816 = vadd.f32 %v5752, %v835
        %v5817 = vadd.f32 %v5753, %v835
        %v5818 = vadd.f32 %v5754, %v835
        %v5819 = vadd.f32 %v5755, %v835
        %v5820 = vadd.f32 %v5756, %v835
        %v5821 = vadd.f32 %v5757, %v835
        %v5822 = vadd.f32 %v5758, %v835
        %v5823 = vadd.f32 %v5759, %v835
        %v5824 = vadd.f32 %v5760, %v835
        %v5825 = vadd.f32 %v5761, %v835
        %v5826 = vadd.f32 %v5762, %v835
        %v5827 = vadd.f32 %v5763, %v835
        %v5828 = vadd.f32 %v5764, %v835
        %v5829 = vadd.f32 %v5765, %v835
        %v5830 = vadd.f32 %v5766, %v835
        %v5831 = vadd.f32 %v5767, %v835
        %v5832 = vadd.f32 %v5768, %v835
        %v5833 = vadd.f32 %v5769, %v835
        %v5834 = vadd.f32 %v5770, %v835
        %v5835 = vadd.f32 %v5771, %v835
        %v5836 = vadd.f32 %v5772, %v835
        %v5837 = vadd.f32 %v5773, %v835
        %v5838 = vadd.f32 %v5774, %v835
        %v5839 = vadd.f32 %v5775, %v835
        %v5840 = vadd.f32 %v5776, %v835
        %v5841 = vadd.f32 %v5777, %v835
        %v5842 = vadd.f32 %v5778, %v835
        %v5843 = vadd.f32 %v5779, %v835
        %v5844 = vadd.f32 %v5780, %v835
        %v5845 = vadd.f32 %v5781, %v835
        %v5846 = vadd.f32 %v5782, %v835
        %v5847 = vadd.f32 %v5783, %v835
        %v5848 = vadd.f32 %v5784, %v835
        %v5849 = vadd.f32 %v5785, %v835
        %v5850 = vadd.f32 %v5786, %v835
        %v5851 = vmax.f32 %v5787, 0.0
        %v5852 = vmax.f32 %v5788, 0.0
        %v5853 = vmax.f32 %v5789, 0.0
        %v5854 = vmax.f32 %v5790, 0.0
        %v5855 = vmax.f32 %v5791, 0.0
        %v5856 = vmax.f32 %v5792, 0.0
        %v5857 = vmax.f32 %v5793, 0.0
        %v5858 = vmax.f32 %v5794, 0.0
        %v5859 = vmax.f32 %v5795, 0.0
        %v5860 = vmax.f32 %v5796, 0.0
        %v5861 = vmax.f32 %v5797, 0.0
        %v5862 = vmax.f32 %v5798, 0.0
        %v5863 = vmax.f32 %v5799, 0.0
        %v5864 = vmax.f32 %v5800, 0.0
        %v5865 = vmax.f32 %v5801, 0.0
        %v5866 = vmax.f32 %v5802, 0.0
        %v5867 = vmax.f32 %v5803, 0.0
        %v5868 = vmax.f32 %v5804, 0.0
        %v5869 = vmax.f32 %v5805, 0.0
        %v5870 = vmax.f32 %v5806, 0.0
        %v5871 = vmax.f32 %v5807, 0.0
        %v5872 = vmax.f32 %v5808, 0.0
        %v5873 = vmax.f32 %v5809, 0.0
        %v5874 = vmax.f32 %v5810, 0.0
        %v5875 = vmax.f32 %v5811, 0.0
        %v5876 = vmax.f32 %v5812, 0.0
        %v5877 = vmax.f32 %v5813, 0.0
        %v5878 = vmax.f32 %v5814, 0.0
        %v5879 = vmax.f32 %v5815, 0.0
        %v5880 = vmax.f32 %v5816, 0.0
        %v5881 = vmax.f32 %v5817, 0.0
        %v5882 = vmax.f32 %v5818, 0.0
        %v5883 = vmax.f32 %v5819, 0.0
        %v5884 = vmax.f32 %v5820, 0.0
        %v5885 = vmax.f32 %v5821, 0.0
        %v5886 = vmax.f32 %v5822, 0.0
        %v5887 = vmax.f32 %v5823, 0.0
        %v5888 = vmax.f32 %v5824, 0.0
        %v5889 = vmax.f32 %v5825, 0.0
        %v5890 = vmax.f32 %v5826, 0.0
        %v5891 = vmax.f32 %v5827, 0.0
        %v5892 = vmax.f32 %v5828, 0.0
        %v5893 = vmax.f32 %v5829, 0.0
        %v5894 = vmax.f32 %v5830, 0.0
        %v5895 = vmax.f32 %v5831, 0.0
        %v5896 = vmax.f32 %v5832, 0.0
        %v5897 = vmax.f32 %v5833, 0.0
        %v5898 = vmax.f32 %v5834, 0.0
        %v5899 = vmax.f32 %v5835, 0.0
        %v5900 = vmax.f32 %v5836, 0.0
        %v5901 = vmax.f32 %v5837, 0.0
        %v5902 = vmax.f32 %v5838, 0.0
        %v5903 = vmax.f32 %v5839, 0.0
        %v5904 = vmax.f32 %v5840, 0.0
        %v5905 = vmax.f32 %v5841, 0.0
        %v5906 = vmax.f32 %v5842, 0.0
        %v5907 = vmax.f32 %v5843, 0.0
        %v5908 = vmax.f32 %v5844, 0.0
        %v5909 = vmax.f32 %v5845, 0.0
        %v5910 = vmax.f32 %v5846, 0.0
        %v5911 = vmax.f32 %v5847, 0.0
        %v5912 = vmax.f32 %v5848, 0.0
        %v5913 = vmax.f32 %v5849, 0.0
        %v5914 = vmax.f32 %v5850, 0.0
        %v5915 = vpack.c.bf16 %v5851, %v5851
        %v5916 = vpack.c.bf16 %v5852, %v5852
        %v5917 = vpack.c.bf16 %v5853, %v5853
        %v5918 = vpack.c.bf16 %v5854, %v5854
        %v5919 = vpack.c.bf16 %v5855, %v5855
        %v5920 = vpack.c.bf16 %v5856, %v5856
        %v5921 = vpack.c.bf16 %v5857, %v5857
        %v5922 = vpack.c.bf16 %v5858, %v5858
        %v5923 = vpack.c.bf16 %v5859, %v5859
        %v5924 = vpack.c.bf16 %v5860, %v5860
        %v5925 = vpack.c.bf16 %v5861, %v5861
        %v5926 = vpack.c.bf16 %v5862, %v5862
        %v5927 = vpack.c.bf16 %v5863, %v5863
        %v5928 = vpack.c.bf16 %v5864, %v5864
        %v5929 = vpack.c.bf16 %v5865, %v5865
        %v5930 = vpack.c.bf16 %v5866, %v5866
        %v5931 = vpack.c.bf16 %v5867, %v5867
        %v5932 = vpack.c.bf16 %v5868, %v5868
        %v5933 = vpack.c.bf16 %v5869, %v5869
        %v5934 = vpack.c.bf16 %v5870, %v5870
        %v5935 = vpack.c.bf16 %v5871, %v5871
        %v5936 = vpack.c.bf16 %v5872, %v5872
        %v5937 = vpack.c.bf16 %v5873, %v5873
        %v5938 = vpack.c.bf16 %v5874, %v5874
        %v5939 = vpack.c.bf16 %v5875, %v5875
        %v5940 = vpack.c.bf16 %v5876, %v5876
        %v5941 = vpack.c.bf16 %v5877, %v5877
        %v5942 = vpack.c.bf16 %v5878, %v5878
        %v5943 = vpack.c.bf16 %v5879, %v5879
        %v5944 = vpack.c.bf16 %v5880, %v5880
        %v5945 = vpack.c.bf16 %v5881, %v5881
        %v5946 = vpack.c.bf16 %v5882, %v5882
        %v5947 = vpack.c.bf16 %v5883, %v5883
        %v5948 = vpack.c.bf16 %v5884, %v5884
        %v5949 = vpack.c.bf16 %v5885, %v5885
        %v5950 = vpack.c.bf16 %v5886, %v5886
        %v5951 = vpack.c.bf16 %v5887, %v5887
        %v5952 = vpack.c.bf16 %v5888, %v5888
        %v5953 = vpack.c.bf16 %v5889, %v5889
        %v5954 = vpack.c.bf16 %v5890, %v5890
        %v5955 = vpack.c.bf16 %v5891, %v5891
        %v5956 = vpack.c.bf16 %v5892, %v5892
        %v5957 = vpack.c.bf16 %v5893, %v5893
        %v5958 = vpack.c.bf16 %v5894, %v5894
        %v5959 = vpack.c.bf16 %v5895, %v5895
        %v5960 = vpack.c.bf16 %v5896, %v5896
        %v5961 = vpack.c.bf16 %v5897, %v5897
        %v5962 = vpack.c.bf16 %v5898, %v5898
        %v5963 = vpack.c.bf16 %v5899, %v5899
        %v5964 = vpack.c.bf16 %v5900, %v5900
        %v5965 = vpack.c.bf16 %v5901, %v5901
        %v5966 = vpack.c.bf16 %v5902, %v5902
        %v5967 = vpack.c.bf16 %v5903, %v5903
        %v5968 = vpack.c.bf16 %v5904, %v5904
        %v5969 = vpack.c.bf16 %v5905, %v5905
        %v5970 = vpack.c.bf16 %v5906, %v5906
        %v5971 = vpack.c.bf16 %v5907, %v5907
        %v5972 = vpack.c.bf16 %v5908, %v5908
        %v5973 = vpack.c.bf16 %v5909, %v5909
        %v5974 = vpack.c.bf16 %v5910, %v5910
        %v5975 = vpack.c.bf16 %v5911, %v5911
        %v5976 = vpack.c.bf16 %v5912, %v5912
        %v5977 = vpack.c.bf16 %v5913, %v5913
        %v5978 = vpack.c.bf16 %v5914, %v5914
        %5979 = vst [vmem:[%s240 + $0x600] sm:$0xf] %v5915
        %5980 = vst [vmem:[%s240 + $0x604] sm:$0xf] %v5916
        %5981 = vst [vmem:[%s240 + $0x608] sm:$0xf] %v5917
        %5982 = vst [vmem:[%s240 + $0x60c] sm:$0xf] %v5918
        %5983 = vst [vmem:[%s240 + $0x610] sm:$0xf] %v5919
        %5984 = vst [vmem:[%s240 + $0x614] sm:$0xf] %v5920
        %5985 = vst [vmem:[%s240 + $0x618] sm:$0xf] %v5921
        %5986 = vst [vmem:[%s240 + $0x61c] sm:$0xf] %v5922
        %5987 = vst [vmem:[%s240 + $0x620] sm:$0xf] %v5923
        %5988 = vst [vmem:[%s240 + $0x624] sm:$0xf] %v5924
        %5989 = vst [vmem:[%s240 + $0x628] sm:$0xf] %v5925
        %5990 = vst [vmem:[%s240 + $0x62c] sm:$0xf] %v5926
        %5991 = vst [vmem:[%s240 + $0x630] sm:$0xf] %v5927
        %5992 = vst [vmem:[%s240 + $0x634] sm:$0xf] %v5928
        %5993 = vst [vmem:[%s240 + $0x638] sm:$0xf] %v5929
        %5994 = vst [vmem:[%s240 + $0x63c] sm:$0xf] %v5930
        %5995 = vst [vmem:[%s240 + $0x640] sm:$0xf] %v5931
        %5996 = vst [vmem:[%s240 + $0x644] sm:$0xf] %v5932
        %5997 = vst [vmem:[%s240 + $0x648] sm:$0xf] %v5933
        %5998 = vst [vmem:[%s240 + $0x64c] sm:$0xf] %v5934
        %5999 = vst [vmem:[%s240 + $0x650] sm:$0xf] %v5935
        %6000 = vst [vmem:[%s240 + $0x654] sm:$0xf] %v5936
        %6001 = vst [vmem:[%s240 + $0x658] sm:$0xf] %v5937
        %6002 = vst [vmem:[%s240 + $0x65c] sm:$0xf] %v5938
        %6003 = vst [vmem:[%s240 + $0x660] sm:$0xf] %v5939
        %6004 = vst [vmem:[%s240 + $0x664] sm:$0xf] %v5940
        %6005 = vst [vmem:[%s240 + $0x668] sm:$0xf] %v5941
        %6006 = vst [vmem:[%s240 + $0x66c] sm:$0xf] %v5942
        %6007 = vst [vmem:[%s240 + $0x670] sm:$0xf] %v5943
        %6008 = vst [vmem:[%s240 + $0x674] sm:$0xf] %v5944
        %6009 = vst [vmem:[%s240 + $0x678] sm:$0xf] %v5945
        %6010 = vst [vmem:[%s240 + $0x67c] sm:$0xf] %v5946
        %6011 = vst [vmem:[%s240 + $0x680] sm:$0xf] %v5947
        %6012 = vst [vmem:[%s240 + $0x684] sm:$0xf] %v5948
        %6013 = vst [vmem:[%s240 + $0x688] sm:$0xf] %v5949
        %6014 = vst [vmem:[%s240 + $0x68c] sm:$0xf] %v5950
        %6015 = vst [vmem:[%s240 + $0x690] sm:$0xf] %v5951
        %6016 = vst [vmem:[%s240 + $0x694] sm:$0xf] %v5952
        %6017 = vst [vmem:[%s240 + $0x698] sm:$0xf] %v5953
        %6018 = vst [vmem:[%s240 + $0x69c] sm:$0xf] %v5954
        %6019 = vst [vmem:[%s240 + $0x6a0] sm:$0xf] %v5955
        %6020 = vst [vmem:[%s240 + $0x6a4] sm:$0xf] %v5956
        %6021 = vst [vmem:[%s240 + $0x6a8] sm:$0xf] %v5957
        %6022 = vst [vmem:[%s240 + $0x6ac] sm:$0xf] %v5958
        %6023 = vst [vmem:[%s240 + $0x6b0] sm:$0xf] %v5959
        %6024 = vst [vmem:[%s240 + $0x6b4] sm:$0xf] %v5960
        %6025 = vst [vmem:[%s240 + $0x6b8] sm:$0xf] %v5961
        %6026 = vst [vmem:[%s240 + $0x6bc] sm:$0xf] %v5962
        %6027 = vst [vmem:[%s240 + $0x6c0] sm:$0xf] %v5963
        %6028 = vst [vmem:[%s240 + $0x6c4] sm:$0xf] %v5964
        %6029 = vst [vmem:[%s240 + $0x6c8] sm:$0xf] %v5965
        %6030 = vst [vmem:[%s240 + $0x6cc] sm:$0xf] %v5966
        %6031 = vst [vmem:[%s240 + $0x6d0] sm:$0xf] %v5967
        %6032 = vst [vmem:[%s240 + $0x6d4] sm:$0xf] %v5968
        %6033 = vst [vmem:[%s240 + $0x6d8] sm:$0xf] %v5969
        %6034 = vst [vmem:[%s240 + $0x6dc] sm:$0xf] %v5970
        %6035 = vst [vmem:[%s240 + $0x6e0] sm:$0xf] %v5971
        %6036 = vst [vmem:[%s240 + $0x6e4] sm:$0xf] %v5972
        %6037 = vst [vmem:[%s240 + $0x6e8] sm:$0xf] %v5973
        %6038 = vst [vmem:[%s240 + $0x6ec] sm:$0xf] %v5974
        %6039 = vst [vmem:[%s240 + $0x6f0] sm:$0xf] %v5975
        %6040 = vst [vmem:[%s240 + $0x6f4] sm:$0xf] %v5976
        %6041 = vst [vmem:[%s240 + $0x6f8] sm:$0xf] %v5977
        %6042 = vst [vmem:[%s240 + $0x6fc] sm:$0xf] %v5978
        %s6043 = sand.u32 %s144, 1
        %s6044 = scalar_lea.sflag [#allocation3], %s6043
        %s6045 = sand.u32 %s144, 1
        %s6046 = smul.addr %s6045, 1792
        %s6047 = scalar_lea.vmem [#allocation2], %s6046
        // Predicated region
        $region37: #{tpu_custom_call.1} parent=35 // pred_check
          %p6048 = pneg %p154
        $region38: #{tpu_custom_call.1} parent=35 // pred_check_branch
          %6050 = sbr.rel (%p6048) target = $region40
        $region39: #{tpu_custom_call.1} parent=35 // pred_region
          %s6051 = smul.u32 448, %s22
          %6053 = vsyncadd %s6044, 0
          %s6054 = sadd.s32 %s23, %s6051
          %s6055 = smul.addr %s6054, 4
          %s6056 = scalar_lea.hbm %s4, %s6055
          %s6057 = sshll.u32 %s6047, 4
          %s6058 = int_to_ptr.vmem [resolvable:$true] %s6057
          %s6059 = sshll.u32 %s6056, 4
          %s6060 = int_to_ptr.hbm [resolvable:$true] %s6059
          %6065 = dma.vmem_to_hbm [thread:$0]  %s6058, 28672, %s6060, %s6044, 64, 64, 4
        $region40: #{tpu_custom_call.1} parent=35 // pred_fallthru
          _
      $region36: #{tpu_custom_call.1} parent=5 // pred_fallthru
        _
      %p6066 = scmp.le.s32.totalorder 2, %s13
      // Predicated region
      $region41: #{tpu_custom_call.1} parent=5 // pred_check
        %p6067 = pneg %p6066
      $region42: #{tpu_custom_call.1} parent=5 // pred_check_branch
        %6069 = sbr.rel (%p6067) target = $region44
      $region43: #{tpu_custom_call.1} parent=5 // pred_region
        %s6070 = ssub.s32 %s13, 2
        // Predicated region
        $region45: #{tpu_custom_call.1} parent=43 // pred_check
          %p6071 = pneg %p160
        $region46: #{tpu_custom_call.1} parent=43 // pred_check_branch
          %6073 = sbr.rel (%p6071) target = $region48
        $region47: #{tpu_custom_call.1} parent=43 // pred_region
          %s6074 = sand.u32 %s145, 1
          %s6075 = scalar_lea.sflag [#allocation3], %s6074
          %s6076 = sand.u32 %s145, 1
          %s6077 = smul.addr %s6076, 1792
          %s6078 = scalar_lea.vmem [#allocation2], %s6077
          %6080 = dma.done %s6075, 28672
        $region48: #{tpu_custom_call.1} parent=43 // pred_fallthru
          _
      $region44: #{tpu_custom_call.1} parent=5 // pred_fallthru
        _
    $region6: #{tpu_custom_call.1} parent=1 // loop_footer
      %s17 = sadd.s32 1, %s13
    $region7: #{tpu_custom_call.1} parent=1 // loop_footer_branch
      %12 = sbr.rel target = $region3
    $region8: #{tpu_custom_call.1} parent=1 // loop_exit
      _
    %6081 = vsyncpa [#allocation3], 1
    %s6082 = scalar_lea.sflag [#allocation3], 1
    %6083 = vsyncpa %s6082, 1

</llo_original>
